<compile_context>
chip_gen: v7x
topology: tpu7x:2x2x1
jax: 0.10.0
libtpu: 0.0.40
codegen_flags: <defaults>
</compile_context>

<pallas_src>
import functools

import jax
import jax.numpy as jnp
import numpy as np
from jax.experimental import pallas as pl
from jax.experimental.pallas import tpu as pltpu


_VMEM_LIMIT_BYTES = 32 * 1024 * 1024   # raises v5e's 16 MiB scoped default,
                                       # within v6e/v7x defaults


def _fused_block_vmem_bytes(L, pad, c_in, c_out, k):
    """Rough per-grid-step VMEM footprint of the fused TemporalBlock kernel."""
    bf16, f32 = 2, 4
    lp = L + pad
    x_buf = 2 * L * c_in * bf16                              # double-buffered x block
    o_buf = 2 * L * c_out * bf16                             # double-buffered out block
    w_buf = 2 * (k * c_in * c_out + k * c_out * c_out + c_in * c_out) * bf16
    b_buf = 2 * 3 * c_out * f32
    scratch = lp * (c_in + c_out) * bf16                     # xpad + hpad (single)
    live = L * k * (c_in + c_out) * bf16 + 2 * L * c_out * f32  # im2col LHS + f32 accs
    return x_buf + o_buf + w_buf + b_buf + scratch + live


# ---------------------------------------------------------------------------
# Fused TemporalBlock kernel (one grid step == one batch element).
#   x_ref  : (1, L, Cin)       bf16
#   w1_ref : (k*Cin, Cout)     bf16   (taps flattened into K)
#   b1_ref : (1, Cout)         f32
#   w2_ref : (k*Cout, Cout)    bf16
#   b2_ref : (1, Cout)         f32
#   [dw_ref: (Cin, Cout) bf16, db_ref: (1, Cout) f32]   -- only if downsample
#   o_ref  : (1, L, Cout)      bf16
#   xpad_ref: (L+pad, Cin)  bf16 VMEM scratch (causal left pad built in-kernel)
#   hpad_ref: (L+pad, Cout) bf16 VMEM scratch (intermediate h, never hits HBM)
# Semantics per TemporalBlock:
#   h   = relu(causal_dilated_conv(x,  w1) + b1)          (dropout = identity)
#   y   = relu(causal_dilated_conv(h,  w2) + b2)
#   res = x                      if Cin == Cout
#       = x @ dw + db            otherwise (1x1 downsample conv)
#   out = relu(y + res)
# ---------------------------------------------------------------------------
def _temporal_block_kernel(x_ref, w1_ref, b1_ref, w2_ref, b2_ref, *rest,
                           k, dilation, has_down):
    if has_down:
        dw_ref, db_ref, o_ref, xpad_ref, hpad_ref = rest
    else:
        o_ref, xpad_ref, hpad_ref = rest

    L = o_ref.shape[1]
    pad = (k - 1) * dilation

    def dilated_conv(src_pad_ref, w_ref, b_ref):
        # In-VMEM im2col: lane-axis concat of the k shifted views, then a single
        # K = k*C matmul on the MXU (instead of k tiny K=C matmuls).
        taps = [src_pad_ref[pl.ds(j * dilation, L), :] for j in range(k)]
        lhs = taps[0] if k == 1 else jnp.concatenate(taps, axis=-1)
        return jnp.dot(lhs, w_ref[...], preferred_element_type=jnp.float32) + b_ref[...]

    # Causal left pad handled inside VMEM (no HBM pad copy of the activation).
    if pad:
        xpad_ref[pl.ds(0, pad), :] = jnp.zeros((pad, xpad_ref.shape[1]),
                                               xpad_ref.dtype)
    xpad_ref[pl.ds(pad, L), :] = x_ref[0]

    # conv1 -> chomp -> ReLU   (dropout = identity at inference)
    h = jnp.maximum(dilated_conv(xpad_ref, w1_ref, b1_ref), 0.0)

    if pad:
        hpad_ref[pl.ds(0, pad), :] = jnp.zeros((pad, hpad_ref.shape[1]),
                                               hpad_ref.dtype)
    hpad_ref[pl.ds(pad, L), :] = h.astype(hpad_ref.dtype)

    # conv2 -> chomp -> ReLU
    y = jnp.maximum(dilated_conv(hpad_ref, w2_ref, b2_ref), 0.0)

    # residual (identity or fused 1x1 downsample conv) + final ReLU
    if has_down:
        res = jnp.dot(x_ref[0], dw_ref[...],
                      preferred_element_type=jnp.float32) + db_ref[...]
    else:
        res = x_ref[0].astype(jnp.float32)

    o_ref[0] = jnp.maximum(y + res, 0.0).astype(o_ref.dtype)


def temporal_block(x, blk, dilation):
    """x: (N, L, Cin) bf16 -> (N, L, Cout) bf16. One fused pallas_call."""
    N, L, c_in = x.shape
    k, _, c_out = blk["conv1_w"].shape
    pad = (k - 1) * dilation
    lp = L + pad
    has_down = blk["down_w"] is not None

    # VMEM guard: the fused kernel keeps x, h and the output block resident.
    # TODO(synk): add a time-tiled fallback with a (k-1)*dilation halo for
    #             sequences/channel counts that overflow this budget.
    need = _fused_block_vmem_bytes(L, pad, c_in, c_out, k)
    if need > 0.75 * _VMEM_LIMIT_BYTES:
        raise NotImplementedError(
            f"fused TemporalBlock needs ~{need/2**20:.1f} MiB VMEM "
            f"(limit {_VMEM_LIMIT_BYTES/2**20:.0f} MiB)")

    w1 = blk["conv1_w"].reshape(k * c_in, c_out)    # taps folded into K
    w2 = blk["conv2_w"].reshape(k * c_out, c_out)

    in_specs = [
        pl.BlockSpec((1, L, c_in), lambda n: (n, 0, 0)),
        pl.BlockSpec((k * c_in, c_out), lambda n: (0, 0)),
        pl.BlockSpec((1, c_out), lambda n: (0, 0)),
        pl.BlockSpec((k * c_out, c_out), lambda n: (0, 0)),
        pl.BlockSpec((1, c_out), lambda n: (0, 0)),
    ]
    args = [x, w1, blk["conv1_b"], w2, blk["conv2_b"]]
    if has_down:
        in_specs += [pl.BlockSpec((c_in, c_out), lambda n: (0, 0)),
                     pl.BlockSpec((1, c_out), lambda n: (0, 0))]
        args += [blk["down_w"].reshape(c_in, c_out), blk["down_b"]]

    return pl.pallas_call(
        functools.partial(_temporal_block_kernel, k=k, dilation=dilation,
                          has_down=has_down),
        out_shape=jax.ShapeDtypeStruct((N, L, c_out), jnp.bfloat16),
        grid=(N,),
        in_specs=in_specs,
        out_specs=pl.BlockSpec((1, L, c_out), lambda n: (n, 0, 0)),
        scratch_shapes=[pltpu.VMEM((lp, c_in), jnp.bfloat16),
                        pltpu.VMEM((lp, c_out), jnp.bfloat16)],
        compiler_params=pltpu.CompilerParams(
            dimension_semantics=("parallel",),        # batch axis -> megacore/TCs
            vmem_limit_bytes=_VMEM_LIMIT_BYTES),
    )(*args)


def tcn_forward(inputs, params):
    """inputs: (N, C_in, L) float32 (PyTorch layout). Returns (N, C_out, L) f32."""
    x = jnp.transpose(inputs, (0, 2, 1)).astype(jnp.bfloat16)  # channels-last
    for i, blk in enumerate(params["blocks"]):
        x = temporal_block(x, blk, dilation=2 ** i)
    return jnp.transpose(x, (0, 2, 1)).astype(jnp.float32)


# ---------------------------------------------------------------------------
# Parameter init (deterministic, synthetic; mirrors TemporalBlock.init_weights)
# ---------------------------------------------------------------------------
def init_params(key, input_size, num_channels, kernel_size):
    def conv_init(k_, cin, cout, ksz):
        kw, kb = jax.random.split(k_)
        # weight ~ N(0, 0.01); weight_norm folded into this effective weight.
        w = 0.01 * jax.random.normal(kw, (ksz, cin, cout), jnp.float32)
        bound = 1.0 / (cin * ksz) ** 0.5            # PyTorch Conv1d bias default
        b = jax.random.uniform(kb, (1, cout), jnp.float32, -bound, bound)
        return w.astype(jnp.bfloat16), b

    blocks = []
    keys = jax.random.split(key, len(num_channels))
    cin = input_size
    for i, cout in enumerate(num_channels):
        k1, k2, k3 = jax.random.split(keys[i], 3)
        blk = {}
        blk["conv1_w"], blk["conv1_b"] = conv_init(k1, cin, cout, kernel_size)
        blk["conv2_w"], blk["conv2_b"] = conv_init(k2, cout, cout, kernel_size)
        if cin != cout:
            blk["down_w"], blk["down_b"] = conv_init(k3, cin, cout, 1)
        else:
            blk["down_w"], blk["down_b"] = None, None
        blocks.append(blk)
        cin = cout
    return {"blocks": blocks}


# ---------------------------------------------------------------------------
# Pure-JAX f32 reference (validates the bf16 Pallas path)
# ---------------------------------------------------------------------------
def _conv_ref(x, w, b, dilation, relu, residual=None):
    k = w.shape[0]
    L = x.shape[1]
    pad = (k - 1) * dilation
    xp = jnp.pad(x, ((0, 0), (pad, 0), (0, 0)))
    acc = None
    for j in range(k):
        tap = xp[:, j * dilation:j * dilation + L, :].astype(jnp.float32)
        term = jnp.einsum("nlc,cd->nld", tap, w[j].astype(jnp.float32))
        acc = term if acc is None else acc + term
    y = acc + b
    if relu:
        y = jnp.maximum(y, 0.0)
    if residual is not None:
        y = jnp.maximum(y + residual, 0.0)
    return y


def tcn_forward_ref(inputs, params):
    x = jnp.transpose(inputs, (0, 2, 1)).astype(jnp.float32)
    for i, blk in enumerate(params["blocks"]):
        d = 2 ** i
        h = _conv_ref(x, blk["conv1_w"], blk["conv1_b"], d, relu=True)
        if blk["down_w"] is not None:
            res = _conv_ref(x, blk["down_w"], blk["down_b"], 1, relu=False)
        else:
            res = x
        x = _conv_ref(h, blk["conv2_w"], blk["conv2_b"], d, relu=True,
                      residual=res)
    return jnp.transpose(x, (0, 2, 1))


if __name__ == "__main__":
    key = jax.random.PRNGKey(0)
    pkey, xkey = jax.random.split(key)

    # Small shapes consistent with TCN(input_size, num_channels, kernel_size, dropout).
    # num_channels are multiples of 128 -> lane-dense output stores; block 0
    # exercises the 1x1-downsample residual, blocks 1-2 the identity residual.
    input_size = 8
    num_channels = [128, 128, 128]
    kernel_size = 3
    dropout = 0.5                    # identity at inference (see TODO above)

    params = init_params(pkey, input_size, num_channels, kernel_size)

    N, L = 2, 128
    inputs = jax.random.normal(xkey, (N, input_size, L), jnp.float32)

    out = jax.block_until_ready(jax.jit(tcn_forward)(inputs, params))
    assert out.shape == (N, num_channels[-1], L)
    assert bool(jnp.all(jnp.isfinite(out)))

    # bf16 Pallas path vs f32 reference (loose tolerance for bf16 operands).
    ref = tcn_forward_ref(inputs, params)
    np.testing.assert_allclose(np.asarray(out), np.asarray(ref),
                               rtol=0.1, atol=2e-2)
    print("KERNEL_OK")
</pallas_src>

<mosaic_0001>
module attributes {stable_mosaic.version = 11 : i64} {
  func.func @_temporal_block_kernel(%arg0: i32, %arg1: memref<1x128x128xbf16, #tpu.memory_space<vmem>>, %arg2: memref<384x128xbf16, #tpu.memory_space<vmem>>, %arg3: memref<1x128xf32, #tpu.memory_space<vmem>>, %arg4: memref<384x128xbf16, #tpu.memory_space<vmem>>, %arg5: memref<1x128xf32, #tpu.memory_space<vmem>>, %arg6: memref<1x128x128xbf16, #tpu.memory_space<vmem>>, %arg7: memref<132x128xbf16, #tpu.memory_space<vmem>>, %arg8: memref<132x128xbf16, #tpu.memory_space<vmem>>) attributes {dimension_semantics = [#tpu.dimension_semantics<parallel>], iteration_bounds = array<i64: 2>, scalar_prefetch = 0 : i64, scratch_operands = 2 : i64, tpu.core_type = #tpu.core_type<tc>, window_params = [{transform_indices = @transform_0, window_bounds = array<i64: 1, 128, 128>}, {pipeline_mode = #tpu.pipeline_mode<synchronous>, transform_indices = @transform_1, window_bounds = array<i64: 384, 128>}, {pipeline_mode = #tpu.pipeline_mode<synchronous>, transform_indices = @transform_2, window_bounds = array<i64: 1, 128>}, {pipeline_mode = #tpu.pipeline_mode<synchronous>, transform_indices = @transform_3, window_bounds = array<i64: 384, 128>}, {pipeline_mode = #tpu.pipeline_mode<synchronous>, transform_indices = @transform_4, window_bounds = array<i64: 1, 128>}, {transform_indices = @transform_5, window_bounds = array<i64: 1, 128, 128>}]} {
    %cst = arith.constant 0.000000e+00 : bf16
    %0 = vector.broadcast %cst : bf16 to vector<4x128xbf16>
    %c0 = arith.constant 0 : index
    %c0_0 = arith.constant 0 : index
    %1 = vector.load %arg7[%c0, %c0_0] : memref<132x128xbf16, #tpu.memory_space<vmem>>, vector<4x128xbf16>
    tpu.vector_store %arg7[%c0, %c0_0], %0 {strides = array<i32>} : memref<132x128xbf16, #tpu.memory_space<vmem>>, vector<4x128xbf16>,
    %c0_1 = arith.constant 0 : index
    %c0_2 = arith.constant 0 : index
    %c0_3 = arith.constant 0 : index
    %2 = vector.load %arg1[%c0_1, %c0_2, %c0_3] : memref<1x128x128xbf16, #tpu.memory_space<vmem>>, vector<1x128x128xbf16>
    %3 = vector.shape_cast %2 : vector<1x128x128xbf16> to vector<128x128xbf16>
    %c4 = arith.constant 4 : index
    %c0_4 = arith.constant 0 : index
    %4 = vector.load %arg7[%c4, %c0_4] : memref<132x128xbf16, #tpu.memory_space<vmem>>, vector<128x128xbf16>
    tpu.vector_store %arg7[%c4, %c0_4], %3 {strides = array<i32>} : memref<132x128xbf16, #tpu.memory_space<vmem>>, vector<128x128xbf16>,
    %c0_5 = arith.constant 0 : index
    %c0_6 = arith.constant 0 : index
    %5 = vector.load %arg7[%c0_5, %c0_6] : memref<132x128xbf16, #tpu.memory_space<vmem>>, vector<128x128xbf16>
    %c2 = arith.constant 2 : index
    %c0_7 = arith.constant 0 : index
    %6 = vector.load %arg7[%c2, %c0_7] : memref<132x128xbf16, #tpu.memory_space<vmem>>, vector<128x128xbf16>
    %c4_8 = arith.constant 4 : index
    %c0_9 = arith.constant 0 : index
    %7 = vector.load %arg7[%c4_8, %c0_9] : memref<132x128xbf16, #tpu.memory_space<vmem>>, vector<128x128xbf16>
    %8 = tpu.concatenate %5, %6, %7 in 1 : vector<128x128xbf16>, vector<128x128xbf16>, vector<128x128xbf16> -> vector<128x384xbf16>
    %c0_10 = arith.constant 0 : index
    %c0_11 = arith.constant 0 : index
    %9 = vector.load %arg2[%c0_10, %c0_11] : memref<384x128xbf16, #tpu.memory_space<vmem>>, vector<384x128xbf16>
    %cst_12 = arith.constant dense<0.000000e+00> : vector<128x128xf32>
    %10 = tpu.matmul %8, %9, %cst_12 {dimension_numbers = #tpu.dot_dimension_numbers<[1], [0], [0], [1], [0, 0, 1, 1], [], []>} : vector<128x384xbf16>, vector<384x128xbf16>, vector<128x128xf32> -> vector<128x128xf32>
    %c0_13 = arith.constant 0 : index
    %c0_14 = arith.constant 0 : index
    %11 = vector.load %arg3[%c0_13, %c0_14] : memref<1x128xf32, #tpu.memory_space<vmem>>, vector<1x128xf32>
    %12 = vector.broadcast %11 : vector<1x128xf32> to vector<128x128xf32>
    %13 = arith.addf %10, %12 : vector<128x128xf32>
    %cst_15 = arith.constant 0.000000e+00 : f32
    %14 = vector.broadcast %cst_15 : f32 to vector<128x128xf32>
    %15 = arith.maximumf %13, %14 : vector<128x128xf32>
    %cst_16 = arith.constant 0.000000e+00 : bf16
    %16 = vector.broadcast %cst_16 : bf16 to vector<4x128xbf16>
    %c0_17 = arith.constant 0 : index
    %c0_18 = arith.constant 0 : index
    %17 = vector.load %arg8[%c0_17, %c0_18] : memref<132x128xbf16, #tpu.memory_space<vmem>>, vector<4x128xbf16>
    tpu.vector_store %arg8[%c0_17, %c0_18], %16 {strides = array<i32>} : memref<132x128xbf16, #tpu.memory_space<vmem>>, vector<4x128xbf16>,
    %18 = arith.truncf %15 : vector<128x128xf32> to vector<128x128xbf16>
    %c4_19 = arith.constant 4 : index
    %c0_20 = arith.constant 0 : index
    %19 = vector.load %arg8[%c4_19, %c0_20] : memref<132x128xbf16, #tpu.memory_space<vmem>>, vector<128x128xbf16>
    tpu.vector_store %arg8[%c4_19, %c0_20], %18 {strides = array<i32>} : memref<132x128xbf16, #tpu.memory_space<vmem>>, vector<128x128xbf16>,
    %c0_21 = arith.constant 0 : index
    %c0_22 = arith.constant 0 : index
    %20 = vector.load %arg8[%c0_21, %c0_22] : memref<132x128xbf16, #tpu.memory_space<vmem>>, vector<128x128xbf16>
    %c2_23 = arith.constant 2 : index
    %c0_24 = arith.constant 0 : index
    %21 = vector.load %arg8[%c2_23, %c0_24] : memref<132x128xbf16, #tpu.memory_space<vmem>>, vector<128x128xbf16>
    %c4_25 = arith.constant 4 : index
    %c0_26 = arith.constant 0 : index
    %22 = vector.load %arg8[%c4_25, %c0_26] : memref<132x128xbf16, #tpu.memory_space<vmem>>, vector<128x128xbf16>
    %23 = tpu.concatenate %20, %21, %22 in 1 : vector<128x128xbf16>, vector<128x128xbf16>, vector<128x128xbf16> -> vector<128x384xbf16>
    %c0_27 = arith.constant 0 : index
    %c0_28 = arith.constant 0 : index
    %24 = vector.load %arg4[%c0_27, %c0_28] : memref<384x128xbf16, #tpu.memory_space<vmem>>, vector<384x128xbf16>
    %cst_29 = arith.constant dense<0.000000e+00> : vector<128x128xf32>
    %25 = tpu.matmul %23, %24, %cst_29 {dimension_numbers = #tpu.dot_dimension_numbers<[1], [0], [0], [1], [0, 0, 1, 1], [], []>} : vector<128x384xbf16>, vector<384x128xbf16>, vector<128x128xf32> -> vector<128x128xf32>
    %c0_30 = arith.constant 0 : index
    %c0_31 = arith.constant 0 : index
    %26 = vector.load %arg5[%c0_30, %c0_31] : memref<1x128xf32, #tpu.memory_space<vmem>>, vector<1x128xf32>
    %27 = vector.broadcast %26 : vector<1x128xf32> to vector<128x128xf32>
    %28 = arith.addf %25, %27 : vector<128x128xf32>
    %cst_32 = arith.constant 0.000000e+00 : f32
    %29 = vector.broadcast %cst_32 : f32 to vector<128x128xf32>
    %30 = arith.maximumf %28, %29 : vector<128x128xf32>
    %c0_33 = arith.constant 0 : index
    %c0_34 = arith.constant 0 : index
    %c0_35 = arith.constant 0 : index
    %31 = vector.load %arg1[%c0_33, %c0_34, %c0_35] : memref<1x128x128xbf16, #tpu.memory_space<vmem>>, vector<1x128x128xbf16>
    %32 = vector.shape_cast %31 : vector<1x128x128xbf16> to vector<128x128xbf16>
    %33 = arith.extf %32 : vector<128x128xbf16> to vector<128x128xf32>
    %34 = arith.addf %30, %33 : vector<128x128xf32>
    %cst_36 = arith.constant 0.000000e+00 : f32
    %35 = vector.broadcast %cst_36 : f32 to vector<128x128xf32>
    %36 = arith.maximumf %34, %35 : vector<128x128xf32>
    %37 = arith.truncf %36 : vector<128x128xf32> to vector<128x128xbf16>
    %c0_37 = arith.constant 0 : index
    %c0_38 = arith.constant 0 : index
    %c0_39 = arith.constant 0 : index
    %38 = vector.load %arg6[%c0_37, %c0_38, %c0_39] : memref<1x128x128xbf16, #tpu.memory_space<vmem>>, vector<1x128x128xbf16>
    %39 = vector.shape_cast %38 : vector<1x128x128xbf16> to vector<128x128xbf16>
    %40 = vector.shape_cast %37 : vector<128x128xbf16> to vector<1x128x128xbf16>
    tpu.vector_store %arg6[%c0_37, %c0_38, %c0_39], %40 {strides = array<i32>} : memref<1x128x128xbf16, #tpu.memory_space<vmem>>, vector<1x128x128xbf16>,
    return
  }
  func.func @transform_0(%arg0: i32) -> (i32, i32, i32) {
    %c0_i32 = arith.constant 0 : i32
    %c0_i32_0 = arith.constant 0 : i32
    %c0_i32_1 = arith.constant 0 : i32
    return %arg0, %c0_i32, %c0_i32_0 : i32, i32, i32
  }
  func.func @transform_1(%arg0: i32) -> (i32, i32) {
    %c0_i32 = arith.constant 0 : i32
    %c0_i32_0 = arith.constant 0 : i32
    %c0_i32_1 = arith.constant 0 : i32
    return %c0_i32, %c0_i32_0 : i32, i32
  }
  func.func @transform_2(%arg0: i32) -> (i32, i32) {
    %c0_i32 = arith.constant 0 : i32
    %c0_i32_0 = arith.constant 0 : i32
    %c0_i32_1 = arith.constant 0 : i32
    return %c0_i32, %c0_i32_0 : i32, i32
  }
  func.func @transform_3(%arg0: i32) -> (i32, i32) {
    %c0_i32 = arith.constant 0 : i32
    %c0_i32_0 = arith.constant 0 : i32
    %c0_i32_1 = arith.constant 0 : i32
    return %c0_i32, %c0_i32_0 : i32, i32
  }
  func.func @transform_4(%arg0: i32) -> (i32, i32) {
    %c0_i32 = arith.constant 0 : i32
    %c0_i32_0 = arith.constant 0 : i32
    %c0_i32_1 = arith.constant 0 : i32
    return %c0_i32, %c0_i32_0 : i32, i32
  }
  func.func @transform_5(%arg0: i32) -> (i32, i32, i32) {
    %c0_i32 = arith.constant 0 : i32
    %c0_i32_0 = arith.constant 0 : i32
    %c0_i32_1 = arith.constant 0 : i32
    return %arg0, %c0_i32, %c0_i32_0 : i32, i32, i32
  }
}

module attributes {stable_mosaic.version = 11 : i64} {
  func.func @_temporal_block_kernel(%arg0: i32, %arg1: memref<1x128x8xbf16, #tpu.memory_space<vmem>>, %arg2: memref<24x128xbf16, #tpu.memory_space<vmem>>, %arg3: memref<1x128xf32, #tpu.memory_space<vmem>>, %arg4: memref<384x128xbf16, #tpu.memory_space<vmem>>, %arg5: memref<1x128xf32, #tpu.memory_space<vmem>>, %arg6: memref<8x128xbf16, #tpu.memory_space<vmem>>, %arg7: memref<1x128xf32, #tpu.memory_space<vmem>>, %arg8: memref<1x128x128xbf16, #tpu.memory_space<vmem>>, %arg9: memref<130x8xbf16, #tpu.memory_space<vmem>>, %arg10: memref<130x128xbf16, #tpu.memory_space<vmem>>) attributes {dimension_semantics = [#tpu.dimension_semantics<parallel>], iteration_bounds = array<i64: 2>, scalar_prefetch = 0 : i64, scratch_operands = 2 : i64, tpu.core_type = #tpu.core_type<tc>, window_params = [{transform_indices = @transform_0, window_bounds = array<i64: 1, 128, 8>}, {pipeline_mode = #tpu.pipeline_mode<synchronous>, transform_indices = @transform_1, window_bounds = array<i64: 24, 128>}, {pipeline_mode = #tpu.pipeline_mode<synchronous>, transform_indices = @transform_2, window_bounds = array<i64: 1, 128>}, {pipeline_mode = #tpu.pipeline_mode<synchronous>, transform_indices = @transform_3, window_bounds = array<i64: 384, 128>}, {pipeline_mode = #tpu.pipeline_mode<synchronous>, transform_indices = @transform_4, window_bounds = array<i64: 1, 128>}, {pipeline_mode = #tpu.pipeline_mode<synchronous>, transform_indices = @transform_5, window_bounds = array<i64: 8, 128>}, {pipeline_mode = #tpu.pipeline_mode<synchronous>, transform_indices = @transform_6, window_bounds = array<i64: 1, 128>}, {transform_indices = @transform_7, window_bounds = array<i64: 1, 128, 128>}]} {
    %cst = arith.constant 0.000000e+00 : bf16
    %0 = vector.broadcast %cst : bf16 to vector<2x8xbf16>
    %c0 = arith.constant 0 : index
    %c0_0 = arith.constant 0 : index
    %1 = vector.load %arg9[%c0, %c0_0] : memref<130x8xbf16, #tpu.memory_space<vmem>>, vector<2x8xbf16>
    tpu.vector_store %arg9[%c0, %c0_0], %0 {strides = array<i32>} : memref<130x8xbf16, #tpu.memory_space<vmem>>, vector<2x8xbf16>,
    %c0_1 = arith.constant 0 : index
    %c0_2 = arith.constant 0 : index
    %c0_3 = arith.constant 0 : index
    %2 = vector.load %arg1[%c0_1, %c0_2, %c0_3] : memref<1x128x8xbf16, #tpu.memory_space<vmem>>, vector<1x128x8xbf16>
    %3 = vector.shape_cast %2 : vector<1x128x8xbf16> to vector<128x8xbf16>
    %c2 = arith.constant 2 : index
    %c0_4 = arith.constant 0 : index
    %4 = vector.load %arg9[%c2, %c0_4] : memref<130x8xbf16, #tpu.memory_space<vmem>>, vector<128x8xbf16>
    tpu.vector_store %arg9[%c2, %c0_4], %3 {strides = array<i32>} : memref<130x8xbf16, #tpu.memory_space<vmem>>, vector<128x8xbf16>,
    %c0_5 = arith.constant 0 : index
    %c0_6 = arith.constant 0 : index
    %5 = vector.load %arg9[%c0_5, %c0_6] : memref<130x8xbf16, #tpu.memory_space<vmem>>, vector<128x8xbf16>
    %c1 = arith.constant 1 : index
    %c0_7 = arith.constant 0 : index
    %6 = vector.load %arg9[%c1, %c0_7] : memref<130x8xbf16, #tpu.memory_space<vmem>>, vector<128x8xbf16>
    %c2_8 = arith.constant 2 : index
    %c0_9 = arith.constant 0 : index
    %7 = vector.load %arg9[%c2_8, %c0_9] : memref<130x8xbf16, #tpu.memory_space<vmem>>, vector<128x8xbf16>
    %8 = tpu.concatenate %5, %6, %7 in 1 : vector<128x8xbf16>, vector<128x8xbf16>, vector<128x8xbf16> -> vector<128x24xbf16>
    %c0_10 = arith.constant 0 : index
    %c0_11 = arith.constant 0 : index
    %9 = vector.load %arg2[%c0_10, %c0_11] : memref<24x128xbf16, #tpu.memory_space<vmem>>, vector<24x128xbf16>
    %cst_12 = arith.constant dense<0.000000e+00> : vector<128x128xf32>
    %10 = tpu.matmul %8, %9, %cst_12 {dimension_numbers = #tpu.dot_dimension_numbers<[1], [0], [0], [1], [0, 0, 1, 1], [], []>} : vector<128x24xbf16>, vector<24x128xbf16>, vector<128x128xf32> -> vector<128x128xf32>
    %c0_13 = arith.constant 0 : index
    %c0_14 = arith.constant 0 : index
    %11 = vector.load %arg3[%c0_13, %c0_14] : memref<1x128xf32, #tpu.memory_space<vmem>>, vector<1x128xf32>
    %12 = vector.broadcast %11 : vector<1x128xf32> to vector<128x128xf32>
    %13 = arith.addf %10, %12 : vector<128x128xf32>
    %cst_15 = arith.constant 0.000000e+00 : f32
    %14 = vector.broadcast %cst_15 : f32 to vector<128x128xf32>
    %15 = arith.maximumf %13, %14 : vector<128x128xf32>
    %cst_16 = arith.constant 0.000000e+00 : bf16
    %16 = vector.broadcast %cst_16 : bf16 to vector<2x128xbf16>
    %c0_17 = arith.constant 0 : index
    %c0_18 = arith.constant 0 : index
    %17 = vector.load %arg10[%c0_17, %c0_18] : memref<130x128xbf16, #tpu.memory_space<vmem>>, vector<2x128xbf16>
    tpu.vector_store %arg10[%c0_17, %c0_18], %16 {strides = array<i32>} : memref<130x128xbf16, #tpu.memory_space<vmem>>, vector<2x128xbf16>,
    %18 = arith.truncf %15 : vector<128x128xf32> to vector<128x128xbf16>
    %c2_19 = arith.constant 2 : index
    %c0_20 = arith.constant 0 : index
    %19 = vector.load %arg10[%c2_19, %c0_20] : memref<130x128xbf16, #tpu.memory_space<vmem>>, vector<128x128xbf16>
    tpu.vector_store %arg10[%c2_19, %c0_20], %18 {strides = array<i32>} : memref<130x128xbf16, #tpu.memory_space<vmem>>, vector<128x128xbf16>,
    %c0_21 = arith.constant 0 : index
    %c0_22 = arith.constant 0 : index
    %20 = vector.load %arg10[%c0_21, %c0_22] : memref<130x128xbf16, #tpu.memory_space<vmem>>, vector<128x128xbf16>
    %c1_23 = arith.constant 1 : index
    %c0_24 = arith.constant 0 : index
    %21 = vector.load %arg10[%c1_23, %c0_24] : memref<130x128xbf16, #tpu.memory_space<vmem>>, vector<128x128xbf16>
    %c2_25 = arith.constant 2 : index
    %c0_26 = arith.constant 0 : index
    %22 = vector.load %arg10[%c2_25, %c0_26] : memref<130x128xbf16, #tpu.memory_space<vmem>>, vector<128x128xbf16>
    %23 = tpu.concatenate %20, %21, %22 in 1 : vector<128x128xbf16>, vector<128x128xbf16>, vector<128x128xbf16> -> vector<128x384xbf16>
    %c0_27 = arith.constant 0 : index
    %c0_28 = arith.constant 0 : index
    %24 = vector.load %arg4[%c0_27, %c0_28] : memref<384x128xbf16, #tpu.memory_space<vmem>>, vector<384x128xbf16>
    %cst_29 = arith.constant dense<0.000000e+00> : vector<128x128xf32>
    %25 = tpu.matmul %23, %24, %cst_29 {dimension_numbers = #tpu.dot_dimension_numbers<[1], [0], [0], [1], [0, 0, 1, 1], [], []>} : vector<128x384xbf16>, vector<384x128xbf16>, vector<128x128xf32> -> vector<128x128xf32>
    %c0_30 = arith.constant 0 : index
    %c0_31 = arith.constant 0 : index
    %26 = vector.load %arg5[%c0_30, %c0_31] : memref<1x128xf32, #tpu.memory_space<vmem>>, vector<1x128xf32>
    %27 = vector.broadcast %26 : vector<1x128xf32> to vector<128x128xf32>
    %28 = arith.addf %25, %27 : vector<128x128xf32>
    %cst_32 = arith.constant 0.000000e+00 : f32
    %29 = vector.broadcast %cst_32 : f32 to vector<128x128xf32>
    %30 = arith.maximumf %28, %29 : vector<128x128xf32>
    %c0_33 = arith.constant 0 : index
    %c0_34 = arith.constant 0 : index
    %c0_35 = arith.constant 0 : index
    %31 = vector.load %arg1[%c0_33, %c0_34, %c0_35] : memref<1x128x8xbf16, #tpu.memory_space<vmem>>, vector<1x128x8xbf16>
    %32 = vector.shape_cast %31 : vector<1x128x8xbf16> to vector<128x8xbf16>
    %c0_36 = arith.constant 0 : index
    %c0_37 = arith.constant 0 : index
    %33 = vector.load %arg6[%c0_36, %c0_37] : memref<8x128xbf16, #tpu.memory_space<vmem>>, vector<8x128xbf16>
    %cst_38 = arith.constant dense<0.000000e+00> : vector<128x128xf32>
    %34 = tpu.matmul %32, %33, %cst_38 {dimension_numbers = #tpu.dot_dimension_numbers<[1], [0], [0], [1], [0, 0, 1, 1], [], []>} : vector<128x8xbf16>, vector<8x128xbf16>, vector<128x128xf32> -> vector<128x128xf32>
    %c0_39 = arith.constant 0 : index
    %c0_40 = arith.constant 0 : index
    %35 = vector.load %arg7[%c0_39, %c0_40] : memref<1x128xf32, #tpu.memory_space<vmem>>, vector<1x128xf32>
    %36 = vector.broadcast %35 : vector<1x128xf32> to vector<128x128xf32>
    %37 = arith.addf %34, %36 : vector<128x128xf32>
    %38 = arith.addf %30, %37 : vector<128x128xf32>
    %cst_41 = arith.constant 0.000000e+00 : f32
    %39 = vector.broadcast %cst_41 : f32 to vector<128x128xf32>
    %40 = arith.maximumf %38, %39 : vector<128x128xf32>
    %41 = arith.truncf %40 : vector<128x128xf32> to vector<128x128xbf16>
    %c0_42 = arith.constant 0 : index
    %c0_43 = arith.constant 0 : index
    %c0_44 = arith.constant 0 : index
    %42 = vector.load %arg8[%c0_42, %c0_43, %c0_44] : memref<1x128x128xbf16, #tpu.memory_space<vmem>>, vector<1x128x128xbf16>
    %43 = vector.shape_cast %42 : vector<1x128x128xbf16> to vector<128x128xbf16>
    %44 = vector.shape_cast %41 : vector<128x128xbf16> to vector<1x128x128xbf16>
    tpu.vector_store %arg8[%c0_42, %c0_43, %c0_44], %44 {strides = array<i32>} : memref<1x128x128xbf16, #tpu.memory_space<vmem>>, vector<1x128x128xbf16>,
    return
  }
  func.func @transform_0(%arg0: i32) -> (i32, i32, i32) {
    %c0_i32 = arith.constant 0 : i32
    %c0_i32_0 = arith.constant 0 : i32
    %c0_i32_1 = arith.constant 0 : i32
    return %arg0, %c0_i32, %c0_i32_0 : i32, i32, i32
  }
  func.func @transform_1(%arg0: i32) -> (i32, i32) {
    %c0_i32 = arith.constant 0 : i32
    %c0_i32_0 = arith.constant 0 : i32
    %c0_i32_1 = arith.constant 0 : i32
    return %c0_i32, %c0_i32_0 : i32, i32
  }
  func.func @transform_2(%arg0: i32) -> (i32, i32) {
    %c0_i32 = arith.constant 0 : i32
    %c0_i32_0 = arith.constant 0 : i32
    %c0_i32_1 = arith.constant 0 : i32
    return %c0_i32, %c0_i32_0 : i32, i32
  }
  func.func @transform_3(%arg0: i32) -> (i32, i32) {
    %c0_i32 = arith.constant 0 : i32
    %c0_i32_0 = arith.constant 0 : i32
    %c0_i32_1 = arith.constant 0 : i32
    return %c0_i32, %c0_i32_0 : i32, i32
  }
  func.func @transform_4(%arg0: i32) -> (i32, i32) {
    %c0_i32 = arith.constant 0 : i32
    %c0_i32_0 = arith.constant 0 : i32
    %c0_i32_1 = arith.constant 0 : i32
    return %c0_i32, %c0_i32_0 : i32, i32
  }
  func.func @transform_5(%arg0: i32) -> (i32, i32) {
    %c0_i32 = arith.constant 0 : i32
    %c0_i32_0 = arith.constant 0 : i32
    %c0_i32_1 = arith.constant 0 : i32
    return %c0_i32, %c0_i32_0 : i32, i32
  }
  func.func @transform_6(%arg0: i32) -> (i32, i32) {
    %c0_i32 = arith.constant 0 : i32
    %c0_i32_0 = arith.constant 0 : i32
    %c0_i32_1 = arith.constant 0 : i32
    return %c0_i32, %c0_i32_0 : i32, i32
  }
  func.func @transform_7(%arg0: i32) -> (i32, i32, i32) {
    %c0_i32 = arith.constant 0 : i32
    %c0_i32_0 = arith.constant 0 : i32
    %c0_i32_1 = arith.constant 0 : i32
    return %arg0, %c0_i32, %c0_i32_0 : i32, i32, i32
  }
}

module attributes {stable_mosaic.version = 11 : i64} {
  func.func @_temporal_block_kernel(%arg0: i32, %arg1: memref<1x128x128xbf16, #tpu.memory_space<vmem>>, %arg2: memref<384x128xbf16, #tpu.memory_space<vmem>>, %arg3: memref<1x128xf32, #tpu.memory_space<vmem>>, %arg4: memref<384x128xbf16, #tpu.memory_space<vmem>>, %arg5: memref<1x128xf32, #tpu.memory_space<vmem>>, %arg6: memref<1x128x128xbf16, #tpu.memory_space<vmem>>, %arg7: memref<136x128xbf16, #tpu.memory_space<vmem>>, %arg8: memref<136x128xbf16, #tpu.memory_space<vmem>>) attributes {dimension_semantics = [#tpu.dimension_semantics<parallel>], iteration_bounds = array<i64: 2>, scalar_prefetch = 0 : i64, scratch_operands = 2 : i64, tpu.core_type = #tpu.core_type<tc>, window_params = [{transform_indices = @transform_0, window_bounds = array<i64: 1, 128, 128>}, {pipeline_mode = #tpu.pipeline_mode<synchronous>, transform_indices = @transform_1, window_bounds = array<i64: 384, 128>}, {pipeline_mode = #tpu.pipeline_mode<synchronous>, transform_indices = @transform_2, window_bounds = array<i64: 1, 128>}, {pipeline_mode = #tpu.pipeline_mode<synchronous>, transform_indices = @transform_3, window_bounds = array<i64: 384, 128>}, {pipeline_mode = #tpu.pipeline_mode<synchronous>, transform_indices = @transform_4, window_bounds = array<i64: 1, 128>}, {transform_indices = @transform_5, window_bounds = array<i64: 1, 128, 128>}]} {
    %cst = arith.constant 0.000000e+00 : bf16
    %0 = vector.broadcast %cst : bf16 to vector<8x128xbf16>
    %c0 = arith.constant 0 : index
    %c0_0 = arith.constant 0 : index
    %1 = vector.load %arg7[%c0, %c0_0] : memref<136x128xbf16, #tpu.memory_space<vmem>>, vector<8x128xbf16>
    tpu.vector_store %arg7[%c0, %c0_0], %0 {strides = array<i32>} : memref<136x128xbf16, #tpu.memory_space<vmem>>, vector<8x128xbf16>,
    %c0_1 = arith.constant 0 : index
    %c0_2 = arith.constant 0 : index
    %c0_3 = arith.constant 0 : index
    %2 = vector.load %arg1[%c0_1, %c0_2, %c0_3] : memref<1x128x128xbf16, #tpu.memory_space<vmem>>, vector<1x128x128xbf16>
    %3 = vector.shape_cast %2 : vector<1x128x128xbf16> to vector<128x128xbf16>
    %c8 = arith.constant 8 : index
    %c0_4 = arith.constant 0 : index
    %4 = vector.load %arg7[%c8, %c0_4] : memref<136x128xbf16, #tpu.memory_space<vmem>>, vector<128x128xbf16>
    tpu.vector_store %arg7[%c8, %c0_4], %3 {strides = array<i32>} : memref<136x128xbf16, #tpu.memory_space<vmem>>, vector<128x128xbf16>,
    %c0_5 = arith.constant 0 : index
    %c0_6 = arith.constant 0 : index
    %5 = vector.load %arg7[%c0_5, %c0_6] : memref<136x128xbf16, #tpu.memory_space<vmem>>, vector<128x128xbf16>
    %c4 = arith.constant 4 : index
    %c0_7 = arith.constant 0 : index
    %6 = vector.load %arg7[%c4, %c0_7] : memref<136x128xbf16, #tpu.memory_space<vmem>>, vector<128x128xbf16>
    %c8_8 = arith.constant 8 : index
    %c0_9 = arith.constant 0 : index
    %7 = vector.load %arg7[%c8_8, %c0_9] : memref<136x128xbf16, #tpu.memory_space<vmem>>, vector<128x128xbf16>
    %8 = tpu.concatenate %5, %6, %7 in 1 : vector<128x128xbf16>, vector<128x128xbf16>, vector<128x128xbf16> -> vector<128x384xbf16>
    %c0_10 = arith.constant 0 : index
    %c0_11 = arith.constant 0 : index
    %9 = vector.load %arg2[%c0_10, %c0_11] : memref<384x128xbf16, #tpu.memory_space<vmem>>, vector<384x128xbf16>
    %cst_12 = arith.constant dense<0.000000e+00> : vector<128x128xf32>
    %10 = tpu.matmul %8, %9, %cst_12 {dimension_numbers = #tpu.dot_dimension_numbers<[1], [0], [0], [1], [0, 0, 1, 1], [], []>} : vector<128x384xbf16>, vector<384x128xbf16>, vector<128x128xf32> -> vector<128x128xf32>
    %c0_13 = arith.constant 0 : index
    %c0_14 = arith.constant 0 : index
    %11 = vector.load %arg3[%c0_13, %c0_14] : memref<1x128xf32, #tpu.memory_space<vmem>>, vector<1x128xf32>
    %12 = vector.broadcast %11 : vector<1x128xf32> to vector<128x128xf32>
    %13 = arith.addf %10, %12 : vector<128x128xf32>
    %cst_15 = arith.constant 0.000000e+00 : f32
    %14 = vector.broadcast %cst_15 : f32 to vector<128x128xf32>
    %15 = arith.maximumf %13, %14 : vector<128x128xf32>
    %cst_16 = arith.constant 0.000000e+00 : bf16
    %16 = vector.broadcast %cst_16 : bf16 to vector<8x128xbf16>
    %c0_17 = arith.constant 0 : index
    %c0_18 = arith.constant 0 : index
    %17 = vector.load %arg8[%c0_17, %c0_18] : memref<136x128xbf16, #tpu.memory_space<vmem>>, vector<8x128xbf16>
    tpu.vector_store %arg8[%c0_17, %c0_18], %16 {strides = array<i32>} : memref<136x128xbf16, #tpu.memory_space<vmem>>, vector<8x128xbf16>,
    %18 = arith.truncf %15 : vector<128x128xf32> to vector<128x128xbf16>
    %c8_19 = arith.constant 8 : index
    %c0_20 = arith.constant 0 : index
    %19 = vector.load %arg8[%c8_19, %c0_20] : memref<136x128xbf16, #tpu.memory_space<vmem>>, vector<128x128xbf16>
    tpu.vector_store %arg8[%c8_19, %c0_20], %18 {strides = array<i32>} : memref<136x128xbf16, #tpu.memory_space<vmem>>, vector<128x128xbf16>,
    %c0_21 = arith.constant 0 : index
    %c0_22 = arith.constant 0 : index
    %20 = vector.load %arg8[%c0_21, %c0_22] : memref<136x128xbf16, #tpu.memory_space<vmem>>, vector<128x128xbf16>
    %c4_23 = arith.constant 4 : index
    %c0_24 = arith.constant 0 : index
    %21 = vector.load %arg8[%c4_23, %c0_24] : memref<136x128xbf16, #tpu.memory_space<vmem>>, vector<128x128xbf16>
    %c8_25 = arith.constant 8 : index
    %c0_26 = arith.constant 0 : index
    %22 = vector.load %arg8[%c8_25, %c0_26] : memref<136x128xbf16, #tpu.memory_space<vmem>>, vector<128x128xbf16>
    %23 = tpu.concatenate %20, %21, %22 in 1 : vector<128x128xbf16>, vector<128x128xbf16>, vector<128x128xbf16> -> vector<128x384xbf16>
    %c0_27 = arith.constant 0 : index
    %c0_28 = arith.constant 0 : index
    %24 = vector.load %arg4[%c0_27, %c0_28] : memref<384x128xbf16, #tpu.memory_space<vmem>>, vector<384x128xbf16>
    %cst_29 = arith.constant dense<0.000000e+00> : vector<128x128xf32>
    %25 = tpu.matmul %23, %24, %cst_29 {dimension_numbers = #tpu.dot_dimension_numbers<[1], [0], [0], [1], [0, 0, 1, 1], [], []>} : vector<128x384xbf16>, vector<384x128xbf16>, vector<128x128xf32> -> vector<128x128xf32>
    %c0_30 = arith.constant 0 : index
    %c0_31 = arith.constant 0 : index
    %26 = vector.load %arg5[%c0_30, %c0_31] : memref<1x128xf32, #tpu.memory_space<vmem>>, vector<1x128xf32>
    %27 = vector.broadcast %26 : vector<1x128xf32> to vector<128x128xf32>
    %28 = arith.addf %25, %27 : vector<128x128xf32>
    %cst_32 = arith.constant 0.000000e+00 : f32
    %29 = vector.broadcast %cst_32 : f32 to vector<128x128xf32>
    %30 = arith.maximumf %28, %29 : vector<128x128xf32>
    %c0_33 = arith.constant 0 : index
    %c0_34 = arith.constant 0 : index
    %c0_35 = arith.constant 0 : index
    %31 = vector.load %arg1[%c0_33, %c0_34, %c0_35] : memref<1x128x128xbf16, #tpu.memory_space<vmem>>, vector<1x128x128xbf16>
    %32 = vector.shape_cast %31 : vector<1x128x128xbf16> to vector<128x128xbf16>
    %33 = arith.extf %32 : vector<128x128xbf16> to vector<128x128xf32>
    %34 = arith.addf %30, %33 : vector<128x128xf32>
    %cst_36 = arith.constant 0.000000e+00 : f32
    %35 = vector.broadcast %cst_36 : f32 to vector<128x128xf32>
    %36 = arith.maximumf %34, %35 : vector<128x128xf32>
    %37 = arith.truncf %36 : vector<128x128xf32> to vector<128x128xbf16>
    %c0_37 = arith.constant 0 : index
    %c0_38 = arith.constant 0 : index
    %c0_39 = arith.constant 0 : index
    %38 = vector.load %arg6[%c0_37, %c0_38, %c0_39] : memref<1x128x128xbf16, #tpu.memory_space<vmem>>, vector<1x128x128xbf16>
    %39 = vector.shape_cast %38 : vector<1x128x128xbf16> to vector<128x128xbf16>
    %40 = vector.shape_cast %37 : vector<128x128xbf16> to vector<1x128x128xbf16>
    tpu.vector_store %arg6[%c0_37, %c0_38, %c0_39], %40 {strides = array<i32>} : memref<1x128x128xbf16, #tpu.memory_space<vmem>>, vector<1x128x128xbf16>,
    return
  }
  func.func @transform_0(%arg0: i32) -> (i32, i32, i32) {
    %c0_i32 = arith.constant 0 : i32
    %c0_i32_0 = arith.constant 0 : i32
    %c0_i32_1 = arith.constant 0 : i32
    return %arg0, %c0_i32, %c0_i32_0 : i32, i32, i32
  }
  func.func @transform_1(%arg0: i32) -> (i32, i32) {
    %c0_i32 = arith.constant 0 : i32
    %c0_i32_0 = arith.constant 0 : i32
    %c0_i32_1 = arith.constant 0 : i32
    return %c0_i32, %c0_i32_0 : i32, i32
  }
  func.func @transform_2(%arg0: i32) -> (i32, i32) {
    %c0_i32 = arith.constant 0 : i32
    %c0_i32_0 = arith.constant 0 : i32
    %c0_i32_1 = arith.constant 0 : i32
    return %c0_i32, %c0_i32_0 : i32, i32
  }
  func.func @transform_3(%arg0: i32) -> (i32, i32) {
    %c0_i32 = arith.constant 0 : i32
    %c0_i32_0 = arith.constant 0 : i32
    %c0_i32_1 = arith.constant 0 : i32
    return %c0_i32, %c0_i32_0 : i32, i32
  }
  func.func @transform_4(%arg0: i32) -> (i32, i32) {
    %c0_i32 = arith.constant 0 : i32
    %c0_i32_0 = arith.constant 0 : i32
    %c0_i32_1 = arith.constant 0 : i32
    return %c0_i32, %c0_i32_0 : i32, i32
  }
  func.func @transform_5(%arg0: i32) -> (i32, i32, i32) {
    %c0_i32 = arith.constant 0 : i32
    %c0_i32_0 = arith.constant 0 : i32
    %c0_i32_1 = arith.constant 0 : i32
    return %arg0, %c0_i32, %c0_i32_0 : i32, i32, i32
  }
}

</mosaic_0001>

<llo_original>
// kernel: tcn_forward.3
$region0: #{tcn_forward.3}
  #allocation0 [shape = 'u32[]', space=smem, size = 0x4, offset = 0x4, fixed_abs, tag = 'smem constant byte address 0x4 - core index']
  #allocation1 [shape = 'u32[144,128]{1,0:T(1,128)}', space=vmem, size = 0x12000, scoped, tag = 'internal scratch']
  #allocation2 [shape = 'bf16[130,8]{1,0:T(8,128)(2,1)}', space=vmem, size = 0x8800, scoped, tag = 'scratch operand']
  #allocation3 [shape = 'bf16[130,128]{1,0:T(8,128)(2,1)}', space=vmem, size = 0x8800, scoped, tag = 'scratch operand']
  %s0 = inlined_call_operand.vmem [shape: bf16[2,128,8], index: 0, kind: input, shape index: {}]
  %s1 = inlined_call_operand.vmem [shape: bf16[24,128], index: 1, kind: input, shape index: {}]
  %s2 = inlined_call_operand.vmem [shape: f32[1,128], index: 2, kind: input, shape index: {}]
  %s3 = inlined_call_operand.vmem [shape: bf16[384,128], index: 3, kind: input, shape index: {}]
  %s4 = inlined_call_operand.hbm [shape: f32[1,128], index: 4, kind: input, shape index: {}]
  %s5 = inlined_call_operand.vmem [shape: bf16[8,128], index: 5, kind: input, shape index: {}]
  %s6 = inlined_call_operand.hbm [shape: f32[1,128], index: 6, kind: input, shape index: {}]
  %s7 = inlined_call_operand.vmem [shape: bf16[2,128,128], index: 7, kind: output, shape index: {}]
  %s8 = sld [smem:[#allocation0]]
  $region69: #{tcn_forward.3} parent=0
    _
  %s10 = ssub.s32 1, %s8
  %s11 = scalar_select 0, %s10, %s8
  $region1: #{tcn_forward.3} parent=0
    #allocation4 [shape = 'u8[512]{0}', space=vmem, size = 0x400, scoped, tag = 'input window, operand 4, single buffered']
    #allocation5 [shape = 's32[2]{0}', space=sflag, size = 0x8, scoped, tag = 'scoped memory for tcn_forward.3']
    #allocation6 [shape = 'u8[512]{0}', space=vmem, size = 0x400, scoped, tag = 'input window, operand 6, single buffered']
    #allocation7 [shape = 's32[1]{0}', space=sflag, size = 0x4, scoped, tag = 'scoped memory for tcn_forward.3']
    %12 = vsyncpa [#allocation5], 0
    %13 = vsyncpa [#allocation7], 0
    loop: start=0, step=1, limit=4
    $region2: #{tcn_forward.3} parent=1 // loop_pre_header
      _
    $region3: #{tcn_forward.3} parent=1 // loop_header
      %s15 = sphi 0, %s19
      %p16 = scmp.ge.s32.totalorder %s15, 4
      %s25 = sphi 0, %s27
      %s28 = sphi 0, %s25
      %s29 = sphi 0, %s28
      %s45 = sphi 0, %s29
      %s49 = sphi 0, %s49
      %s51 = sphi 0, %s49
      %s52 = sphi 0, %s51
      %s66 = sphi 0, %s52
      %s70 = sphi 0, %s70
      %s72 = sphi 0, %s70
      %s73 = sphi 0, %s72
      %s87 = sphi 0, %s73
      %s91 = sphi 0, %s91
      %s93 = sphi 0, %s91
      %s94 = sphi 0, %s93
      %s108 = sphi 0, %s94
      %s112 = sphi 0, %s112
      %s114 = sphi 0, %s112
      %s115 = sphi 0, %s114
      %s129 = sphi 0, %s115
      %s133 = sphi 0, %s133
      %s135 = sphi 0, %s133
      %s136 = sphi 0, %s135
      %s150 = sphi 0, %s136
      %s154 = sphi 0, %s154
      %s156 = sphi 0, %s154
      %s157 = sphi 0, %s156
      %s171 = sphi 0, %s157
      %s177 = sphi 0, %s179
      %s180 = sphi 0, %s177
      %s181 = sphi 0, %s180
      %s197 = sphi 0, %s181
    $region4: #{tcn_forward.3} parent=1 // loop_header_branch
      %18 = sbr.rel (%p16) target = $region8
    $region5: #{tcn_forward.3} parent=1 // loop_body
      %s20 = ssub.s32 %s15, 1
      %s21 = ssub.s32 %s15, 2
      %s22 = sadd.s32 %s15, 1
      %s23 = ssub.s32 %s15, %s22
      %p24 = scmp.eq.s32.totalorder %s23, 0
      %s26 = sadd.s32 %s25, 1
      %s27 = scalar_select %p24, %s25, %s26
      %p30 = pneg %p24
      %p31 = scmp.eq.s32.totalorder %s15, 1
      %p32 = por %p30, %p31
      %p33 = scmp.ne.s32.totalorder %s25, %s28
      %p34 = scmp.eq.s32.totalorder %s15, 0
      %p35 = por %p33, %p34
      %p36 = scmp.ne.s32.totalorder %s25, %s28
      %p37 = scmp.eq.s32.totalorder %s20, 1
      %p38 = por %p36, %p37
      %p39 = scmp.ne.s32.totalorder %s28, %s29
      %p40 = scmp.eq.s32.totalorder %s20, 0
      %p41 = por %p39, %p40
      %p42 = scmp.ne.s32.totalorder %s28, %s29
      %p43 = scmp.eq.s32.totalorder %s21, 1
      %p44 = por %p42, %p43
      %p46 = scmp.ne.s32.totalorder %s29, %s45
      %p47 = scmp.eq.s32.totalorder %s21, 0
      %p48 = por %p46, %p47
      %s50 = sadd.s32 %s49, 1
      %p53 = scmp.eq.s32.totalorder %s15, 1
      %p54 = scmp.ne.s32.totalorder %s49, %s51
      %p55 = scmp.eq.s32.totalorder %s15, 0
      %p56 = por %p54, %p55
      %p57 = scmp.ne.s32.totalorder %s49, %s51
      %p58 = scmp.eq.s32.totalorder %s20, 1
      %p59 = por %p57, %p58
      %p60 = scmp.ne.s32.totalorder %s51, %s52
      %p61 = scmp.eq.s32.totalorder %s20, 0
      %p62 = por %p60, %p61
      %p63 = scmp.ne.s32.totalorder %s51, %s52
      %p64 = scmp.eq.s32.totalorder %s21, 1
      %p65 = por %p63, %p64
      %p67 = scmp.ne.s32.totalorder %s52, %s66
      %p68 = scmp.eq.s32.totalorder %s21, 0
      %p69 = por %p67, %p68
      %s71 = sadd.s32 %s70, 1
      %p74 = scmp.eq.s32.totalorder %s15, 1
      %p75 = scmp.ne.s32.totalorder %s70, %s72
      %p76 = scmp.eq.s32.totalorder %s15, 0
      %p77 = por %p75, %p76
      %p78 = scmp.ne.s32.totalorder %s70, %s72
      %p79 = scmp.eq.s32.totalorder %s20, 1
      %p80 = por %p78, %p79
      %p81 = scmp.ne.s32.totalorder %s72, %s73
      %p82 = scmp.eq.s32.totalorder %s20, 0
      %p83 = por %p81, %p82
      %p84 = scmp.ne.s32.totalorder %s72, %s73
      %p85 = scmp.eq.s32.totalorder %s21, 1
      %p86 = por %p84, %p85
      %p88 = scmp.ne.s32.totalorder %s73, %s87
      %p89 = scmp.eq.s32.totalorder %s21, 0
      %p90 = por %p88, %p89
      %s92 = sadd.s32 %s91, 1
      %p95 = scmp.eq.s32.totalorder %s15, 1
      %p96 = scmp.ne.s32.totalorder %s91, %s93
      %p97 = scmp.eq.s32.totalorder %s15, 0
      %p98 = por %p96, %p97
      %p99 = scmp.ne.s32.totalorder %s91, %s93
      %p100 = scmp.eq.s32.totalorder %s20, 1
      %p101 = por %p99, %p100
      %p102 = scmp.ne.s32.totalorder %s93, %s94
      %p103 = scmp.eq.s32.totalorder %s20, 0
      %p104 = por %p102, %p103
      %p105 = scmp.ne.s32.totalorder %s93, %s94
      %p106 = scmp.eq.s32.totalorder %s21, 1
      %p107 = por %p105, %p106
      %p109 = scmp.ne.s32.totalorder %s94, %s108
      %p110 = scmp.eq.s32.totalorder %s21, 0
      %p111 = por %p109, %p110
      %s113 = sadd.s32 %s112, 1
      %p116 = scmp.eq.s32.totalorder %s15, 1
      %p117 = scmp.ne.s32.totalorder %s112, %s114
      %p118 = scmp.eq.s32.totalorder %s15, 0
      %p119 = por %p117, %p118
      %p120 = scmp.ne.s32.totalorder %s112, %s114
      %p121 = scmp.eq.s32.totalorder %s20, 1
      %p122 = por %p120, %p121
      %p123 = scmp.ne.s32.totalorder %s114, %s115
      %p124 = scmp.eq.s32.totalorder %s20, 0
      %p125 = por %p123, %p124
      %p126 = scmp.ne.s32.totalorder %s114, %s115
      %p127 = scmp.eq.s32.totalorder %s21, 1
      %p128 = por %p126, %p127
      %p130 = scmp.ne.s32.totalorder %s115, %s129
      %p131 = scmp.eq.s32.totalorder %s21, 0
      %p132 = por %p130, %p131
      %s134 = sadd.s32 %s133, 1
      %p137 = scmp.eq.s32.totalorder %s15, 1
      %p138 = scmp.ne.s32.totalorder %s133, %s135
      %p139 = scmp.eq.s32.totalorder %s15, 0
      %p140 = por %p138, %p139
      %p141 = scmp.ne.s32.totalorder %s133, %s135
      %p142 = scmp.eq.s32.totalorder %s20, 1
      %p143 = por %p141, %p142
      %p144 = scmp.ne.s32.totalorder %s135, %s136
      %p145 = scmp.eq.s32.totalorder %s20, 0
      %p146 = por %p144, %p145
      %p147 = scmp.ne.s32.totalorder %s135, %s136
      %p148 = scmp.eq.s32.totalorder %s21, 1
      %p149 = por %p147, %p148
      %p151 = scmp.ne.s32.totalorder %s136, %s150
      %p152 = scmp.eq.s32.totalorder %s21, 0
      %p153 = por %p151, %p152
      %s155 = sadd.s32 %s154, 1
      %p158 = scmp.eq.s32.totalorder %s15, 1
      %p159 = scmp.ne.s32.totalorder %s154, %s156
      %p160 = scmp.eq.s32.totalorder %s15, 0
      %p161 = por %p159, %p160
      %p162 = scmp.ne.s32.totalorder %s154, %s156
      %p163 = scmp.eq.s32.totalorder %s20, 1
      %p164 = por %p162, %p163
      %p165 = scmp.ne.s32.totalorder %s156, %s157
      %p166 = scmp.eq.s32.totalorder %s20, 0
      %p167 = por %p165, %p166
      %p168 = scmp.ne.s32.totalorder %s156, %s157
      %p169 = scmp.eq.s32.totalorder %s21, 1
      %p170 = por %p168, %p169
      %p172 = scmp.ne.s32.totalorder %s157, %s171
      %p173 = scmp.eq.s32.totalorder %s21, 0
      %p174 = por %p172, %p173
      %s175 = ssub.s32 %s15, %s22
      %p176 = scmp.eq.s32.totalorder %s175, 0
      %s178 = sadd.s32 %s177, 1
      %s179 = scalar_select %p176, %s177, %s178
      %p182 = pneg %p176
      %p183 = scmp.eq.s32.totalorder %s15, 1
      %p184 = por %p182, %p183
      %p185 = scmp.ne.s32.totalorder %s177, %s180
      %p186 = scmp.eq.s32.totalorder %s15, 0
      %p187 = por %p185, %p186
      %p188 = scmp.ne.s32.totalorder %s177, %s180
      %p189 = scmp.eq.s32.totalorder %s20, 1
      %p190 = por %p188, %p189
      %p191 = scmp.ne.s32.totalorder %s180, %s181
      %p192 = scmp.eq.s32.totalorder %s20, 0
      %p193 = por %p191, %p192
      %p194 = scmp.ne.s32.totalorder %s180, %s181
      %p195 = scmp.eq.s32.totalorder %s21, 1
      %p196 = por %p194, %p195
      %p198 = scmp.ne.s32.totalorder %s181, %s197
      %p199 = scmp.eq.s32.totalorder %s21, 0
      %p200 = por %p198, %p199
      %p201 = scmp.le.s32.totalorder 1, %s15
      %p202 = scmp.lt.s32.totalorder %s15, 3
      %p203 = pnand %p201, %p202
      %p204 = pneg %p203
      // Predicated region
      $region9: #{tcn_forward.3} parent=5 // pred_check
        _
      $region10: #{tcn_forward.3} parent=5 // pred_check_branch
        %206 = sbr.rel (%p203) target = $region12
      $region11: #{tcn_forward.3} parent=5 // pred_region
        %s207 = ssub.s32 %s15, 1
        // Predicated region
        $region13: #{tcn_forward.3} parent=11 // pred_check
          %p208 = pneg %p62
        $region14: #{tcn_forward.3} parent=11 // pred_check_branch
          %210 = sbr.rel (%p208) target = $region16
        $region15: #{tcn_forward.3} parent=11 // pred_region
          _
        $region16: #{tcn_forward.3} parent=11 // pred_fallthru
          _
        // Predicated region
        $region17: #{tcn_forward.3} parent=11 // pred_check
          %p211 = pneg %p83
        $region18: #{tcn_forward.3} parent=11 // pred_check_branch
          %213 = sbr.rel (%p211) target = $region20
        $region19: #{tcn_forward.3} parent=11 // pred_region
          _
        $region20: #{tcn_forward.3} parent=11 // pred_fallthru
          _
        // Predicated region
        $region21: #{tcn_forward.3} parent=11 // pred_check
          %p214 = pneg %p104
        $region22: #{tcn_forward.3} parent=11 // pred_check_branch
          %216 = sbr.rel (%p214) target = $region24
        $region23: #{tcn_forward.3} parent=11 // pred_region
          _
        $region24: #{tcn_forward.3} parent=11 // pred_fallthru
          _
        // Predicated region
        $region25: #{tcn_forward.3} parent=11 // pred_check
          %p217 = pneg %p125
        $region26: #{tcn_forward.3} parent=11 // pred_check_branch
          %219 = sbr.rel (%p217) target = $region28
        $region27: #{tcn_forward.3} parent=11 // pred_region
          %s221 = ssub.s32 16, 16
          %222 = vsyncadd [#allocation5], %s221
          %s224 = sshll.u32 [#allocation4], 4
          %s225 = int_to_ptr.vmem [resolvable:$true] %s224
          %227 = dma.hbm_to_vmem [thread:$0]  %s4, 16, %s225, [#allocation5]
        $region28: #{tcn_forward.3} parent=11 // pred_fallthru
          _
        // Predicated region
        $region29: #{tcn_forward.3} parent=11 // pred_check
          %p228 = pneg %p146
        $region30: #{tcn_forward.3} parent=11 // pred_check_branch
          %230 = sbr.rel (%p228) target = $region32
        $region31: #{tcn_forward.3} parent=11 // pred_region
          _
        $region32: #{tcn_forward.3} parent=11 // pred_fallthru
          _
        // Predicated region
        $region33: #{tcn_forward.3} parent=11 // pred_check
          %p231 = pneg %p167
        $region34: #{tcn_forward.3} parent=11 // pred_check_branch
          %233 = sbr.rel (%p231) target = $region36
        $region35: #{tcn_forward.3} parent=11 // pred_region
          %s235 = ssub.s32 16, 16
          %236 = vsyncadd [#allocation7], %s235
          %s238 = sshll.u32 [#allocation6], 4
          %s239 = int_to_ptr.vmem [resolvable:$true] %s238
          %241 = dma.hbm_to_vmem [thread:$0]  %s6, 16, %s239, [#allocation7]
        $region36: #{tcn_forward.3} parent=11 // pred_fallthru
          _
      $region12: #{tcn_forward.3} parent=5 // pred_fallthru
        _
      %p242 = scmp.lt.s32.totalorder %s15, 2
      // Predicated region
      $region37: #{tcn_forward.3} parent=5 // pred_check
        %p243 = pneg %p242
      $region38: #{tcn_forward.3} parent=5 // pred_check_branch
        %245 = sbr.rel (%p243) target = $region40
      $region39: #{tcn_forward.3} parent=5 // pred_region
        // Predicated region
        $region41: #{tcn_forward.3} parent=39 // pred_check
          %p246 = pneg %p35
        $region42: #{tcn_forward.3} parent=39 // pred_check_branch
          %248 = sbr.rel (%p246) target = $region44
        $region43: #{tcn_forward.3} parent=39 // pred_region
          %p249 = scmp.lt.s32.totalorder %s15, 1
          %s250 = scalar_select %p249, %s15, 1
          %s251 = smul.addr %s250, 16
          %s252 = smul.addr %s251, 4
          %s253 = scalar_lea.vmem %s0, %s252
        $region44: #{tcn_forward.3} parent=39 // pred_fallthru
          _
      $region40: #{tcn_forward.3} parent=5 // pred_fallthru
        _
      %p254 = scmp.le.s32.totalorder 1, %s15
      %p255 = scmp.lt.s32.totalorder %s15, 3
      %p256 = pnand %p254, %p255
      %p257 = pneg %p256
      // Predicated region
      $region45: #{tcn_forward.3} parent=5 // pred_check
        _
      $region46: #{tcn_forward.3} parent=5 // pred_check_branch
        %259 = sbr.rel (%p256) target = $region48
      $region47: #{tcn_forward.3} parent=5 // pred_region
        %s260 = ssub.s32 %s15, 1
        // Predicated region
        $region49: #{tcn_forward.3} parent=47 // pred_check
          %p261 = pneg %p125
        $region50: #{tcn_forward.3} parent=47 // pred_check_branch
          %263 = sbr.rel (%p261) target = $region52
        $region51: #{tcn_forward.3} parent=47 // pred_region
          %264 = dma.done [#allocation5], 16
        $region52: #{tcn_forward.3} parent=47 // pred_fallthru
          _
        // Predicated region
        $region53: #{tcn_forward.3} parent=47 // pred_check
          %p265 = pneg %p167
        $region54: #{tcn_forward.3} parent=47 // pred_check_branch
          %267 = sbr.rel (%p265) target = $region56
        $region55: #{tcn_forward.3} parent=47 // pred_region
          %268 = dma.done [#allocation7], 16
        $region56: #{tcn_forward.3} parent=47 // pred_fallthru
          _
        %p269 = scmp.lt.s32.totalorder %s20, 1
        %s270 = scalar_select %p269, %s20, 1
        %s271 = smul.addr %s270, 16
        %s272 = smul.addr %s271, 4
        %s273 = scalar_lea.vmem %s0, %s272
        %p274 = pneg %p41
        %p275 = pneg %p38
        %p276 = pneg %p62
        %p277 = pneg %p59
        %p278 = pneg %p83
        %p279 = pneg %p80
        %p280 = pneg %p104
        %p281 = pneg %p101
        %p282 = pneg %p125
        %p283 = pneg %p122
        %p284 = pneg %p146
        %p285 = pneg %p143
        %p286 = pneg %p167
        %p287 = pneg %p164
        %p288 = pneg %p193
        %p289 = pneg %p190
        %p290 = scmp.lt.s32.totalorder %s20, 1
        %s291 = scalar_select %p290, %s20, 1
        %s292 = smul.addr %s291, 16
        %s293 = smul.addr %s292, 4
        %s294 = scalar_lea.vmem %s7, %s293
        %p295 = scmp.lt.s32.totalorder %s20, 1
        %s296 = scalar_select %p295, %s20, 1
        %s297 = smul.addr %s296, 16
        %s298 = smul.addr %s297, 4
        %s299 = scalar_lea.vmem %s0, %s298
        %p300 = scmp.lt.s32.totalorder %s20, 1
        %s301 = scalar_select %p300, %s20, 1
        %s302 = smul.addr %s301, 16
        %s303 = smul.addr %s302, 4
        %s304 = scalar_lea.vmem %s7, %s303
        %vm306 = vcmask 57344
        %307 = vst.msk [vmem:[#allocation2] sm:$0x1] %vm306, 0
        %v308 = vld [vmem:[%s299] sm:$0xf]
        %v309 = vld [vmem:[%s299 + $0x4] sm:$0xf]
        %v310 = vld [vmem:[%s299 + $0x8] sm:$0xf]
        %v311 = vld [vmem:[%s299 + $0xc] sm:$0xf]
        %v312 = vld [vmem:[%s299 + $0x10] sm:$0xf]
        %v313 = vld [vmem:[%s299 + $0x14] sm:$0xf]
        %v314 = vld [vmem:[%s299 + $0x18] sm:$0xf]
        %v315 = vld [vmem:[%s299 + $0x1c] sm:$0xf]
        %v316 = vld [vmem:[%s299 + $0x20] sm:$0xf]
        %v317 = vld [vmem:[%s299 + $0x24] sm:$0xf]
        %v318 = vld [vmem:[%s299 + $0x28] sm:$0xf]
        %v319 = vld [vmem:[%s299 + $0x2c] sm:$0xf]
        %v320 = vld [vmem:[%s299 + $0x30] sm:$0xf]
        %v321 = vld [vmem:[%s299 + $0x34] sm:$0xf]
        %v322 = vld [vmem:[%s299 + $0x38] sm:$0xf]
        %v323 = vld [vmem:[%s299 + $0x3c] sm:$0xf]
        %vm340 = vcmask 1040384
        %vm341 = vcmask 1044484
        %vm342 = vmor %vm340, %vm341
        %v343 = vrot.slane %v308, 7
        %v344 = vrot.slane %v343, 4
        %v345 = vrot.slane %v309, 7
        %v346 = vsel %vm342, %v344, %v345
        %v347 = vrot.slane %v345, 4
        %v348 = vrot.slane %v310, 7
        %v349 = vsel %vm342, %v347, %v348
        %v350 = vrot.slane %v348, 4
        %v351 = vrot.slane %v311, 7
        %v352 = vsel %vm342, %v350, %v351
        %v353 = vrot.slane %v351, 4
        %v354 = vrot.slane %v312, 7
        %v355 = vsel %vm342, %v353, %v354
        %v356 = vrot.slane %v354, 4
        %v357 = vrot.slane %v313, 7
        %v358 = vsel %vm342, %v356, %v357
        %v359 = vrot.slane %v357, 4
        %v360 = vrot.slane %v314, 7
        %v361 = vsel %vm342, %v359, %v360
        %v362 = vrot.slane %v360, 4
        %v363 = vrot.slane %v315, 7
        %v364 = vsel %vm342, %v362, %v363
        %v365 = vrot.slane %v363, 4
        %v366 = vrot.slane %v316, 7
        %v367 = vsel %vm342, %v365, %v366
        %v368 = vrot.slane %v366, 4
        %v369 = vrot.slane %v317, 7
        %v370 = vsel %vm342, %v368, %v369
        %v371 = vrot.slane %v369, 4
        %v372 = vrot.slane %v318, 7
        %v373 = vsel %vm342, %v371, %v372
        %v374 = vrot.slane %v372, 4
        %v375 = vrot.slane %v319, 7
        %v376 = vsel %vm342, %v374, %v375
        %v377 = vrot.slane %v375, 4
        %v378 = vrot.slane %v320, 7
        %v379 = vsel %vm342, %v377, %v378
        %v380 = vrot.slane %v378, 4
        %v381 = vrot.slane %v321, 7
        %v382 = vsel %vm342, %v380, %v381
        %v383 = vrot.slane %v381, 4
        %v384 = vrot.slane %v322, 7
        %v385 = vsel %vm342, %v383, %v384
        %v386 = vrot.slane %v384, 4
        %v387 = vrot.slane %v323, 7
        %v388 = vsel %vm342, %v386, %v387
        %v389 = vrot.slane %v387, 4
        %vm407 = vcmask 60417
        %408 = vst.msk [vmem:[#allocation2] sm:$0xe] %vm407, %v343
        %vm409 = vcmask 60416
        %410 = vst.msk [vmem:[#allocation2 + $0x4] sm:$0xf] %vm409, %v346
        %411 = vst.msk [vmem:[#allocation2 + $0x8] sm:$0xf] %vm409, %v349
        %412 = vst.msk [vmem:[#allocation2 + $0xc] sm:$0xf] %vm409, %v352
        %413 = vst.msk [vmem:[#allocation2 + $0x10] sm:$0xf] %vm409, %v355
        %414 = vst.msk [vmem:[#allocation2 + $0x14] sm:$0xf] %vm409, %v358
        %415 = vst.msk [vmem:[#allocation2 + $0x18] sm:$0xf] %vm409, %v361
        %416 = vst.msk [vmem:[#allocation2 + $0x1c] sm:$0xf] %vm409, %v364
        %417 = vst.msk [vmem:[#allocation2 + $0x20] sm:$0xf] %vm409, %v367
        %418 = vst.msk [vmem:[#allocation2 + $0x24] sm:$0xf] %vm409, %v370
        %419 = vst.msk [vmem:[#allocation2 + $0x28] sm:$0xf] %vm409, %v373
        %420 = vst.msk [vmem:[#allocation2 + $0x2c] sm:$0xf] %vm409, %v376
        %421 = vst.msk [vmem:[#allocation2 + $0x30] sm:$0xf] %vm409, %v379
        %422 = vst.msk [vmem:[#allocation2 + $0x34] sm:$0xf] %vm409, %v382
        %423 = vst.msk [vmem:[#allocation2 + $0x38] sm:$0xf] %vm409, %v385
        %424 = vst.msk [vmem:[#allocation2 + $0x3c] sm:$0xf] %vm409, %v388
        %425 = vst.msk [vmem:[#allocation2 + $0x40] sm:$0x1] %vm306, %v389
        %v426 = vld [vmem:[#allocation2] sm:$0xf]
        %v427 = vld [vmem:[#allocation2 + $0x4] sm:$0xf]
        %v428 = vld [vmem:[#allocation2 + $0x8] sm:$0xf]
        %v429 = vld [vmem:[#allocation2 + $0xc] sm:$0xf]
        %v430 = vld [vmem:[#allocation2 + $0x10] sm:$0xf]
        %v431 = vld [vmem:[#allocation2 + $0x14] sm:$0xf]
        %v432 = vld [vmem:[#allocation2 + $0x18] sm:$0xf]
        %v433 = vld [vmem:[#allocation2 + $0x1c] sm:$0xf]
        %v434 = vld [vmem:[#allocation2 + $0x20] sm:$0xf]
        %v435 = vld [vmem:[#allocation2 + $0x24] sm:$0xf]
        %v436 = vld [vmem:[#allocation2 + $0x28] sm:$0xf]
        %v437 = vld [vmem:[#allocation2 + $0x2c] sm:$0xf]
        %v438 = vld [vmem:[#allocation2 + $0x30] sm:$0xf]
        %v439 = vld [vmem:[#allocation2 + $0x34] sm:$0xf]
        %v440 = vld [vmem:[#allocation2 + $0x38] sm:$0xf]
        %v441 = vld [vmem:[#allocation2 + $0x3c] sm:$0xf]
        %v442 = vld [vmem:[#allocation2 + $0x40] sm:$0x1]
        %v443 = vld [vmem:[#allocation2] sm:$0xe]
        %v460 = vunpack.c.l.b16 %v426
        %v461 = vunpack.c.l.b16 %v427
        %v462 = vunpack.c.l.b16 %v428
        %v463 = vunpack.c.l.b16 %v429
        %v464 = vunpack.c.l.b16 %v430
        %v465 = vunpack.c.l.b16 %v431
        %v466 = vunpack.c.l.b16 %v432
        %v467 = vunpack.c.l.b16 %v433
        %v468 = vunpack.c.l.b16 %v434
        %v469 = vunpack.c.l.b16 %v435
        %v470 = vunpack.c.l.b16 %v436
        %v471 = vunpack.c.l.b16 %v437
        %v472 = vunpack.c.l.b16 %v438
        %v473 = vunpack.c.l.b16 %v439
        %v474 = vunpack.c.l.b16 %v440
        %v475 = vunpack.c.l.b16 %v441
        %v476 = vpack.c.b16 %v461, %v460
        %v477 = vpack.c.b16 %v463, %v462
        %v478 = vpack.c.b16 %v465, %v464
        %v479 = vpack.c.b16 %v467, %v466
        %v480 = vpack.c.b16 %v469, %v468
        %v481 = vpack.c.b16 %v471, %v470
        %v482 = vpack.c.b16 %v473, %v472
        %v483 = vpack.c.b16 %v475, %v474
        %v485 = vunpack.c.l.b16 %v442
        %v486 = vpack.c.b16 %v485, %v485
        %vm487 = vsmask.f32 7424
        %v489 = vshrl.u32 %v476, 16
        %v491 = vshll.u32 %v476, 16
        %v493 = vrot.slane %v491, 1
        %v494 = vor.u32 %v489, %v493
        %v496 = vshll.u32 %v477, 16
        %v498 = vrot.slane %v496, 1
        %v499 = vsel %vm487, %v494, %v498
        %v500 = vshrl.u32 %v477, 16
        %v502 = vor.u32 %v500, %v498
        %v504 = vshll.u32 %v478, 16
        %v506 = vrot.slane %v504, 1
        %v507 = vsel %vm487, %v502, %v506
        %v508 = vshrl.u32 %v478, 16
        %v510 = vor.u32 %v508, %v506
        %v512 = vshll.u32 %v479, 16
        %v514 = vrot.slane %v512, 1
        %v515 = vsel %vm487, %v510, %v514
        %v516 = vshrl.u32 %v479, 16
        %v518 = vor.u32 %v516, %v514
        %v520 = vshll.u32 %v480, 16
        %v522 = vrot.slane %v520, 1
        %v523 = vsel %vm487, %v518, %v522
        %v524 = vshrl.u32 %v480, 16
        %v526 = vor.u32 %v524, %v522
        %v528 = vshll.u32 %v481, 16
        %v530 = vrot.slane %v528, 1
        %v531 = vsel %vm487, %v526, %v530
        %v532 = vshrl.u32 %v481, 16
        %v534 = vor.u32 %v532, %v530
        %v536 = vshll.u32 %v482, 16
        %v538 = vrot.slane %v536, 1
        %v539 = vsel %vm487, %v534, %v538
        %v540 = vshrl.u32 %v482, 16
        %v542 = vor.u32 %v540, %v538
        %v544 = vshll.u32 %v483, 16
        %v546 = vrot.slane %v544, 1
        %v547 = vsel %vm487, %v542, %v546
        %v548 = vshrl.u32 %v483, 16
        %v550 = vor.u32 %v548, %v546
        %v552 = vshll.u32 %v486, 16
        %v554 = vrot.slane %v552, 1
        %v555 = vsel %vm487, %v550, %v554
        %556 = vrot.lane.b32.xlu0 %v499, 8
        %v557 = vpop.permute.xlu0 %556
        %558 = vrot.lane.b32.xlu0 %v507, 8
        %v559 = vpop.permute.xlu0 %558
        %560 = vrot.lane.b32.xlu0 %v515, 8
        %v561 = vpop.permute.xlu0 %560
        %562 = vrot.lane.b32.xlu0 %v523, 8
        %v563 = vpop.permute.xlu0 %562
        %564 = vrot.lane.b32.xlu0 %v531, 8
        %v565 = vpop.permute.xlu0 %564
        %566 = vrot.lane.b32.xlu0 %v539, 8
        %v567 = vpop.permute.xlu0 %566
        %568 = vrot.lane.b32.xlu0 %v547, 8
        %v569 = vpop.permute.xlu0 %568
        %570 = vrot.lane.b32.xlu0 %v555, 8
        %v571 = vpop.permute.xlu0 %570
        %v573 = vunpack.c.l.b16 %v443
        %v574 = vpack.c.b16 %v461, %v573
        %vm575 = vcmask 1046528
        %v576 = vrot.slane %v574, 1
        %v577 = vrot.slane %v477, 1
        %v578 = vsel %vm575, %v576, %v577
        %v579 = vrot.slane %v478, 1
        %v580 = vsel %vm575, %v577, %v579
        %v581 = vrot.slane %v479, 1
        %v582 = vsel %vm575, %v579, %v581
        %v583 = vrot.slane %v480, 1
        %v584 = vsel %vm575, %v581, %v583
        %v585 = vrot.slane %v481, 1
        %v586 = vsel %vm575, %v583, %v585
        %v587 = vrot.slane %v482, 1
        %v588 = vsel %vm575, %v585, %v587
        %v589 = vrot.slane %v483, 1
        %v590 = vsel %vm575, %v587, %v589
        %v591 = vrot.slane %v486, 1
        %v592 = vsel %vm575, %v589, %v591
        %593 = vrot.lane.b32.xlu0 %v578, 16
        %v594 = vpop.permute.xlu0 %593
        %595 = vrot.lane.b32.xlu0 %v580, 16
        %v596 = vpop.permute.xlu0 %595
        %597 = vrot.lane.b32.xlu0 %v582, 16
        %v598 = vpop.permute.xlu0 %597
        %599 = vrot.lane.b32.xlu0 %v584, 16
        %v600 = vpop.permute.xlu0 %599
        %601 = vrot.lane.b32.xlu0 %v586, 16
        %v602 = vpop.permute.xlu0 %601
        %603 = vrot.lane.b32.xlu0 %v588, 16
        %v604 = vpop.permute.xlu0 %603
        %605 = vrot.lane.b32.xlu0 %v590, 16
        %v606 = vpop.permute.xlu0 %605
        %607 = vrot.lane.b32.xlu0 %v592, 16
        %v608 = vpop.permute.xlu0 %607
        %vm609 = vcmask 64512
        %v611 = vsel %vm609, %v476, %v557
        %v613 = vsel %vm609, %v477, %v559
        %v615 = vsel %vm609, %v478, %v561
        %v617 = vsel %vm609, %v479, %v563
        %v619 = vsel %vm609, %v480, %v565
        %v621 = vsel %vm609, %v481, %v567
        %v623 = vsel %vm609, %v482, %v569
        %v625 = vsel %vm609, %v483, %v571
        %vm626 = vcmask 130048
        %v628 = vsel %vm626, %v611, %v594
        %v630 = vsel %vm626, %v613, %v596
        %v632 = vsel %vm626, %v615, %v598
        %v634 = vsel %vm626, %v617, %v600
        %v636 = vsel %vm626, %v619, %v602
        %v638 = vsel %vm626, %v621, %v604
        %v640 = vsel %vm626, %v623, %v606
        %v642 = vsel %vm626, %v625, %v608
        %v643 = vld [vmem:[%s1] sm:$0xf]
        %v644 = vld [vmem:[%s1 + $0x4] sm:$0xf]
        %v645 = vld [vmem:[%s1 + $0x8] sm:$0xf]
        %v646 = vld [vmem:[%s2] sm:$0x1]
        %v648 = vlaneseq
        %v649 = vshrl.u32 %v648, 7
        %v650 = vsub.s32 0, %v649
        %v651 = vrot.slane %v646, %v650
        %v656 = vunpack.c.l.b16 %v643
        %v657 = vunpack.c.l.b16 %v644
        %v658 = vunpack.c.l.b16 %v645
        %v659 = vpack.c.b16 %v657, %v656
        %v660 = vpack.c.b16 %v658, %v658
        %vm662 = vcmask 195584
        %v663 = vsel %vm662, %v628, 0
        %v665 = vsel %vm662, %v630, 0
        %v667 = vsel %vm662, %v632, 0
        %v669 = vsel %vm662, %v634, 0
        %v671 = vsel %vm662, %v636, 0
        %v673 = vsel %vm662, %v638, 0
        %v675 = vsel %vm662, %v640, 0
        %v677 = vsel %vm662, %v642, 0
        %vm679 = vcmask 1043456
        %v681 = vsel %vm679, %v660, 0
        %683 = vmatprep.subr.bf16.mxu0 0
        %684 = vmatpush1.bf16.msra.mxu0 %v659
        %685 = vmatprep.subr.bf16.mxu0 0
        %686 = vmatpush1.bf16.msra.mxu0 %v681
        %687 = vmatprep.subr.bf16.mxu0 0
        %688 = vmatpush1.bf16.msra.mxu0 0
        %689 = vmatprep.subr.bf16.mxu0 0
        %690 = vmatpush1.bf16.msra.mxu0 0
        %691 = vmatprep.subr.bf16.mxu0 0
        %692 = vmatpush1.bf16.msra.mxu0 0
        %693 = vmatprep.subr.bf16.mxu0 0
        %694 = vmatpush1.bf16.msra.mxu0 0
        %695 = vmatprep.subr.bf16.mxu0 0
        %696 = vmatpush1.bf16.msra.mxu0 0
        %697 = vmatprep.subr.bf16.mxu0 0
        %698 = vmatpush1.bf16.msra.mxu0 0
        %699 = vmatprep.subr.bf16.mxu0 0
        %700 = vmatpush1.bf16.msra.mxu0 0
        %701 = vmatprep.subr.bf16.mxu0 0
        %702 = vmatpush1.bf16.msra.mxu0 0
        %703 = vmatprep.subr.bf16.mxu0 0
        %704 = vmatpush1.bf16.msra.mxu0 0
        %705 = vmatprep.subr.bf16.mxu0 0
        %706 = vmatpush1.bf16.msra.mxu0 0
        %707 = vmatprep.subr.bf16.mxu0 0
        %708 = vmatpush1.bf16.msra.mxu0 0
        %709 = vmatprep.subr.bf16.mxu0 0
        %710 = vmatpush1.bf16.msra.mxu0 0
        %711 = vmatprep.subr.bf16.mxu0 0
        %712 = vmatpush1.bf16.msra.mxu0 0
        %713 = vmatprep.subr.bf16.mxu0 0
        %714 = vmatpush1.bf16.msra.mxu0 0
        %715 = vmatprep.mubr.bf16.mxu0 0
        %716 = vmatmul.mubr.bf16.gmra.mrb[0].mxu0 %v663
        %v717 = vpop.f32.mrb[0].mxu0
        %v718 = vadd.f32 %v651, %v717
        %v719 = vpop.f32.mrb[0].mxu0
        %v720 = vpop.f32.mrb[0].mxu0
        %v721 = vadd.f32 %v651, %v720
        %v722 = vpop.f32.mrb[0].mxu0
        %723 = vmatprep.mubr.bf16.mxu0 0
        %724 = vmatmul.mubr.bf16.gmra.mrb[0].mxu0 %v665
        %v725 = vpop.f32.mrb[0].mxu0
        %v726 = vadd.f32 %v651, %v725
        %v727 = vpop.f32.mrb[0].mxu0
        %v728 = vpop.f32.mrb[0].mxu0
        %v729 = vadd.f32 %v651, %v728
        %v730 = vpop.f32.mrb[0].mxu0
        %731 = vmatprep.mubr.bf16.mxu0 0
        %732 = vmatmul.mubr.bf16.gmra.mrb[0].mxu0 %v667
        %v733 = vpop.f32.mrb[0].mxu0
        %v734 = vadd.f32 %v651, %v733
        %v735 = vpop.f32.mrb[0].mxu0
        %v736 = vpop.f32.mrb[0].mxu0
        %v737 = vadd.f32 %v651, %v736
        %v738 = vpop.f32.mrb[0].mxu0
        %739 = vmatprep.mubr.bf16.mxu0 0
        %740 = vmatmul.mubr.bf16.gmra.mrb[0].mxu0 %v669
        %v741 = vpop.f32.mrb[0].mxu0
        %v742 = vadd.f32 %v651, %v741
        %v743 = vpop.f32.mrb[0].mxu0
        %v744 = vpop.f32.mrb[0].mxu0
        %v745 = vadd.f32 %v651, %v744
        %v746 = vpop.f32.mrb[0].mxu0
        %747 = vmatprep.mubr.bf16.mxu0 0
        %748 = vmatmul.mubr.bf16.gmra.mrb[0].mxu0 %v671
        %v749 = vpop.f32.mrb[0].mxu0
        %v750 = vadd.f32 %v651, %v749
        %v751 = vpop.f32.mrb[0].mxu0
        %v752 = vpop.f32.mrb[0].mxu0
        %v753 = vadd.f32 %v651, %v752
        %v754 = vpop.f32.mrb[0].mxu0
        %755 = vmatprep.mubr.bf16.mxu0 0
        %756 = vmatmul.mubr.bf16.gmra.mrb[0].mxu0 %v673
        %v757 = vpop.f32.mrb[0].mxu0
        %v758 = vadd.f32 %v651, %v757
        %v759 = vpop.f32.mrb[0].mxu0
        %v760 = vpop.f32.mrb[0].mxu0
        %v761 = vadd.f32 %v651, %v760
        %v762 = vpop.f32.mrb[0].mxu0
        %763 = vmatprep.mubr.bf16.mxu0 0
        %764 = vmatmul.mubr.bf16.gmra.mrb[0].mxu0 %v675
        %v765 = vpop.f32.mrb[0].mxu0
        %v766 = vadd.f32 %v651, %v765
        %v767 = vpop.f32.mrb[0].mxu0
        %v768 = vpop.f32.mrb[0].mxu0
        %v769 = vadd.f32 %v651, %v768
        %v770 = vpop.f32.mrb[0].mxu0
        %771 = vmatprep.mubr.bf16.mxu0 0
        %772 = vmatmul.mubr.bf16.gmra.mrb[0].mxu0 %v677
        %v773 = vpop.f32.mrb[0].mxu0
        %v774 = vadd.f32 %v651, %v773
        %v775 = vpop.f32.mrb[0].mxu0
        %v776 = vpop.f32.mrb[0].mxu0
        %v777 = vadd.f32 %v651, %v776
        %v778 = vpop.f32.mrb[0].mxu0
        %779 = vdwg.mxu0
        %v780 = vmax.f32 %v718, 0.0
        %v781 = vmax.f32 %v721, 0.0
        %v782 = vmax.f32 %v726, 0.0
        %v783 = vmax.f32 %v729, 0.0
        %v784 = vmax.f32 %v734, 0.0
        %v785 = vmax.f32 %v737, 0.0
        %v786 = vmax.f32 %v742, 0.0
        %v787 = vmax.f32 %v745, 0.0
        %v788 = vmax.f32 %v750, 0.0
        %v789 = vmax.f32 %v753, 0.0
        %v790 = vmax.f32 %v758, 0.0
        %v791 = vmax.f32 %v761, 0.0
        %v792 = vmax.f32 %v766, 0.0
        %v793 = vmax.f32 %v769, 0.0
        %v794 = vmax.f32 %v774, 0.0
        %v795 = vmax.f32 %v777, 0.0
        %796 = vst [vmem:[#allocation3] sm:$0x1] 0
        %v797 = vpack.c.bf16 %v781, %v780
        %v798 = vpack.c.bf16 %v783, %v782
        %v799 = vpack.c.bf16 %v785, %v784
        %v800 = vpack.c.bf16 %v787, %v786
        %v801 = vpack.c.bf16 %v789, %v788
        %v802 = vpack.c.bf16 %v791, %v790
        %v803 = vpack.c.bf16 %v793, %v792
        %v804 = vpack.c.bf16 %v795, %v794
        %v813 = vunpack.c.l.b16 %v797
        %v814 = vunpack.c.h.b16 %v797
        %v815 = vunpack.c.l.b16 %v798
        %v816 = vunpack.c.h.b16 %v798
        %v817 = vunpack.c.l.b16 %v799
        %v818 = vunpack.c.h.b16 %v799
        %v819 = vunpack.c.l.b16 %v800
        %v820 = vunpack.c.h.b16 %v800
        %v821 = vunpack.c.l.b16 %v801
        %v822 = vunpack.c.h.b16 %v801
        %v823 = vunpack.c.l.b16 %v802
        %v824 = vunpack.c.h.b16 %v802
        %v825 = vunpack.c.l.b16 %v803
        %v826 = vunpack.c.h.b16 %v803
        %v827 = vunpack.c.l.b16 %v804
        %v828 = vunpack.c.h.b16 %v804
        %v829 = vpack.c.b16 %v813, %v813
        %v830 = vpack.c.b16 %v814, %v814
        %v831 = vpack.c.b16 %v815, %v815
        %v832 = vpack.c.b16 %v816, %v816
        %v833 = vpack.c.b16 %v817, %v817
        %v834 = vpack.c.b16 %v818, %v818
        %v835 = vpack.c.b16 %v819, %v819
        %v836 = vpack.c.b16 %v820, %v820
        %v837 = vpack.c.b16 %v821, %v821
        %v838 = vpack.c.b16 %v822, %v822
        %v839 = vpack.c.b16 %v823, %v823
        %v840 = vpack.c.b16 %v824, %v824
        %v841 = vpack.c.b16 %v825, %v825
        %v842 = vpack.c.b16 %v826, %v826
        %v843 = vpack.c.b16 %v827, %v827
        %v844 = vpack.c.b16 %v828, %v828
        %v845 = vrot.slane %v829, 7
        %v846 = vrot.slane %v845, 4
        %v847 = vrot.slane %v830, 7
        %v848 = vsel %vm342, %v846, %v847
        %v849 = vrot.slane %v847, 4
        %v850 = vrot.slane %v831, 7
        %v851 = vsel %vm342, %v849, %v850
        %v852 = vrot.slane %v850, 4
        %v853 = vrot.slane %v832, 7
        %v854 = vsel %vm342, %v852, %v853
        %v855 = vrot.slane %v853, 4
        %v856 = vrot.slane %v833, 7
        %v857 = vsel %vm342, %v855, %v856
        %v858 = vrot.slane %v856, 4
        %v859 = vrot.slane %v834, 7
        %v860 = vsel %vm342, %v858, %v859
        %v861 = vrot.slane %v859, 4
        %v862 = vrot.slane %v835, 7
        %v863 = vsel %vm342, %v861, %v862
        %v864 = vrot.slane %v862, 4
        %v865 = vrot.slane %v836, 7
        %v866 = vsel %vm342, %v864, %v865
        %v867 = vrot.slane %v865, 4
        %v868 = vrot.slane %v837, 7
        %v869 = vsel %vm342, %v867, %v868
        %v870 = vrot.slane %v868, 4
        %v871 = vrot.slane %v838, 7
        %v872 = vsel %vm342, %v870, %v871
        %v873 = vrot.slane %v871, 4
        %v874 = vrot.slane %v839, 7
        %v875 = vsel %vm342, %v873, %v874
        %v876 = vrot.slane %v874, 4
        %v877 = vrot.slane %v840, 7
        %v878 = vsel %vm342, %v876, %v877
        %v879 = vrot.slane %v877, 4
        %v880 = vrot.slane %v841, 7
        %v881 = vsel %vm342, %v879, %v880
        %v882 = vrot.slane %v880, 4
        %v883 = vrot.slane %v842, 7
        %v884 = vsel %vm342, %v882, %v883
        %v885 = vrot.slane %v883, 4
        %v886 = vrot.slane %v843, 7
        %v887 = vsel %vm342, %v885, %v886
        %v888 = vrot.slane %v886, 4
        %v889 = vrot.slane %v844, 7
        %v890 = vsel %vm342, %v888, %v889
        %v891 = vrot.slane %v889, 4
        %909 = vst [vmem:[#allocation3] sm:$0xe] %v845
        %910 = vst [vmem:[#allocation3 + $0x4] sm:$0xf] %v848
        %911 = vst [vmem:[#allocation3 + $0x8] sm:$0xf] %v851
        %912 = vst [vmem:[#allocation3 + $0xc] sm:$0xf] %v854
        %913 = vst [vmem:[#allocation3 + $0x10] sm:$0xf] %v857
        %914 = vst [vmem:[#allocation3 + $0x14] sm:$0xf] %v860
        %915 = vst [vmem:[#allocation3 + $0x18] sm:$0xf] %v863
        %916 = vst [vmem:[#allocation3 + $0x1c] sm:$0xf] %v866
        %917 = vst [vmem:[#allocation3 + $0x20] sm:$0xf] %v869
        %918 = vst [vmem:[#allocation3 + $0x24] sm:$0xf] %v872
        %919 = vst [vmem:[#allocation3 + $0x28] sm:$0xf] %v875
        %920 = vst [vmem:[#allocation3 + $0x2c] sm:$0xf] %v878
        %921 = vst [vmem:[#allocation3 + $0x30] sm:$0xf] %v881
        %922 = vst [vmem:[#allocation3 + $0x34] sm:$0xf] %v884
        %923 = vst [vmem:[#allocation3 + $0x38] sm:$0xf] %v887
        %924 = vst [vmem:[#allocation3 + $0x3c] sm:$0xf] %v890
        %925 = vst [vmem:[#allocation3 + $0x40] sm:$0x1] %v891
        %v926 = vld [vmem:[#allocation3] sm:$0xf]
        %v927 = vld [vmem:[#allocation3 + $0x4] sm:$0xf]
        %v928 = vld [vmem:[#allocation3 + $0x8] sm:$0xf]
        %v929 = vld [vmem:[#allocation3 + $0xc] sm:$0xf]
        %v930 = vld [vmem:[#allocation3 + $0x10] sm:$0xf]
        %v931 = vld [vmem:[#allocation3 + $0x14] sm:$0xf]
        %v932 = vld [vmem:[#allocation3 + $0x18] sm:$0xf]
        %v933 = vld [vmem:[#allocation3 + $0x1c] sm:$0xf]
        %v934 = vld [vmem:[#allocation3 + $0x20] sm:$0xf]
        %v935 = vld [vmem:[#allocation3 + $0x24] sm:$0xf]
        %v936 = vld [vmem:[#allocation3 + $0x28] sm:$0xf]
        %v937 = vld [vmem:[#allocation3 + $0x2c] sm:$0xf]
        %v938 = vld [vmem:[#allocation3 + $0x30] sm:$0xf]
        %v939 = vld [vmem:[#allocation3 + $0x34] sm:$0xf]
        %v940 = vld [vmem:[#allocation3 + $0x38] sm:$0xf]
        %v941 = vld [vmem:[#allocation3 + $0x3c] sm:$0xf]
        %v942 = vld [vmem:[#allocation3 + $0x40] sm:$0x1]
        %v943 = vld [vmem:[#allocation3] sm:$0xe]
        %v960 = vunpack.c.l.b16 %v926
        %v961 = vunpack.c.l.b16 %v927
        %v962 = vunpack.c.l.b16 %v928
        %v963 = vunpack.c.l.b16 %v929
        %v964 = vunpack.c.l.b16 %v930
        %v965 = vunpack.c.l.b16 %v931
        %v966 = vunpack.c.l.b16 %v932
        %v967 = vunpack.c.l.b16 %v933
        %v968 = vunpack.c.l.b16 %v934
        %v969 = vunpack.c.l.b16 %v935
        %v970 = vunpack.c.l.b16 %v936
        %v971 = vunpack.c.l.b16 %v937
        %v972 = vunpack.c.l.b16 %v938
        %v973 = vunpack.c.l.b16 %v939
        %v974 = vunpack.c.l.b16 %v940
        %v975 = vunpack.c.l.b16 %v941
        %v976 = vpack.c.b16 %v961, %v960
        %v977 = vpack.c.b16 %v963, %v962
        %v978 = vpack.c.b16 %v965, %v964
        %v979 = vpack.c.b16 %v967, %v966
        %v980 = vpack.c.b16 %v969, %v968
        %v981 = vpack.c.b16 %v971, %v970
        %v982 = vpack.c.b16 %v973, %v972
        %v983 = vpack.c.b16 %v975, %v974
        %v993 = vunpack.c.l.b16 %v942
        %v994 = vpack.c.b16 %v993, %v993
        %v996 = vshrl.u32 %v976, 16
        %v998 = vshll.u32 %v976, 16
        %v1000 = vrot.slane %v998, 1
        %v1001 = vor.u32 %v996, %v1000
        %v1003 = vshll.u32 %v977, 16
        %v1005 = vrot.slane %v1003, 1
        %v1006 = vsel %vm487, %v1001, %v1005
        %v1007 = vshrl.u32 %v977, 16
        %v1009 = vor.u32 %v1007, %v1005
        %v1011 = vshll.u32 %v978, 16
        %v1013 = vrot.slane %v1011, 1
        %v1014 = vsel %vm487, %v1009, %v1013
        %v1015 = vshrl.u32 %v978, 16
        %v1017 = vor.u32 %v1015, %v1013
        %v1019 = vshll.u32 %v979, 16
        %v1021 = vrot.slane %v1019, 1
        %v1022 = vsel %vm487, %v1017, %v1021
        %v1023 = vshrl.u32 %v979, 16
        %v1025 = vor.u32 %v1023, %v1021
        %v1027 = vshll.u32 %v980, 16
        %v1029 = vrot.slane %v1027, 1
        %v1030 = vsel %vm487, %v1025, %v1029
        %v1031 = vshrl.u32 %v980, 16
        %v1033 = vor.u32 %v1031, %v1029
        %v1035 = vshll.u32 %v981, 16
        %v1037 = vrot.slane %v1035, 1
        %v1038 = vsel %vm487, %v1033, %v1037
        %v1039 = vshrl.u32 %v981, 16
        %v1041 = vor.u32 %v1039, %v1037
        %v1043 = vshll.u32 %v982, 16
        %v1045 = vrot.slane %v1043, 1
        %v1046 = vsel %vm487, %v1041, %v1045
        %v1047 = vshrl.u32 %v982, 16
        %v1049 = vor.u32 %v1047, %v1045
        %v1051 = vshll.u32 %v983, 16
        %v1053 = vrot.slane %v1051, 1
        %v1054 = vsel %vm487, %v1049, %v1053
        %v1055 = vshrl.u32 %v983, 16
        %v1057 = vor.u32 %v1055, %v1053
        %v1059 = vshll.u32 %v994, 16
        %v1061 = vrot.slane %v1059, 1
        %v1062 = vsel %vm487, %v1057, %v1061
        %v1072 = vunpack.c.l.b16 %v943
        %v1073 = vpack.c.b16 %v961, %v1072
        %v1074 = vrot.slane %v1073, 1
        %v1075 = vrot.slane %v977, 1
        %v1076 = vsel %vm575, %v1074, %v1075
        %v1077 = vrot.slane %v978, 1
        %v1078 = vsel %vm575, %v1075, %v1077
        %v1079 = vrot.slane %v979, 1
        %v1080 = vsel %vm575, %v1077, %v1079
        %v1081 = vrot.slane %v980, 1
        %v1082 = vsel %vm575, %v1079, %v1081
        %v1083 = vrot.slane %v981, 1
        %v1084 = vsel %vm575, %v1081, %v1083
        %v1085 = vrot.slane %v982, 1
        %v1086 = vsel %vm575, %v1083, %v1085
        %v1087 = vrot.slane %v983, 1
        %v1088 = vsel %vm575, %v1085, %v1087
        %v1089 = vrot.slane %v994, 1
        %v1090 = vsel %vm575, %v1087, %v1089
        %v1099 = vld [vmem:[%s3] sm:$0xf]
        %v1100 = vld [vmem:[%s3 + $0x4] sm:$0xf]
        %v1101 = vld [vmem:[%s3 + $0x8] sm:$0xf]
        %v1102 = vld [vmem:[%s3 + $0xc] sm:$0xf]
        %v1103 = vld [vmem:[%s3 + $0x10] sm:$0xf]
        %v1104 = vld [vmem:[%s3 + $0x14] sm:$0xf]
        %v1105 = vld [vmem:[%s3 + $0x18] sm:$0xf]
        %v1106 = vld [vmem:[%s3 + $0x1c] sm:$0xf]
        %v1107 = vld [vmem:[%s3 + $0x20] sm:$0xf]
        %v1108 = vld [vmem:[%s3 + $0x24] sm:$0xf]
        %v1109 = vld [vmem:[%s3 + $0x28] sm:$0xf]
        %v1110 = vld [vmem:[%s3 + $0x2c] sm:$0xf]
        %v1111 = vld [vmem:[%s3 + $0x30] sm:$0xf]
        %v1112 = vld [vmem:[%s3 + $0x34] sm:$0xf]
        %v1113 = vld [vmem:[%s3 + $0x38] sm:$0xf]
        %v1114 = vld [vmem:[%s3 + $0x3c] sm:$0xf]
        %v1115 = vld [vmem:[%s3 + $0x40] sm:$0xf]
        %v1116 = vld [vmem:[%s3 + $0x44] sm:$0xf]
        %v1117 = vld [vmem:[%s3 + $0x48] sm:$0xf]
        %v1118 = vld [vmem:[%s3 + $0x4c] sm:$0xf]
        %v1119 = vld [vmem:[%s3 + $0x50] sm:$0xf]
        %v1120 = vld [vmem:[%s3 + $0x54] sm:$0xf]
        %v1121 = vld [vmem:[%s3 + $0x58] sm:$0xf]
        %v1122 = vld [vmem:[%s3 + $0x5c] sm:$0xf]
        %v1123 = vld [vmem:[%s3 + $0x60] sm:$0xf]
        %v1124 = vld [vmem:[%s3 + $0x64] sm:$0xf]
        %v1125 = vld [vmem:[%s3 + $0x68] sm:$0xf]
        %v1126 = vld [vmem:[%s3 + $0x6c] sm:$0xf]
        %v1127 = vld [vmem:[%s3 + $0x70] sm:$0xf]
        %v1128 = vld [vmem:[%s3 + $0x74] sm:$0xf]
        %v1129 = vld [vmem:[%s3 + $0x78] sm:$0xf]
        %v1130 = vld [vmem:[%s3 + $0x7c] sm:$0xf]
        %v1131 = vld [vmem:[%s3 + $0x80] sm:$0xf]
        %v1132 = vld [vmem:[%s3 + $0x84] sm:$0xf]
        %v1133 = vld [vmem:[%s3 + $0x88] sm:$0xf]
        %v1134 = vld [vmem:[%s3 + $0x8c] sm:$0xf]
        %v1135 = vld [vmem:[%s3 + $0x90] sm:$0xf]
        %v1136 = vld [vmem:[%s3 + $0x94] sm:$0xf]
        %v1137 = vld [vmem:[%s3 + $0x98] sm:$0xf]
        %v1138 = vld [vmem:[%s3 + $0x9c] sm:$0xf]
        %v1139 = vld [vmem:[%s3 + $0xa0] sm:$0xf]
        %v1140 = vld [vmem:[%s3 + $0xa4] sm:$0xf]
        %v1141 = vld [vmem:[%s3 + $0xa8] sm:$0xf]
        %v1142 = vld [vmem:[%s3 + $0xac] sm:$0xf]
        %v1143 = vld [vmem:[%s3 + $0xb0] sm:$0xf]
        %v1144 = vld [vmem:[%s3 + $0xb4] sm:$0xf]
        %v1145 = vld [vmem:[%s3 + $0xb8] sm:$0xf]
        %v1146 = vld [vmem:[%s3 + $0xbc] sm:$0xf]
        %v1147 = vld [vmem:[#allocation4] sm:$0x1]
        %v1149 = vlaneseq
        %v1150 = vshrl.u32 %v1149, 7
        %v1151 = vsub.s32 0, %v1150
        %v1152 = vrot.slane %v1147, %v1151
        %v1202 = vunpack.c.l.b16 %v1099
        %v1203 = vunpack.c.l.b16 %v1100
        %v1204 = vunpack.c.l.b16 %v1101
        %v1205 = vunpack.c.l.b16 %v1102
        %v1206 = vunpack.c.l.b16 %v1103
        %v1207 = vunpack.c.l.b16 %v1104
        %v1208 = vunpack.c.l.b16 %v1105
        %v1209 = vunpack.c.l.b16 %v1106
        %v1210 = vunpack.c.l.b16 %v1107
        %v1211 = vunpack.c.l.b16 %v1108
        %v1212 = vunpack.c.l.b16 %v1109
        %v1213 = vunpack.c.l.b16 %v1110
        %v1214 = vunpack.c.l.b16 %v1111
        %v1215 = vunpack.c.l.b16 %v1112
        %v1216 = vunpack.c.l.b16 %v1113
        %v1217 = vunpack.c.l.b16 %v1114
        %v1218 = vunpack.c.l.b16 %v1115
        %v1219 = vunpack.c.l.b16 %v1116
        %v1220 = vunpack.c.l.b16 %v1117
        %v1221 = vunpack.c.l.b16 %v1118
        %v1222 = vunpack.c.l.b16 %v1119
        %v1223 = vunpack.c.l.b16 %v1120
        %v1224 = vunpack.c.l.b16 %v1121
        %v1225 = vunpack.c.l.b16 %v1122
        %v1226 = vunpack.c.l.b16 %v1123
        %v1227 = vunpack.c.l.b16 %v1124
        %v1228 = vunpack.c.l.b16 %v1125
        %v1229 = vunpack.c.l.b16 %v1126
        %v1230 = vunpack.c.l.b16 %v1127
        %v1231 = vunpack.c.l.b16 %v1128
        %v1232 = vunpack.c.l.b16 %v1129
        %v1233 = vunpack.c.l.b16 %v1130
        %v1234 = vunpack.c.l.b16 %v1131
        %v1235 = vunpack.c.l.b16 %v1132
        %v1236 = vunpack.c.l.b16 %v1133
        %v1237 = vunpack.c.l.b16 %v1134
        %v1238 = vunpack.c.l.b16 %v1135
        %v1239 = vunpack.c.l.b16 %v1136
        %v1240 = vunpack.c.l.b16 %v1137
        %v1241 = vunpack.c.l.b16 %v1138
        %v1242 = vunpack.c.l.b16 %v1139
        %v1243 = vunpack.c.l.b16 %v1140
        %v1244 = vunpack.c.l.b16 %v1141
        %v1245 = vunpack.c.l.b16 %v1142
        %v1246 = vunpack.c.l.b16 %v1143
        %v1247 = vunpack.c.l.b16 %v1144
        %v1248 = vunpack.c.l.b16 %v1145
        %v1249 = vunpack.c.l.b16 %v1146
        %v1250 = vpack.c.b16 %v1203, %v1202
        %v1251 = vpack.c.b16 %v1205, %v1204
        %v1252 = vpack.c.b16 %v1207, %v1206
        %v1253 = vpack.c.b16 %v1209, %v1208
        %v1254 = vpack.c.b16 %v1211, %v1210
        %v1255 = vpack.c.b16 %v1213, %v1212
        %v1256 = vpack.c.b16 %v1215, %v1214
        %v1257 = vpack.c.b16 %v1217, %v1216
        %v1258 = vpack.c.b16 %v1219, %v1218
        %v1259 = vpack.c.b16 %v1221, %v1220
        %v1260 = vpack.c.b16 %v1223, %v1222
        %v1261 = vpack.c.b16 %v1225, %v1224
        %v1262 = vpack.c.b16 %v1227, %v1226
        %v1263 = vpack.c.b16 %v1229, %v1228
        %v1264 = vpack.c.b16 %v1231, %v1230
        %v1265 = vpack.c.b16 %v1233, %v1232
        %v1266 = vpack.c.b16 %v1235, %v1234
        %v1267 = vpack.c.b16 %v1237, %v1236
        %v1268 = vpack.c.b16 %v1239, %v1238
        %v1269 = vpack.c.b16 %v1241, %v1240
        %v1270 = vpack.c.b16 %v1243, %v1242
        %v1271 = vpack.c.b16 %v1245, %v1244
        %v1272 = vpack.c.b16 %v1247, %v1246
        %v1273 = vpack.c.b16 %v1249, %v1248
        %1298 = vmatprep.subr.bf16.mxu0 0
        %1299 = vmatpush1.bf16.msra.mxu0 %v1250
        %1300 = vmatprep.subr.bf16.mxu0 0
        %1301 = vmatpush1.bf16.msra.mxu0 %v1251
        %1302 = vmatprep.subr.bf16.mxu0 0
        %1303 = vmatpush1.bf16.msra.mxu0 %v1252
        %1304 = vmatprep.subr.bf16.mxu0 0
        %1305 = vmatpush1.bf16.msra.mxu0 %v1253
        %1306 = vmatprep.subr.bf16.mxu0 0
        %1307 = vmatpush1.bf16.msra.mxu0 %v1254
        %1308 = vmatprep.subr.bf16.mxu0 0
        %1309 = vmatpush1.bf16.msra.mxu0 %v1255
        %1310 = vmatprep.subr.bf16.mxu0 0
        %1311 = vmatpush1.bf16.msra.mxu0 %v1256
        %1312 = vmatprep.subr.bf16.mxu0 0
        %1313 = vmatpush1.bf16.msra.mxu0 %v1257
        %1314 = vmatprep.subr.bf16.mxu0 0
        %1315 = vmatpush1.bf16.msra.mxu0 %v1258
        %1316 = vmatprep.subr.bf16.mxu0 0
        %1317 = vmatpush1.bf16.msra.mxu0 %v1259
        %1318 = vmatprep.subr.bf16.mxu0 0
        %1319 = vmatpush1.bf16.msra.mxu0 %v1260
        %1320 = vmatprep.subr.bf16.mxu0 0
        %1321 = vmatpush1.bf16.msra.mxu0 %v1261
        %1322 = vmatprep.subr.bf16.mxu0 0
        %1323 = vmatpush1.bf16.msra.mxu0 %v1262
        %1324 = vmatprep.subr.bf16.mxu0 0
        %1325 = vmatpush1.bf16.msra.mxu0 %v1263
        %1326 = vmatprep.subr.bf16.mxu0 0
        %1327 = vmatpush1.bf16.msra.mxu0 %v1264
        %1328 = vmatprep.subr.bf16.mxu0 0
        %1329 = vmatpush1.bf16.msra.mxu0 %v1265
        %1330 = vmatprep.mubr.bf16.mxu0 %v1006
        %1331 = vmatmul.mubr.bf16.gmra.mrb[0].mxu0 %v976
        %v1332 = vpop.f32.mrb[0].mxu0
        %v1333 = vadd.f32 %v1152, %v1332
        %v1334 = vpop.f32.mrb[0].mxu0
        %v1335 = vpop.f32.mrb[0].mxu0
        %v1336 = vadd.f32 %v1152, %v1335
        %v1337 = vpop.f32.mrb[0].mxu0
        %1338 = vmatprep.mubr.bf16.mxu0 %v1014
        %1339 = vmatmul.mubr.bf16.gmra.mrb[0].mxu0 %v977
        %v1340 = vpop.f32.mrb[0].mxu0
        %v1341 = vadd.f32 %v1152, %v1340
        %v1342 = vpop.f32.mrb[0].mxu0
        %v1343 = vpop.f32.mrb[0].mxu0
        %v1344 = vadd.f32 %v1152, %v1343
        %v1345 = vpop.f32.mrb[0].mxu0
        %1346 = vmatprep.mubr.bf16.mxu0 %v1022
        %1347 = vmatmul.mubr.bf16.gmra.mrb[0].mxu0 %v978
        %v1348 = vpop.f32.mrb[0].mxu0
        %v1349 = vadd.f32 %v1152, %v1348
        %v1350 = vpop.f32.mrb[0].mxu0
        %v1351 = vpop.f32.mrb[0].mxu0
        %v1352 = vadd.f32 %v1152, %v1351
        %v1353 = vpop.f32.mrb[0].mxu0
        %1354 = vmatprep.mubr.bf16.mxu0 %v1030
        %1355 = vmatmul.mubr.bf16.gmra.mrb[0].mxu0 %v979
        %v1356 = vpop.f32.mrb[0].mxu0
        %v1357 = vadd.f32 %v1152, %v1356
        %v1358 = vpop.f32.mrb[0].mxu0
        %v1359 = vpop.f32.mrb[0].mxu0
        %v1360 = vadd.f32 %v1152, %v1359
        %v1361 = vpop.f32.mrb[0].mxu0
        %1362 = vmatprep.mubr.bf16.mxu0 %v1038
        %1363 = vmatmul.mubr.bf16.gmra.mrb[0].mxu0 %v980
        %v1364 = vpop.f32.mrb[0].mxu0
        %v1365 = vadd.f32 %v1152, %v1364
        %v1366 = vpop.f32.mrb[0].mxu0
        %v1367 = vpop.f32.mrb[0].mxu0
        %v1368 = vadd.f32 %v1152, %v1367
        %v1369 = vpop.f32.mrb[0].mxu0
        %1370 = vmatprep.mubr.bf16.mxu0 %v1046
        %1371 = vmatmul.mubr.bf16.gmra.mrb[0].mxu0 %v981
        %v1372 = vpop.f32.mrb[0].mxu0
        %v1373 = vadd.f32 %v1152, %v1372
        %v1374 = vpop.f32.mrb[0].mxu0
        %v1375 = vpop.f32.mrb[0].mxu0
        %v1376 = vadd.f32 %v1152, %v1375
        %v1377 = vpop.f32.mrb[0].mxu0
        %1378 = vmatprep.mubr.bf16.mxu0 %v1054
        %1379 = vmatmul.mubr.bf16.gmra.mrb[0].mxu0 %v982
        %v1380 = vpop.f32.mrb[0].mxu0
        %v1381 = vadd.f32 %v1152, %v1380
        %v1382 = vpop.f32.mrb[0].mxu0
        %v1383 = vpop.f32.mrb[0].mxu0
        %v1384 = vadd.f32 %v1152, %v1383
        %v1385 = vpop.f32.mrb[0].mxu0
        %1386 = vmatprep.mubr.bf16.mxu0 %v1062
        %1387 = vmatmul.mubr.bf16.gmra.mrb[0].mxu0 %v983
        %v1388 = vpop.f32.mrb[0].mxu0
        %v1389 = vadd.f32 %v1152, %v1388
        %v1390 = vpop.f32.mrb[0].mxu0
        %v1391 = vpop.f32.mrb[0].mxu0
        %v1392 = vadd.f32 %v1152, %v1391
        %v1393 = vpop.f32.mrb[0].mxu0
        %1394 = vdwg.mxu0
        %1395 = vmatprep.subr.bf16.mxu0 0
        %1396 = vmatpush1.bf16.msra.mxu0 %v1266
        %1397 = vmatprep.subr.bf16.mxu0 0
        %1398 = vmatpush1.bf16.msra.mxu0 %v1267
        %1399 = vmatprep.subr.bf16.mxu0 0
        %1400 = vmatpush1.bf16.msra.mxu0 %v1268
        %1401 = vmatprep.subr.bf16.mxu0 0
        %1402 = vmatpush1.bf16.msra.mxu0 %v1269
        %1403 = vmatprep.subr.bf16.mxu0 0
        %1404 = vmatpush1.bf16.msra.mxu0 %v1270
        %1405 = vmatprep.subr.bf16.mxu0 0
        %1406 = vmatpush1.bf16.msra.mxu0 %v1271
        %1407 = vmatprep.subr.bf16.mxu0 0
        %1408 = vmatpush1.bf16.msra.mxu0 %v1272
        %1409 = vmatprep.subr.bf16.mxu0 0
        %1410 = vmatpush1.bf16.msra.mxu0 %v1273
        %1411 = vmatprep.subr.bf16.mxu0 0
        %1412 = vmatpush1.bf16.msra.mxu0 0
        %1413 = vmatprep.subr.bf16.mxu0 0
        %1414 = vmatpush1.bf16.msra.mxu0 0
        %1415 = vmatprep.subr.bf16.mxu0 0
        %1416 = vmatpush1.bf16.msra.mxu0 0
        %1417 = vmatprep.subr.bf16.mxu0 0
        %1418 = vmatpush1.bf16.msra.mxu0 0
        %1419 = vmatprep.subr.bf16.mxu0 0
        %1420 = vmatpush1.bf16.msra.mxu0 0
        %1421 = vmatprep.subr.bf16.mxu0 0
        %1422 = vmatpush1.bf16.msra.mxu0 0
        %1423 = vmatprep.subr.bf16.mxu0 0
        %1424 = vmatpush1.bf16.msra.mxu0 0
        %1425 = vmatprep.subr.bf16.mxu0 0
        %1426 = vmatpush1.bf16.msra.mxu0 0
        %1427 = vmatprep.mubr.bf16.mxu0 0
        %1428 = vmatmul.mubr.bf16.gmra.mrb[0].mxu0 %v1076
        %v1429 = vpop.f32.mrb[0].mxu0
        %v1430 = vadd.f32 %v1333, %v1429
        %v1431 = vpop.f32.mrb[0].mxu0
        %v1432 = vpop.f32.mrb[0].mxu0
        %v1433 = vadd.f32 %v1336, %v1432
        %v1434 = vpop.f32.mrb[0].mxu0
        %1435 = vmatprep.mubr.bf16.mxu0 0
        %1436 = vmatmul.mubr.bf16.gmra.mrb[0].mxu0 %v1078
        %v1437 = vpop.f32.mrb[0].mxu0
        %v1438 = vadd.f32 %v1341, %v1437
        %v1439 = vpop.f32.mrb[0].mxu0
        %v1440 = vpop.f32.mrb[0].mxu0
        %v1441 = vadd.f32 %v1344, %v1440
        %v1442 = vpop.f32.mrb[0].mxu0
        %1443 = vmatprep.mubr.bf16.mxu0 0
        %1444 = vmatmul.mubr.bf16.gmra.mrb[0].mxu0 %v1080
        %v1445 = vpop.f32.mrb[0].mxu0
        %v1446 = vadd.f32 %v1349, %v1445
        %v1447 = vpop.f32.mrb[0].mxu0
        %v1448 = vpop.f32.mrb[0].mxu0
        %v1449 = vadd.f32 %v1352, %v1448
        %v1450 = vpop.f32.mrb[0].mxu0
        %1451 = vmatprep.mubr.bf16.mxu0 0
        %1452 = vmatmul.mubr.bf16.gmra.mrb[0].mxu0 %v1082
        %v1453 = vpop.f32.mrb[0].mxu0
        %v1454 = vadd.f32 %v1357, %v1453
        %v1455 = vpop.f32.mrb[0].mxu0
        %v1456 = vpop.f32.mrb[0].mxu0
        %v1457 = vadd.f32 %v1360, %v1456
        %v1458 = vpop.f32.mrb[0].mxu0
        %1459 = vmatprep.mubr.bf16.mxu0 0
        %1460 = vmatmul.mubr.bf16.gmra.mrb[0].mxu0 %v1084
        %v1461 = vpop.f32.mrb[0].mxu0
        %v1462 = vadd.f32 %v1365, %v1461
        %v1463 = vpop.f32.mrb[0].mxu0
        %v1464 = vpop.f32.mrb[0].mxu0
        %v1465 = vadd.f32 %v1368, %v1464
        %v1466 = vpop.f32.mrb[0].mxu0
        %1467 = vmatprep.mubr.bf16.mxu0 0
        %1468 = vmatmul.mubr.bf16.gmra.mrb[0].mxu0 %v1086
        %v1469 = vpop.f32.mrb[0].mxu0
        %v1470 = vadd.f32 %v1373, %v1469
        %v1471 = vpop.f32.mrb[0].mxu0
        %v1472 = vpop.f32.mrb[0].mxu0
        %v1473 = vadd.f32 %v1376, %v1472
        %v1474 = vpop.f32.mrb[0].mxu0
        %1475 = vmatprep.mubr.bf16.mxu0 0
        %1476 = vmatmul.mubr.bf16.gmra.mrb[0].mxu0 %v1088
        %v1477 = vpop.f32.mrb[0].mxu0
        %v1478 = vadd.f32 %v1381, %v1477
        %v1479 = vpop.f32.mrb[0].mxu0
        %v1480 = vpop.f32.mrb[0].mxu0
        %v1481 = vadd.f32 %v1384, %v1480
        %v1482 = vpop.f32.mrb[0].mxu0
        %1483 = vmatprep.mubr.bf16.mxu0 0
        %1484 = vmatmul.mubr.bf16.gmra.mrb[0].mxu0 %v1090
        %v1485 = vpop.f32.mrb[0].mxu0
        %v1486 = vadd.f32 %v1389, %v1485
        %v1487 = vpop.f32.mrb[0].mxu0
        %v1488 = vpop.f32.mrb[0].mxu0
        %v1489 = vadd.f32 %v1392, %v1488
        %v1490 = vpop.f32.mrb[0].mxu0
        %1491 = vdwg.mxu0
        %v1492 = vmax.f32 %v1430, 0.0
        %v1493 = vmax.f32 %v1433, 0.0
        %v1494 = vmax.f32 %v1438, 0.0
        %v1495 = vmax.f32 %v1441, 0.0
        %v1496 = vmax.f32 %v1446, 0.0
        %v1497 = vmax.f32 %v1449, 0.0
        %v1498 = vmax.f32 %v1454, 0.0
        %v1499 = vmax.f32 %v1457, 0.0
        %v1500 = vmax.f32 %v1462, 0.0
        %v1501 = vmax.f32 %v1465, 0.0
        %v1502 = vmax.f32 %v1470, 0.0
        %v1503 = vmax.f32 %v1473, 0.0
        %v1504 = vmax.f32 %v1478, 0.0
        %v1505 = vmax.f32 %v1481, 0.0
        %v1506 = vmax.f32 %v1486, 0.0
        %v1507 = vmax.f32 %v1489, 0.0
        %v1508 = vld [vmem:[%s299] sm:$0xf]
        %v1509 = vld [vmem:[%s299 + $0x4] sm:$0xf]
        %v1510 = vld [vmem:[%s299 + $0x8] sm:$0xf]
        %v1511 = vld [vmem:[%s299 + $0xc] sm:$0xf]
        %v1512 = vld [vmem:[%s299 + $0x10] sm:$0xf]
        %v1513 = vld [vmem:[%s299 + $0x14] sm:$0xf]
        %v1514 = vld [vmem:[%s299 + $0x18] sm:$0xf]
        %v1515 = vld [vmem:[%s299 + $0x1c] sm:$0xf]
        %v1516 = vld [vmem:[%s299 + $0x20] sm:$0xf]
        %v1517 = vld [vmem:[%s299 + $0x24] sm:$0xf]
        %v1518 = vld [vmem:[%s299 + $0x28] sm:$0xf]
        %v1519 = vld [vmem:[%s299 + $0x2c] sm:$0xf]
        %v1520 = vld [vmem:[%s299 + $0x30] sm:$0xf]
        %v1521 = vld [vmem:[%s299 + $0x34] sm:$0xf]
        %v1522 = vld [vmem:[%s299 + $0x38] sm:$0xf]
        %v1523 = vld [vmem:[%s299 + $0x3c] sm:$0xf]
        %v1524 = vld [vmem:[%s5] sm:$0xf]
        %v1525 = vld [vmem:[#allocation6] sm:$0x1]
        %v1527 = vlaneseq
        %v1528 = vshrl.u32 %v1527, 7
        %v1529 = vsub.s32 0, %v1528
        %v1530 = vrot.slane %v1525, %v1529
        %v1548 = vunpack.c.l.b16 %v1508
        %v1549 = vunpack.c.l.b16 %v1509
        %v1550 = vunpack.c.l.b16 %v1510
        %v1551 = vunpack.c.l.b16 %v1511
        %v1552 = vunpack.c.l.b16 %v1512
        %v1553 = vunpack.c.l.b16 %v1513
        %v1554 = vunpack.c.l.b16 %v1514
        %v1555 = vunpack.c.l.b16 %v1515
        %v1556 = vunpack.c.l.b16 %v1516
        %v1557 = vunpack.c.l.b16 %v1517
        %v1558 = vunpack.c.l.b16 %v1518
        %v1559 = vunpack.c.l.b16 %v1519
        %v1560 = vunpack.c.l.b16 %v1520
        %v1561 = vunpack.c.l.b16 %v1521
        %v1562 = vunpack.c.l.b16 %v1522
        %v1563 = vunpack.c.l.b16 %v1523
        %v1564 = vpack.c.b16 %v1549, %v1548
        %v1565 = vpack.c.b16 %v1551, %v1550
        %v1566 = vpack.c.b16 %v1553, %v1552
        %v1567 = vpack.c.b16 %v1555, %v1554
        %v1568 = vpack.c.b16 %v1557, %v1556
        %v1569 = vpack.c.b16 %v1559, %v1558
        %v1570 = vpack.c.b16 %v1561, %v1560
        %v1571 = vpack.c.b16 %v1563, %v1562
        %v1573 = vsel %vm609, %v1564, 0
        %v1576 = vsel %vm609, %v1565, 0
        %v1579 = vsel %vm609, %v1566, 0
        %v1582 = vsel %vm609, %v1567, 0
        %v1585 = vsel %vm609, %v1568, 0
        %v1588 = vsel %vm609, %v1569, 0
        %v1591 = vsel %vm609, %v1570, 0
        %v1594 = vsel %vm609, %v1571, 0
        %v1597 = vsel %vm679, %v1524, 0
        %1599 = vmatprep.subr.bf16.mxu0 0
        %1600 = vmatpush1.bf16.msra.mxu0 %v1597
        %1601 = vmatprep.subr.bf16.mxu0 0
        %1602 = vmatpush1.bf16.msra.mxu0 0
        %1603 = vmatprep.subr.bf16.mxu0 0
        %1604 = vmatpush1.bf16.msra.mxu0 0
        %1605 = vmatprep.subr.bf16.mxu0 0
        %1606 = vmatpush1.bf16.msra.mxu0 0
        %1607 = vmatprep.subr.bf16.mxu0 0
        %1608 = vmatpush1.bf16.msra.mxu0 0
        %1609 = vmatprep.subr.bf16.mxu0 0
        %1610 = vmatpush1.bf16.msra.mxu0 0
        %1611 = vmatprep.subr.bf16.mxu0 0
        %1612 = vmatpush1.bf16.msra.mxu0 0
        %1613 = vmatprep.subr.bf16.mxu0 0
        %1614 = vmatpush1.bf16.msra.mxu0 0
        %1615 = vmatprep.subr.bf16.mxu0 0
        %1616 = vmatpush1.bf16.msra.mxu0 0
        %1617 = vmatprep.subr.bf16.mxu0 0
        %1618 = vmatpush1.bf16.msra.mxu0 0
        %1619 = vmatprep.subr.bf16.mxu0 0
        %1620 = vmatpush1.bf16.msra.mxu0 0
        %1621 = vmatprep.subr.bf16.mxu0 0
        %1622 = vmatpush1.bf16.msra.mxu0 0
        %1623 = vmatprep.subr.bf16.mxu0 0
        %1624 = vmatpush1.bf16.msra.mxu0 0
        %1625 = vmatprep.subr.bf16.mxu0 0
        %1626 = vmatpush1.bf16.msra.mxu0 0
        %1627 = vmatprep.subr.bf16.mxu0 0
        %1628 = vmatpush1.bf16.msra.mxu0 0
        %1629 = vmatprep.subr.bf16.mxu0 0
        %1630 = vmatpush1.bf16.msra.mxu0 0
        %1631 = vmatprep.mubr.bf16.mxu0 0
        %1632 = vmatmul.mubr.bf16.gmra.mrb[0].mxu0 %v1573
        %v1633 = vpop.f32.mrb[0].mxu0
        %v1634 = vadd.f32 %v1530, %v1633
        %v1635 = vpop.f32.mrb[0].mxu0
        %v1636 = vpop.f32.mrb[0].mxu0
        %v1637 = vadd.f32 %v1530, %v1636
        %v1638 = vpop.f32.mrb[0].mxu0
        %1639 = vmatprep.mubr.bf16.mxu0 0
        %1640 = vmatmul.mubr.bf16.gmra.mrb[0].mxu0 %v1576
        %v1641 = vpop.f32.mrb[0].mxu0
        %v1642 = vadd.f32 %v1530, %v1641
        %v1643 = vpop.f32.mrb[0].mxu0
        %v1644 = vpop.f32.mrb[0].mxu0
        %v1645 = vadd.f32 %v1530, %v1644
        %v1646 = vpop.f32.mrb[0].mxu0
        %1647 = vmatprep.mubr.bf16.mxu0 0
        %1648 = vmatmul.mubr.bf16.gmra.mrb[0].mxu0 %v1579
        %v1649 = vpop.f32.mrb[0].mxu0
        %v1650 = vadd.f32 %v1530, %v1649
        %v1651 = vpop.f32.mrb[0].mxu0
        %v1652 = vpop.f32.mrb[0].mxu0
        %v1653 = vadd.f32 %v1530, %v1652
        %v1654 = vpop.f32.mrb[0].mxu0
        %1655 = vmatprep.mubr.bf16.mxu0 0
        %1656 = vmatmul.mubr.bf16.gmra.mrb[0].mxu0 %v1582
        %v1657 = vpop.f32.mrb[0].mxu0
        %v1658 = vadd.f32 %v1530, %v1657
        %v1659 = vpop.f32.mrb[0].mxu0
        %v1660 = vpop.f32.mrb[0].mxu0
        %v1661 = vadd.f32 %v1530, %v1660
        %v1662 = vpop.f32.mrb[0].mxu0
        %1663 = vmatprep.mubr.bf16.mxu0 0
        %1664 = vmatmul.mubr.bf16.gmra.mrb[0].mxu0 %v1585
        %v1665 = vpop.f32.mrb[0].mxu0
        %v1666 = vadd.f32 %v1530, %v1665
        %v1667 = vpop.f32.mrb[0].mxu0
        %v1668 = vpop.f32.mrb[0].mxu0
        %v1669 = vadd.f32 %v1530, %v1668
        %v1670 = vpop.f32.mrb[0].mxu0
        %1671 = vmatprep.mubr.bf16.mxu0 0
        %1672 = vmatmul.mubr.bf16.gmra.mrb[0].mxu0 %v1588
        %v1673 = vpop.f32.mrb[0].mxu0
        %v1674 = vadd.f32 %v1530, %v1673
        %v1675 = vpop.f32.mrb[0].mxu0
        %v1676 = vpop.f32.mrb[0].mxu0
        %v1677 = vadd.f32 %v1530, %v1676
        %v1678 = vpop.f32.mrb[0].mxu0
        %1679 = vmatprep.mubr.bf16.mxu0 0
        %1680 = vmatmul.mubr.bf16.gmra.mrb[0].mxu0 %v1591
        %v1681 = vpop.f32.mrb[0].mxu0
        %v1682 = vadd.f32 %v1530, %v1681
        %v1683 = vpop.f32.mrb[0].mxu0
        %v1684 = vpop.f32.mrb[0].mxu0
        %v1685 = vadd.f32 %v1530, %v1684
        %v1686 = vpop.f32.mrb[0].mxu0
        %1687 = vmatprep.mubr.bf16.mxu0 0
        %1688 = vmatmul.mubr.bf16.gmra.mrb[0].mxu0 %v1594
        %v1689 = vpop.f32.mrb[0].mxu0
        %v1690 = vadd.f32 %v1530, %v1689
        %v1691 = vpop.f32.mrb[0].mxu0
        %v1692 = vpop.f32.mrb[0].mxu0
        %v1693 = vadd.f32 %v1530, %v1692
        %v1694 = vpop.f32.mrb[0].mxu0
        %1695 = vdwg.mxu0
        %v1696 = vadd.f32 %v1492, %v1634
        %v1697 = vadd.f32 %v1493, %v1637
        %v1698 = vadd.f32 %v1494, %v1642
        %v1699 = vadd.f32 %v1495, %v1645
        %v1700 = vadd.f32 %v1496, %v1650
        %v1701 = vadd.f32 %v1497, %v1653
        %v1702 = vadd.f32 %v1498, %v1658
        %v1703 = vadd.f32 %v1499, %v1661
        %v1704 = vadd.f32 %v1500, %v1666
        %v1705 = vadd.f32 %v1501, %v1669
        %v1706 = vadd.f32 %v1502, %v1674
        %v1707 = vadd.f32 %v1503, %v1677
        %v1708 = vadd.f32 %v1504, %v1682
        %v1709 = vadd.f32 %v1505, %v1685
        %v1710 = vadd.f32 %v1506, %v1690
        %v1711 = vadd.f32 %v1507, %v1693
        %v1712 = vmax.f32 %v1696, 0.0
        %v1713 = vmax.f32 %v1697, 0.0
        %v1714 = vmax.f32 %v1698, 0.0
        %v1715 = vmax.f32 %v1699, 0.0
        %v1716 = vmax.f32 %v1700, 0.0
        %v1717 = vmax.f32 %v1701, 0.0
        %v1718 = vmax.f32 %v1702, 0.0
        %v1719 = vmax.f32 %v1703, 0.0
        %v1720 = vmax.f32 %v1704, 0.0
        %v1721 = vmax.f32 %v1705, 0.0
        %v1722 = vmax.f32 %v1706, 0.0
        %v1723 = vmax.f32 %v1707, 0.0
        %v1724 = vmax.f32 %v1708, 0.0
        %v1725 = vmax.f32 %v1709, 0.0
        %v1726 = vmax.f32 %v1710, 0.0
        %v1727 = vmax.f32 %v1711, 0.0
        %v1728 = vpack.c.bf16 %v1713, %v1712
        %v1729 = vpack.c.bf16 %v1715, %v1714
        %v1730 = vpack.c.bf16 %v1717, %v1716
        %v1731 = vpack.c.bf16 %v1719, %v1718
        %v1732 = vpack.c.bf16 %v1721, %v1720
        %v1733 = vpack.c.bf16 %v1723, %v1722
        %v1734 = vpack.c.bf16 %v1725, %v1724
        %v1735 = vpack.c.bf16 %v1727, %v1726
        %v1744 = vunpack.c.l.b16 %v1728
        %v1745 = vunpack.c.h.b16 %v1728
        %v1746 = vunpack.c.l.b16 %v1729
        %v1747 = vunpack.c.h.b16 %v1729
        %v1748 = vunpack.c.l.b16 %v1730
        %v1749 = vunpack.c.h.b16 %v1730
        %v1750 = vunpack.c.l.b16 %v1731
        %v1751 = vunpack.c.h.b16 %v1731
        %v1752 = vunpack.c.l.b16 %v1732
        %v1753 = vunpack.c.h.b16 %v1732
        %v1754 = vunpack.c.l.b16 %v1733
        %v1755 = vunpack.c.h.b16 %v1733
        %v1756 = vunpack.c.l.b16 %v1734
        %v1757 = vunpack.c.h.b16 %v1734
        %v1758 = vunpack.c.l.b16 %v1735
        %v1759 = vunpack.c.h.b16 %v1735
        %v1760 = vpack.c.b16 %v1744, %v1744
        %v1761 = vpack.c.b16 %v1745, %v1745
        %v1762 = vpack.c.b16 %v1746, %v1746
        %v1763 = vpack.c.b16 %v1747, %v1747
        %v1764 = vpack.c.b16 %v1748, %v1748
        %v1765 = vpack.c.b16 %v1749, %v1749
        %v1766 = vpack.c.b16 %v1750, %v1750
        %v1767 = vpack.c.b16 %v1751, %v1751
        %v1768 = vpack.c.b16 %v1752, %v1752
        %v1769 = vpack.c.b16 %v1753, %v1753
        %v1770 = vpack.c.b16 %v1754, %v1754
        %v1771 = vpack.c.b16 %v1755, %v1755
        %v1772 = vpack.c.b16 %v1756, %v1756
        %v1773 = vpack.c.b16 %v1757, %v1757
        %v1774 = vpack.c.b16 %v1758, %v1758
        %v1775 = vpack.c.b16 %v1759, %v1759
        %1792 = vst [vmem:[%s304] sm:$0xf] %v1760
        %1793 = vst [vmem:[%s304 + $0x4] sm:$0xf] %v1761
        %1794 = vst [vmem:[%s304 + $0x8] sm:$0xf] %v1762
        %1795 = vst [vmem:[%s304 + $0xc] sm:$0xf] %v1763
        %1796 = vst [vmem:[%s304 + $0x10] sm:$0xf] %v1764
        %1797 = vst [vmem:[%s304 + $0x14] sm:$0xf] %v1765
        %1798 = vst [vmem:[%s304 + $0x18] sm:$0xf] %v1766
        %1799 = vst [vmem:[%s304 + $0x1c] sm:$0xf] %v1767
        %1800 = vst [vmem:[%s304 + $0x20] sm:$0xf] %v1768
        %1801 = vst [vmem:[%s304 + $0x24] sm:$0xf] %v1769
        %1802 = vst [vmem:[%s304 + $0x28] sm:$0xf] %v1770
        %1803 = vst [vmem:[%s304 + $0x2c] sm:$0xf] %v1771
        %1804 = vst [vmem:[%s304 + $0x30] sm:$0xf] %v1772
        %1805 = vst [vmem:[%s304 + $0x34] sm:$0xf] %v1773
        %1806 = vst [vmem:[%s304 + $0x38] sm:$0xf] %v1774
        %1807 = vst [vmem:[%s304 + $0x3c] sm:$0xf] %v1775
        %p1808 = scmp.lt.s32.totalorder %s20, 1
        %s1809 = scalar_select %p1808, %s20, 1
        %s1810 = smul.addr %s1809, 16
        %s1811 = smul.addr %s1810, 4
        %s1812 = scalar_lea.vmem %s7, %s1811
        // Predicated region
        $region57: #{tcn_forward.3} parent=47 // pred_check
          %p1813 = pneg %p190
        $region58: #{tcn_forward.3} parent=47 // pred_check_branch
          %1815 = sbr.rel (%p1813) target = $region60
        $region59: #{tcn_forward.3} parent=47 // pred_region
          _
        $region60: #{tcn_forward.3} parent=47 // pred_fallthru
          _
      $region48: #{tcn_forward.3} parent=5 // pred_fallthru
        _
      %p1816 = scmp.le.s32.totalorder 2, %s15
      // Predicated region
      $region61: #{tcn_forward.3} parent=5 // pred_check
        %p1817 = pneg %p1816
      $region62: #{tcn_forward.3} parent=5 // pred_check_branch
        %1819 = sbr.rel (%p1817) target = $region64
      $region63: #{tcn_forward.3} parent=5 // pred_region
        %s1820 = ssub.s32 %s15, 2
        // Predicated region
        $region65: #{tcn_forward.3} parent=63 // pred_check
          %p1821 = pneg %p196
        $region66: #{tcn_forward.3} parent=63 // pred_check_branch
          %1823 = sbr.rel (%p1821) target = $region68
        $region67: #{tcn_forward.3} parent=63 // pred_region
          %p1824 = scmp.lt.s32.totalorder %s21, 1
          %s1825 = scalar_select %p1824, %s21, 1
          %s1826 = smul.addr %s1825, 16
          %s1827 = smul.addr %s1826, 4
          %s1828 = scalar_lea.vmem %s7, %s1827
        $region68: #{tcn_forward.3} parent=63 // pred_fallthru
          _
      $region64: #{tcn_forward.3} parent=5 // pred_fallthru
        _
    $region6: #{tcn_forward.3} parent=1 // loop_footer
      %s19 = sadd.s32 1, %s15
    $region7: #{tcn_forward.3} parent=1 // loop_footer_branch
      %14 = sbr.rel target = $region3
    $region8: #{tcn_forward.3} parent=1 // loop_exit
      _
    %1829 = vsyncpa [#allocation5], 1
    %s1830 = scalar_lea.sflag [#allocation5], 1
    %1831 = vsyncpa %s1830, 1
    %1832 = vsyncpa [#allocation7], 1

// kernel: tcn_forward.4
$region0: #{tcn_forward.4}
  #allocation0 [shape = 'u32[]', space=smem, size = 0x4, offset = 0x4, fixed_abs, tag = 'smem constant byte address 0x4 - core index']
  #allocation1 [shape = 'u32[144,128]{1,0:T(1,128)}', space=vmem, size = 0x12000, scoped, tag = 'internal scratch']
  #allocation2 [shape = 'bf16[132,128]{1,0:T(8,128)(2,1)}', space=vmem, size = 0x8800, scoped, tag = 'scratch operand']
  #allocation3 [shape = 'bf16[132,128]{1,0:T(8,128)(2,1)}', space=vmem, size = 0x8800, scoped, tag = 'scratch operand']
  %s0 = inlined_call_operand.vmem [shape: bf16[2,128,128], index: 0, kind: input, shape index: {}]
  %s1 = inlined_call_operand.vmem [shape: bf16[384,128], index: 1, kind: input, shape index: {}]
  %s2 = inlined_call_operand.vmem [shape: f32[1,128], index: 2, kind: input, shape index: {}]
  %s3 = inlined_call_operand.vmem [shape: bf16[384,128], index: 3, kind: input, shape index: {}]
  %s4 = inlined_call_operand.vmem [shape: f32[1,128], index: 4, kind: input, shape index: {}]
  %s5 = inlined_call_operand.vmem [shape: bf16[2,128,128], index: 5, kind: output, shape index: {}]
  %s6 = sld [smem:[#allocation0]]
  $region53: #{tcn_forward.4} parent=0
    _
  %s8 = ssub.s32 1, %s6
  %s9 = scalar_select 0, %s8, %s6
  loop: start=0, step=1, limit=4
  $region2: #{tcn_forward.4} parent=0 // loop_pre_header
    _
  $region3: #{tcn_forward.4} parent=0 // loop_header
    %s11 = sphi 0, %s15
    %p12 = scmp.ge.s32.totalorder %s11, 4
    %s21 = sphi 0, %s23
    %s24 = sphi 0, %s21
    %s25 = sphi 0, %s24
    %s41 = sphi 0, %s25
    %s45 = sphi 0, %s45
    %s47 = sphi 0, %s45
    %s48 = sphi 0, %s47
    %s62 = sphi 0, %s48
    %s66 = sphi 0, %s66
    %s68 = sphi 0, %s66
    %s69 = sphi 0, %s68
    %s83 = sphi 0, %s69
    %s87 = sphi 0, %s87
    %s89 = sphi 0, %s87
    %s90 = sphi 0, %s89
    %s104 = sphi 0, %s90
    %s108 = sphi 0, %s108
    %s110 = sphi 0, %s108
    %s111 = sphi 0, %s110
    %s125 = sphi 0, %s111
    %s131 = sphi 0, %s133
    %s134 = sphi 0, %s131
    %s135 = sphi 0, %s134
    %s151 = sphi 0, %s135
  $region4: #{tcn_forward.4} parent=0 // loop_header_branch
    %14 = sbr.rel (%p12) target = $region8
  $region5: #{tcn_forward.4} parent=0 // loop_body
    %s16 = ssub.s32 %s11, 1
    %s17 = ssub.s32 %s11, 2
    %s18 = sadd.s32 %s11, 1
    %s19 = ssub.s32 %s11, %s18
    %p20 = scmp.eq.s32.totalorder %s19, 0
    %s22 = sadd.s32 %s21, 1
    %s23 = scalar_select %p20, %s21, %s22
    %p26 = pneg %p20
    %p27 = scmp.eq.s32.totalorder %s11, 1
    %p28 = por %p26, %p27
    %p29 = scmp.ne.s32.totalorder %s21, %s24
    %p30 = scmp.eq.s32.totalorder %s11, 0
    %p31 = por %p29, %p30
    %p32 = scmp.ne.s32.totalorder %s21, %s24
    %p33 = scmp.eq.s32.totalorder %s16, 1
    %p34 = por %p32, %p33
    %p35 = scmp.ne.s32.totalorder %s24, %s25
    %p36 = scmp.eq.s32.totalorder %s16, 0
    %p37 = por %p35, %p36
    %p38 = scmp.ne.s32.totalorder %s24, %s25
    %p39 = scmp.eq.s32.totalorder %s17, 1
    %p40 = por %p38, %p39
    %p42 = scmp.ne.s32.totalorder %s25, %s41
    %p43 = scmp.eq.s32.totalorder %s17, 0
    %p44 = por %p42, %p43
    %s46 = sadd.s32 %s45, 1
    %p49 = scmp.eq.s32.totalorder %s11, 1
    %p50 = scmp.ne.s32.totalorder %s45, %s47
    %p51 = scmp.eq.s32.totalorder %s11, 0
    %p52 = por %p50, %p51
    %p53 = scmp.ne.s32.totalorder %s45, %s47
    %p54 = scmp.eq.s32.totalorder %s16, 1
    %p55 = por %p53, %p54
    %p56 = scmp.ne.s32.totalorder %s47, %s48
    %p57 = scmp.eq.s32.totalorder %s16, 0
    %p58 = por %p56, %p57
    %p59 = scmp.ne.s32.totalorder %s47, %s48
    %p60 = scmp.eq.s32.totalorder %s17, 1
    %p61 = por %p59, %p60
    %p63 = scmp.ne.s32.totalorder %s48, %s62
    %p64 = scmp.eq.s32.totalorder %s17, 0
    %p65 = por %p63, %p64
    %s67 = sadd.s32 %s66, 1
    %p70 = scmp.eq.s32.totalorder %s11, 1
    %p71 = scmp.ne.s32.totalorder %s66, %s68
    %p72 = scmp.eq.s32.totalorder %s11, 0
    %p73 = por %p71, %p72
    %p74 = scmp.ne.s32.totalorder %s66, %s68
    %p75 = scmp.eq.s32.totalorder %s16, 1
    %p76 = por %p74, %p75
    %p77 = scmp.ne.s32.totalorder %s68, %s69
    %p78 = scmp.eq.s32.totalorder %s16, 0
    %p79 = por %p77, %p78
    %p80 = scmp.ne.s32.totalorder %s68, %s69
    %p81 = scmp.eq.s32.totalorder %s17, 1
    %p82 = por %p80, %p81
    %p84 = scmp.ne.s32.totalorder %s69, %s83
    %p85 = scmp.eq.s32.totalorder %s17, 0
    %p86 = por %p84, %p85
    %s88 = sadd.s32 %s87, 1
    %p91 = scmp.eq.s32.totalorder %s11, 1
    %p92 = scmp.ne.s32.totalorder %s87, %s89
    %p93 = scmp.eq.s32.totalorder %s11, 0
    %p94 = por %p92, %p93
    %p95 = scmp.ne.s32.totalorder %s87, %s89
    %p96 = scmp.eq.s32.totalorder %s16, 1
    %p97 = por %p95, %p96
    %p98 = scmp.ne.s32.totalorder %s89, %s90
    %p99 = scmp.eq.s32.totalorder %s16, 0
    %p100 = por %p98, %p99
    %p101 = scmp.ne.s32.totalorder %s89, %s90
    %p102 = scmp.eq.s32.totalorder %s17, 1
    %p103 = por %p101, %p102
    %p105 = scmp.ne.s32.totalorder %s90, %s104
    %p106 = scmp.eq.s32.totalorder %s17, 0
    %p107 = por %p105, %p106
    %s109 = sadd.s32 %s108, 1
    %p112 = scmp.eq.s32.totalorder %s11, 1
    %p113 = scmp.ne.s32.totalorder %s108, %s110
    %p114 = scmp.eq.s32.totalorder %s11, 0
    %p115 = por %p113, %p114
    %p116 = scmp.ne.s32.totalorder %s108, %s110
    %p117 = scmp.eq.s32.totalorder %s16, 1
    %p118 = por %p116, %p117
    %p119 = scmp.ne.s32.totalorder %s110, %s111
    %p120 = scmp.eq.s32.totalorder %s16, 0
    %p121 = por %p119, %p120
    %p122 = scmp.ne.s32.totalorder %s110, %s111
    %p123 = scmp.eq.s32.totalorder %s17, 1
    %p124 = por %p122, %p123
    %p126 = scmp.ne.s32.totalorder %s111, %s125
    %p127 = scmp.eq.s32.totalorder %s17, 0
    %p128 = por %p126, %p127
    %s129 = ssub.s32 %s11, %s18
    %p130 = scmp.eq.s32.totalorder %s129, 0
    %s132 = sadd.s32 %s131, 1
    %s133 = scalar_select %p130, %s131, %s132
    %p136 = pneg %p130
    %p137 = scmp.eq.s32.totalorder %s11, 1
    %p138 = por %p136, %p137
    %p139 = scmp.ne.s32.totalorder %s131, %s134
    %p140 = scmp.eq.s32.totalorder %s11, 0
    %p141 = por %p139, %p140
    %p142 = scmp.ne.s32.totalorder %s131, %s134
    %p143 = scmp.eq.s32.totalorder %s16, 1
    %p144 = por %p142, %p143
    %p145 = scmp.ne.s32.totalorder %s134, %s135
    %p146 = scmp.eq.s32.totalorder %s16, 0
    %p147 = por %p145, %p146
    %p148 = scmp.ne.s32.totalorder %s134, %s135
    %p149 = scmp.eq.s32.totalorder %s17, 1
    %p150 = por %p148, %p149
    %p152 = scmp.ne.s32.totalorder %s135, %s151
    %p153 = scmp.eq.s32.totalorder %s17, 0
    %p154 = por %p152, %p153
    %p155 = scmp.le.s32.totalorder 1, %s11
    %p156 = scmp.lt.s32.totalorder %s11, 3
    %p157 = pnand %p155, %p156
    %p158 = pneg %p157
    // Predicated region
    $region9: #{tcn_forward.4} parent=5 // pred_check
      _
    $region10: #{tcn_forward.4} parent=5 // pred_check_branch
      %160 = sbr.rel (%p157) target = $region12
    $region11: #{tcn_forward.4} parent=5 // pred_region
      %s161 = ssub.s32 %s11, 1
      // Predicated region
      $region13: #{tcn_forward.4} parent=11 // pred_check
        %p162 = pneg %p58
      $region14: #{tcn_forward.4} parent=11 // pred_check_branch
        %164 = sbr.rel (%p162) target = $region16
      $region15: #{tcn_forward.4} parent=11 // pred_region
        _
      $region16: #{tcn_forward.4} parent=11 // pred_fallthru
        _
      // Predicated region
      $region17: #{tcn_forward.4} parent=11 // pred_check
        %p165 = pneg %p79
      $region18: #{tcn_forward.4} parent=11 // pred_check_branch
        %167 = sbr.rel (%p165) target = $region20
      $region19: #{tcn_forward.4} parent=11 // pred_region
        _
      $region20: #{tcn_forward.4} parent=11 // pred_fallthru
        _
      // Predicated region
      $region21: #{tcn_forward.4} parent=11 // pred_check
        %p168 = pneg %p100
      $region22: #{tcn_forward.4} parent=11 // pred_check_branch
        %170 = sbr.rel (%p168) target = $region24
      $region23: #{tcn_forward.4} parent=11 // pred_region
        _
      $region24: #{tcn_forward.4} parent=11 // pred_fallthru
        _
      // Predicated region
      $region25: #{tcn_forward.4} parent=11 // pred_check
        %p171 = pneg %p121
      $region26: #{tcn_forward.4} parent=11 // pred_check_branch
        %173 = sbr.rel (%p171) target = $region28
      $region27: #{tcn_forward.4} parent=11 // pred_region
        _
      $region28: #{tcn_forward.4} parent=11 // pred_fallthru
        _
    $region12: #{tcn_forward.4} parent=5 // pred_fallthru
      _
    %p174 = scmp.lt.s32.totalorder %s11, 2
    // Predicated region
    $region29: #{tcn_forward.4} parent=5 // pred_check
      %p175 = pneg %p174
    $region30: #{tcn_forward.4} parent=5 // pred_check_branch
      %177 = sbr.rel (%p175) target = $region32
    $region31: #{tcn_forward.4} parent=5 // pred_region
      // Predicated region
      $region33: #{tcn_forward.4} parent=31 // pred_check
        %p178 = pneg %p31
      $region34: #{tcn_forward.4} parent=31 // pred_check_branch
        %180 = sbr.rel (%p178) target = $region36
      $region35: #{tcn_forward.4} parent=31 // pred_region
        %p181 = scmp.lt.s32.totalorder %s11, 1
        %s182 = scalar_select %p181, %s11, 1
        %s183 = smul.addr %s182, 16
        %s184 = smul.addr %s183, 4
        %s185 = scalar_lea.vmem %s0, %s184
      $region36: #{tcn_forward.4} parent=31 // pred_fallthru
        _
    $region32: #{tcn_forward.4} parent=5 // pred_fallthru
      _
    %p186 = scmp.le.s32.totalorder 1, %s11
    %p187 = scmp.lt.s32.totalorder %s11, 3
    %p188 = pnand %p186, %p187
    %p189 = pneg %p188
    // Predicated region
    $region37: #{tcn_forward.4} parent=5 // pred_check
      _
    $region38: #{tcn_forward.4} parent=5 // pred_check_branch
      %191 = sbr.rel (%p188) target = $region40
    $region39: #{tcn_forward.4} parent=5 // pred_region
      %s192 = ssub.s32 %s11, 1
      %p193 = scmp.lt.s32.totalorder %s16, 1
      %s194 = scalar_select %p193, %s16, 1
      %s195 = smul.addr %s194, 16
      %s196 = smul.addr %s195, 4
      %s197 = scalar_lea.vmem %s0, %s196
      %p198 = pneg %p37
      %p199 = pneg %p34
      %p200 = pneg %p58
      %p201 = pneg %p55
      %p202 = pneg %p79
      %p203 = pneg %p76
      %p204 = pneg %p100
      %p205 = pneg %p97
      %p206 = pneg %p121
      %p207 = pneg %p118
      %p208 = pneg %p147
      %p209 = pneg %p144
      %p210 = scmp.lt.s32.totalorder %s16, 1
      %s211 = scalar_select %p210, %s16, 1
      %s212 = smul.addr %s211, 16
      %s213 = smul.addr %s212, 4
      %s214 = scalar_lea.vmem %s5, %s213
      %p215 = scmp.lt.s32.totalorder %s16, 1
      %s216 = scalar_select %p215, %s16, 1
      %s217 = smul.addr %s216, 16
      %s218 = smul.addr %s217, 4
      %s219 = scalar_lea.vmem %s0, %s218
      %p220 = scmp.lt.s32.totalorder %s16, 1
      %s221 = scalar_select %p220, %s16, 1
      %s222 = smul.addr %s221, 16
      %s223 = smul.addr %s222, 4
      %s224 = scalar_lea.vmem %s5, %s223
      %226 = vst [vmem:[#allocation2] sm:$0x3] 0
      %v227 = vld [vmem:[%s219] sm:$0xf]
      %v228 = vld [vmem:[%s219 + $0x4] sm:$0xf]
      %v229 = vld [vmem:[%s219 + $0x8] sm:$0xf]
      %v230 = vld [vmem:[%s219 + $0xc] sm:$0xf]
      %v231 = vld [vmem:[%s219 + $0x10] sm:$0xf]
      %v232 = vld [vmem:[%s219 + $0x14] sm:$0xf]
      %v233 = vld [vmem:[%s219 + $0x18] sm:$0xf]
      %v234 = vld [vmem:[%s219 + $0x1c] sm:$0xf]
      %v235 = vld [vmem:[%s219 + $0x20] sm:$0xf]
      %v236 = vld [vmem:[%s219 + $0x24] sm:$0xf]
      %v237 = vld [vmem:[%s219 + $0x28] sm:$0xf]
      %v238 = vld [vmem:[%s219 + $0x2c] sm:$0xf]
      %v239 = vld [vmem:[%s219 + $0x30] sm:$0xf]
      %v240 = vld [vmem:[%s219 + $0x34] sm:$0xf]
      %v241 = vld [vmem:[%s219 + $0x38] sm:$0xf]
      %v242 = vld [vmem:[%s219 + $0x3c] sm:$0xf]
      %vm259 = vcmask 1041408
      %vm260 = vcmask 1045508
      %vm261 = vmor %vm259, %vm260
      %v262 = vrot.slane %v227, 6
      %v263 = vrot.slane %v262, 4
      %v264 = vrot.slane %v228, 6
      %v265 = vsel %vm261, %v263, %v264
      %v266 = vrot.slane %v264, 4
      %v267 = vrot.slane %v229, 6
      %v268 = vsel %vm261, %v266, %v267
      %v269 = vrot.slane %v267, 4
      %v270 = vrot.slane %v230, 6
      %v271 = vsel %vm261, %v269, %v270
      %v272 = vrot.slane %v270, 4
      %v273 = vrot.slane %v231, 6
      %v274 = vsel %vm261, %v272, %v273
      %v275 = vrot.slane %v273, 4
      %v276 = vrot.slane %v232, 6
      %v277 = vsel %vm261, %v275, %v276
      %v278 = vrot.slane %v276, 4
      %v279 = vrot.slane %v233, 6
      %v280 = vsel %vm261, %v278, %v279
      %v281 = vrot.slane %v279, 4
      %v282 = vrot.slane %v234, 6
      %v283 = vsel %vm261, %v281, %v282
      %v284 = vrot.slane %v282, 4
      %v285 = vrot.slane %v235, 6
      %v286 = vsel %vm261, %v284, %v285
      %v287 = vrot.slane %v285, 4
      %v288 = vrot.slane %v236, 6
      %v289 = vsel %vm261, %v287, %v288
      %v290 = vrot.slane %v288, 4
      %v291 = vrot.slane %v237, 6
      %v292 = vsel %vm261, %v290, %v291
      %v293 = vrot.slane %v291, 4
      %v294 = vrot.slane %v238, 6
      %v295 = vsel %vm261, %v293, %v294
      %v296 = vrot.slane %v294, 4
      %v297 = vrot.slane %v239, 6
      %v298 = vsel %vm261, %v296, %v297
      %v299 = vrot.slane %v297, 4
      %v300 = vrot.slane %v240, 6
      %v301 = vsel %vm261, %v299, %v300
      %v302 = vrot.slane %v300, 4
      %v303 = vrot.slane %v241, 6
      %v304 = vsel %vm261, %v302, %v303
      %v305 = vrot.slane %v303, 4
      %v306 = vrot.slane %v242, 6
      %v307 = vsel %vm261, %v305, %v306
      %v308 = vrot.slane %v306, 4
      %326 = vst [vmem:[#allocation2] sm:$0xc] %v262
      %327 = vst [vmem:[#allocation2 + $0x4] sm:$0xf] %v265
      %328 = vst [vmem:[#allocation2 + $0x8] sm:$0xf] %v268
      %329 = vst [vmem:[#allocation2 + $0xc] sm:$0xf] %v271
      %330 = vst [vmem:[#allocation2 + $0x10] sm:$0xf] %v274
      %331 = vst [vmem:[#allocation2 + $0x14] sm:$0xf] %v277
      %332 = vst [vmem:[#allocation2 + $0x18] sm:$0xf] %v280
      %333 = vst [vmem:[#allocation2 + $0x1c] sm:$0xf] %v283
      %334 = vst [vmem:[#allocation2 + $0x20] sm:$0xf] %v286
      %335 = vst [vmem:[#allocation2 + $0x24] sm:$0xf] %v289
      %336 = vst [vmem:[#allocation2 + $0x28] sm:$0xf] %v292
      %337 = vst [vmem:[#allocation2 + $0x2c] sm:$0xf] %v295
      %338 = vst [vmem:[#allocation2 + $0x30] sm:$0xf] %v298
      %339 = vst [vmem:[#allocation2 + $0x34] sm:$0xf] %v301
      %340 = vst [vmem:[#allocation2 + $0x38] sm:$0xf] %v304
      %341 = vst [vmem:[#allocation2 + $0x3c] sm:$0xf] %v307
      %342 = vst [vmem:[#allocation2 + $0x40] sm:$0x3] %v308
      %v343 = vld [vmem:[#allocation2] sm:$0xf]
      %v344 = vld [vmem:[#allocation2 + $0x4] sm:$0xf]
      %v345 = vld [vmem:[#allocation2 + $0x8] sm:$0xf]
      %v346 = vld [vmem:[#allocation2 + $0xc] sm:$0xf]
      %v347 = vld [vmem:[#allocation2 + $0x10] sm:$0xf]
      %v348 = vld [vmem:[#allocation2 + $0x14] sm:$0xf]
      %v349 = vld [vmem:[#allocation2 + $0x18] sm:$0xf]
      %v350 = vld [vmem:[#allocation2 + $0x1c] sm:$0xf]
      %v351 = vld [vmem:[#allocation2 + $0x20] sm:$0xf]
      %v352 = vld [vmem:[#allocation2 + $0x24] sm:$0xf]
      %v353 = vld [vmem:[#allocation2 + $0x28] sm:$0xf]
      %v354 = vld [vmem:[#allocation2 + $0x2c] sm:$0xf]
      %v355 = vld [vmem:[#allocation2 + $0x30] sm:$0xf]
      %v356 = vld [vmem:[#allocation2 + $0x34] sm:$0xf]
      %v357 = vld [vmem:[#allocation2 + $0x38] sm:$0xf]
      %v358 = vld [vmem:[#allocation2 + $0x3c] sm:$0xf]
      %v359 = vld [vmem:[#allocation2] sm:$0xe]
      %v360 = vld [vmem:[#allocation2 + $0x40] sm:$0x1]
      %v361 = vld [vmem:[#allocation2] sm:$0xc]
      %v362 = vld [vmem:[#allocation2 + $0x40] sm:$0x3]
      %v379 = vunpack.c.l.b16 %v343
      %v380 = vunpack.c.l.b16 %v344
      %v381 = vunpack.c.l.b16 %v345
      %v382 = vunpack.c.l.b16 %v346
      %v383 = vunpack.c.l.b16 %v347
      %v384 = vunpack.c.l.b16 %v348
      %v385 = vunpack.c.l.b16 %v349
      %v386 = vunpack.c.l.b16 %v350
      %v387 = vunpack.c.l.b16 %v351
      %v388 = vunpack.c.l.b16 %v352
      %v389 = vunpack.c.l.b16 %v353
      %v390 = vunpack.c.l.b16 %v354
      %v391 = vunpack.c.l.b16 %v355
      %v392 = vunpack.c.l.b16 %v356
      %v393 = vunpack.c.l.b16 %v357
      %v394 = vunpack.c.l.b16 %v358
      %v395 = vpack.c.b16 %v380, %v379
      %v396 = vpack.c.b16 %v382, %v381
      %v397 = vpack.c.b16 %v384, %v383
      %v398 = vpack.c.b16 %v386, %v385
      %v399 = vpack.c.b16 %v388, %v387
      %v400 = vpack.c.b16 %v390, %v389
      %v401 = vpack.c.b16 %v392, %v391
      %v402 = vpack.c.b16 %v394, %v393
      %v413 = vunpack.c.l.b16 %v359
      %v414 = vunpack.c.l.b16 %v360
      %v415 = vpack.c.b16 %v380, %v413
      %v416 = vpack.c.b16 %v414, %v414
      %vm417 = vcmask 1046528
      %v418 = vrot.slane %v415, 1
      %v419 = vrot.slane %v396, 1
      %v420 = vsel %vm417, %v418, %v419
      %v421 = vrot.slane %v397, 1
      %v422 = vsel %vm417, %v419, %v421
      %v423 = vrot.slane %v398, 1
      %v424 = vsel %vm417, %v421, %v423
      %v425 = vrot.slane %v399, 1
      %v426 = vsel %vm417, %v423, %v425
      %v427 = vrot.slane %v400, 1
      %v428 = vsel %vm417, %v425, %v427
      %v429 = vrot.slane %v401, 1
      %v430 = vsel %vm417, %v427, %v429
      %v431 = vrot.slane %v402, 1
      %v432 = vsel %vm417, %v429, %v431
      %v433 = vrot.slane %v416, 1
      %v434 = vsel %vm417, %v431, %v433
      %v445 = vunpack.c.l.b16 %v361
      %v446 = vunpack.c.l.b16 %v362
      %v447 = vpack.c.b16 %v380, %v445
      %v448 = vpack.c.b16 %v446, %v446
      %vm449 = vcmask 1045504
      %v450 = vrot.slane %v447, 2
      %v451 = vrot.slane %v396, 2
      %v452 = vsel %vm449, %v450, %v451
      %v453 = vrot.slane %v397, 2
      %v454 = vsel %vm449, %v451, %v453
      %v455 = vrot.slane %v398, 2
      %v456 = vsel %vm449, %v453, %v455
      %v457 = vrot.slane %v399, 2
      %v458 = vsel %vm449, %v455, %v457
      %v459 = vrot.slane %v400, 2
      %v460 = vsel %vm449, %v457, %v459
      %v461 = vrot.slane %v401, 2
      %v462 = vsel %vm449, %v459, %v461
      %v463 = vrot.slane %v402, 2
      %v464 = vsel %vm449, %v461, %v463
      %v465 = vrot.slane %v448, 2
      %v466 = vsel %vm449, %v463, %v465
      %v475 = vld [vmem:[%s1] sm:$0xf]
      %v476 = vld [vmem:[%s1 + $0x4] sm:$0xf]
      %v477 = vld [vmem:[%s1 + $0x8] sm:$0xf]
      %v478 = vld [vmem:[%s1 + $0xc] sm:$0xf]
      %v479 = vld [vmem:[%s1 + $0x10] sm:$0xf]
      %v480 = vld [vmem:[%s1 + $0x14] sm:$0xf]
      %v481 = vld [vmem:[%s1 + $0x18] sm:$0xf]
      %v482 = vld [vmem:[%s1 + $0x1c] sm:$0xf]
      %v483 = vld [vmem:[%s1 + $0x20] sm:$0xf]
      %v484 = vld [vmem:[%s1 + $0x24] sm:$0xf]
      %v485 = vld [vmem:[%s1 + $0x28] sm:$0xf]
      %v486 = vld [vmem:[%s1 + $0x2c] sm:$0xf]
      %v487 = vld [vmem:[%s1 + $0x30] sm:$0xf]
      %v488 = vld [vmem:[%s1 + $0x34] sm:$0xf]
      %v489 = vld [vmem:[%s1 + $0x38] sm:$0xf]
      %v490 = vld [vmem:[%s1 + $0x3c] sm:$0xf]
      %v491 = vld [vmem:[%s1 + $0x40] sm:$0xf]
      %v492 = vld [vmem:[%s1 + $0x44] sm:$0xf]
      %v493 = vld [vmem:[%s1 + $0x48] sm:$0xf]
      %v494 = vld [vmem:[%s1 + $0x4c] sm:$0xf]
      %v495 = vld [vmem:[%s1 + $0x50] sm:$0xf]
      %v496 = vld [vmem:[%s1 + $0x54] sm:$0xf]
      %v497 = vld [vmem:[%s1 + $0x58] sm:$0xf]
      %v498 = vld [vmem:[%s1 + $0x5c] sm:$0xf]
      %v499 = vld [vmem:[%s1 + $0x60] sm:$0xf]
      %v500 = vld [vmem:[%s1 + $0x64] sm:$0xf]
      %v501 = vld [vmem:[%s1 + $0x68] sm:$0xf]
      %v502 = vld [vmem:[%s1 + $0x6c] sm:$0xf]
      %v503 = vld [vmem:[%s1 + $0x70] sm:$0xf]
      %v504 = vld [vmem:[%s1 + $0x74] sm:$0xf]
      %v505 = vld [vmem:[%s1 + $0x78] sm:$0xf]
      %v506 = vld [vmem:[%s1 + $0x7c] sm:$0xf]
      %v507 = vld [vmem:[%s1 + $0x80] sm:$0xf]
      %v508 = vld [vmem:[%s1 + $0x84] sm:$0xf]
      %v509 = vld [vmem:[%s1 + $0x88] sm:$0xf]
      %v510 = vld [vmem:[%s1 + $0x8c] sm:$0xf]
      %v511 = vld [vmem:[%s1 + $0x90] sm:$0xf]
      %v512 = vld [vmem:[%s1 + $0x94] sm:$0xf]
      %v513 = vld [vmem:[%s1 + $0x98] sm:$0xf]
      %v514 = vld [vmem:[%s1 + $0x9c] sm:$0xf]
      %v515 = vld [vmem:[%s1 + $0xa0] sm:$0xf]
      %v516 = vld [vmem:[%s1 + $0xa4] sm:$0xf]
      %v517 = vld [vmem:[%s1 + $0xa8] sm:$0xf]
      %v518 = vld [vmem:[%s1 + $0xac] sm:$0xf]
      %v519 = vld [vmem:[%s1 + $0xb0] sm:$0xf]
      %v520 = vld [vmem:[%s1 + $0xb4] sm:$0xf]
      %v521 = vld [vmem:[%s1 + $0xb8] sm:$0xf]
      %v522 = vld [vmem:[%s1 + $0xbc] sm:$0xf]
      %v523 = vld [vmem:[%s2] sm:$0x1]
      %v525 = vlaneseq
      %v526 = vshrl.u32 %v525, 7
      %v527 = vsub.s32 0, %v526
      %v528 = vrot.slane %v523, %v527
      %v578 = vunpack.c.l.b16 %v475
      %v579 = vunpack.c.l.b16 %v476
      %v580 = vunpack.c.l.b16 %v477
      %v581 = vunpack.c.l.b16 %v478
      %v582 = vunpack.c.l.b16 %v479
      %v583 = vunpack.c.l.b16 %v480
      %v584 = vunpack.c.l.b16 %v481
      %v585 = vunpack.c.l.b16 %v482
      %v586 = vunpack.c.l.b16 %v483
      %v587 = vunpack.c.l.b16 %v484
      %v588 = vunpack.c.l.b16 %v485
      %v589 = vunpack.c.l.b16 %v486
      %v590 = vunpack.c.l.b16 %v487
      %v591 = vunpack.c.l.b16 %v488
      %v592 = vunpack.c.l.b16 %v489
      %v593 = vunpack.c.l.b16 %v490
      %v594 = vunpack.c.l.b16 %v491
      %v595 = vunpack.c.l.b16 %v492
      %v596 = vunpack.c.l.b16 %v493
      %v597 = vunpack.c.l.b16 %v494
      %v598 = vunpack.c.l.b16 %v495
      %v599 = vunpack.c.l.b16 %v496
      %v600 = vunpack.c.l.b16 %v497
      %v601 = vunpack.c.l.b16 %v498
      %v602 = vunpack.c.l.b16 %v499
      %v603 = vunpack.c.l.b16 %v500
      %v604 = vunpack.c.l.b16 %v501
      %v605 = vunpack.c.l.b16 %v502
      %v606 = vunpack.c.l.b16 %v503
      %v607 = vunpack.c.l.b16 %v504
      %v608 = vunpack.c.l.b16 %v505
      %v609 = vunpack.c.l.b16 %v506
      %v610 = vunpack.c.l.b16 %v507
      %v611 = vunpack.c.l.b16 %v508
      %v612 = vunpack.c.l.b16 %v509
      %v613 = vunpack.c.l.b16 %v510
      %v614 = vunpack.c.l.b16 %v511
      %v615 = vunpack.c.l.b16 %v512
      %v616 = vunpack.c.l.b16 %v513
      %v617 = vunpack.c.l.b16 %v514
      %v618 = vunpack.c.l.b16 %v515
      %v619 = vunpack.c.l.b16 %v516
      %v620 = vunpack.c.l.b16 %v517
      %v621 = vunpack.c.l.b16 %v518
      %v622 = vunpack.c.l.b16 %v519
      %v623 = vunpack.c.l.b16 %v520
      %v624 = vunpack.c.l.b16 %v521
      %v625 = vunpack.c.l.b16 %v522
      %v626 = vpack.c.b16 %v579, %v578
      %v627 = vpack.c.b16 %v581, %v580
      %v628 = vpack.c.b16 %v583, %v582
      %v629 = vpack.c.b16 %v585, %v584
      %v630 = vpack.c.b16 %v587, %v586
      %v631 = vpack.c.b16 %v589, %v588
      %v632 = vpack.c.b16 %v591, %v590
      %v633 = vpack.c.b16 %v593, %v592
      %v634 = vpack.c.b16 %v595, %v594
      %v635 = vpack.c.b16 %v597, %v596
      %v636 = vpack.c.b16 %v599, %v598
      %v637 = vpack.c.b16 %v601, %v600
      %v638 = vpack.c.b16 %v603, %v602
      %v639 = vpack.c.b16 %v605, %v604
      %v640 = vpack.c.b16 %v607, %v606
      %v641 = vpack.c.b16 %v609, %v608
      %v642 = vpack.c.b16 %v611, %v610
      %v643 = vpack.c.b16 %v613, %v612
      %v644 = vpack.c.b16 %v615, %v614
      %v645 = vpack.c.b16 %v617, %v616
      %v646 = vpack.c.b16 %v619, %v618
      %v647 = vpack.c.b16 %v621, %v620
      %v648 = vpack.c.b16 %v623, %v622
      %v649 = vpack.c.b16 %v625, %v624
      %674 = vmatprep.subr.bf16.mxu0 0
      %675 = vmatpush1.bf16.msra.mxu0 %v626
      %676 = vmatprep.subr.bf16.mxu0 0
      %677 = vmatpush1.bf16.msra.mxu0 %v627
      %678 = vmatprep.subr.bf16.mxu0 0
      %679 = vmatpush1.bf16.msra.mxu0 %v628
      %680 = vmatprep.subr.bf16.mxu0 0
      %681 = vmatpush1.bf16.msra.mxu0 %v629
      %682 = vmatprep.subr.bf16.mxu0 0
      %683 = vmatpush1.bf16.msra.mxu0 %v630
      %684 = vmatprep.subr.bf16.mxu0 0
      %685 = vmatpush1.bf16.msra.mxu0 %v631
      %686 = vmatprep.subr.bf16.mxu0 0
      %687 = vmatpush1.bf16.msra.mxu0 %v632
      %688 = vmatprep.subr.bf16.mxu0 0
      %689 = vmatpush1.bf16.msra.mxu0 %v633
      %690 = vmatprep.subr.bf16.mxu0 0
      %691 = vmatpush1.bf16.msra.mxu0 %v634
      %692 = vmatprep.subr.bf16.mxu0 0
      %693 = vmatpush1.bf16.msra.mxu0 %v635
      %694 = vmatprep.subr.bf16.mxu0 0
      %695 = vmatpush1.bf16.msra.mxu0 %v636
      %696 = vmatprep.subr.bf16.mxu0 0
      %697 = vmatpush1.bf16.msra.mxu0 %v637
      %698 = vmatprep.subr.bf16.mxu0 0
      %699 = vmatpush1.bf16.msra.mxu0 %v638
      %700 = vmatprep.subr.bf16.mxu0 0
      %701 = vmatpush1.bf16.msra.mxu0 %v639
      %702 = vmatprep.subr.bf16.mxu0 0
      %703 = vmatpush1.bf16.msra.mxu0 %v640
      %704 = vmatprep.subr.bf16.mxu0 0
      %705 = vmatpush1.bf16.msra.mxu0 %v641
      %706 = vmatprep.mubr.bf16.mxu0 %v420
      %707 = vmatmul.mubr.bf16.gmra.mrb[0].mxu0 %v395
      %v708 = vpop.f32.mrb[0].mxu0
      %v709 = vadd.f32 %v528, %v708
      %v710 = vpop.f32.mrb[0].mxu0
      %v711 = vpop.f32.mrb[0].mxu0
      %v712 = vadd.f32 %v528, %v711
      %v713 = vpop.f32.mrb[0].mxu0
      %714 = vmatprep.mubr.bf16.mxu0 %v422
      %715 = vmatmul.mubr.bf16.gmra.mrb[0].mxu0 %v396
      %v716 = vpop.f32.mrb[0].mxu0
      %v717 = vadd.f32 %v528, %v716
      %v718 = vpop.f32.mrb[0].mxu0
      %v719 = vpop.f32.mrb[0].mxu0
      %v720 = vadd.f32 %v528, %v719
      %v721 = vpop.f32.mrb[0].mxu0
      %722 = vmatprep.mubr.bf16.mxu0 %v424
      %723 = vmatmul.mubr.bf16.gmra.mrb[0].mxu0 %v397
      %v724 = vpop.f32.mrb[0].mxu0
      %v725 = vadd.f32 %v528, %v724
      %v726 = vpop.f32.mrb[0].mxu0
      %v727 = vpop.f32.mrb[0].mxu0
      %v728 = vadd.f32 %v528, %v727
      %v729 = vpop.f32.mrb[0].mxu0
      %730 = vmatprep.mubr.bf16.mxu0 %v426
      %731 = vmatmul.mubr.bf16.gmra.mrb[0].mxu0 %v398
      %v732 = vpop.f32.mrb[0].mxu0
      %v733 = vadd.f32 %v528, %v732
      %v734 = vpop.f32.mrb[0].mxu0
      %v735 = vpop.f32.mrb[0].mxu0
      %v736 = vadd.f32 %v528, %v735
      %v737 = vpop.f32.mrb[0].mxu0
      %738 = vmatprep.mubr.bf16.mxu0 %v428
      %739 = vmatmul.mubr.bf16.gmra.mrb[0].mxu0 %v399
      %v740 = vpop.f32.mrb[0].mxu0
      %v741 = vadd.f32 %v528, %v740
      %v742 = vpop.f32.mrb[0].mxu0
      %v743 = vpop.f32.mrb[0].mxu0
      %v744 = vadd.f32 %v528, %v743
      %v745 = vpop.f32.mrb[0].mxu0
      %746 = vmatprep.mubr.bf16.mxu0 %v430
      %747 = vmatmul.mubr.bf16.gmra.mrb[0].mxu0 %v400
      %v748 = vpop.f32.mrb[0].mxu0
      %v749 = vadd.f32 %v528, %v748
      %v750 = vpop.f32.mrb[0].mxu0
      %v751 = vpop.f32.mrb[0].mxu0
      %v752 = vadd.f32 %v528, %v751
      %v753 = vpop.f32.mrb[0].mxu0
      %754 = vmatprep.mubr.bf16.mxu0 %v432
      %755 = vmatmul.mubr.bf16.gmra.mrb[0].mxu0 %v401
      %v756 = vpop.f32.mrb[0].mxu0
      %v757 = vadd.f32 %v528, %v756
      %v758 = vpop.f32.mrb[0].mxu0
      %v759 = vpop.f32.mrb[0].mxu0
      %v760 = vadd.f32 %v528, %v759
      %v761 = vpop.f32.mrb[0].mxu0
      %762 = vmatprep.mubr.bf16.mxu0 %v434
      %763 = vmatmul.mubr.bf16.gmra.mrb[0].mxu0 %v402
      %v764 = vpop.f32.mrb[0].mxu0
      %v765 = vadd.f32 %v528, %v764
      %v766 = vpop.f32.mrb[0].mxu0
      %v767 = vpop.f32.mrb[0].mxu0
      %v768 = vadd.f32 %v528, %v767
      %v769 = vpop.f32.mrb[0].mxu0
      %770 = vdwg.mxu0
      %771 = vmatprep.subr.bf16.mxu0 0
      %772 = vmatpush1.bf16.msra.mxu0 %v642
      %773 = vmatprep.subr.bf16.mxu0 0
      %774 = vmatpush1.bf16.msra.mxu0 %v643
      %775 = vmatprep.subr.bf16.mxu0 0
      %776 = vmatpush1.bf16.msra.mxu0 %v644
      %777 = vmatprep.subr.bf16.mxu0 0
      %778 = vmatpush1.bf16.msra.mxu0 %v645
      %779 = vmatprep.subr.bf16.mxu0 0
      %780 = vmatpush1.bf16.msra.mxu0 %v646
      %781 = vmatprep.subr.bf16.mxu0 0
      %782 = vmatpush1.bf16.msra.mxu0 %v647
      %783 = vmatprep.subr.bf16.mxu0 0
      %784 = vmatpush1.bf16.msra.mxu0 %v648
      %785 = vmatprep.subr.bf16.mxu0 0
      %786 = vmatpush1.bf16.msra.mxu0 %v649
      %787 = vmatprep.subr.bf16.mxu0 0
      %788 = vmatpush1.bf16.msra.mxu0 0
      %789 = vmatprep.subr.bf16.mxu0 0
      %790 = vmatpush1.bf16.msra.mxu0 0
      %791 = vmatprep.subr.bf16.mxu0 0
      %792 = vmatpush1.bf16.msra.mxu0 0
      %793 = vmatprep.subr.bf16.mxu0 0
      %794 = vmatpush1.bf16.msra.mxu0 0
      %795 = vmatprep.subr.bf16.mxu0 0
      %796 = vmatpush1.bf16.msra.mxu0 0
      %797 = vmatprep.subr.bf16.mxu0 0
      %798 = vmatpush1.bf16.msra.mxu0 0
      %799 = vmatprep.subr.bf16.mxu0 0
      %800 = vmatpush1.bf16.msra.mxu0 0
      %801 = vmatprep.subr.bf16.mxu0 0
      %802 = vmatpush1.bf16.msra.mxu0 0
      %803 = vmatprep.mubr.bf16.mxu0 0
      %804 = vmatmul.mubr.bf16.gmra.mrb[0].mxu0 %v452
      %v805 = vpop.f32.mrb[0].mxu0
      %v806 = vadd.f32 %v709, %v805
      %v807 = vpop.f32.mrb[0].mxu0
      %v808 = vpop.f32.mrb[0].mxu0
      %v809 = vadd.f32 %v712, %v808
      %v810 = vpop.f32.mrb[0].mxu0
      %811 = vmatprep.mubr.bf16.mxu0 0
      %812 = vmatmul.mubr.bf16.gmra.mrb[0].mxu0 %v454
      %v813 = vpop.f32.mrb[0].mxu0
      %v814 = vadd.f32 %v717, %v813
      %v815 = vpop.f32.mrb[0].mxu0
      %v816 = vpop.f32.mrb[0].mxu0
      %v817 = vadd.f32 %v720, %v816
      %v818 = vpop.f32.mrb[0].mxu0
      %819 = vmatprep.mubr.bf16.mxu0 0
      %820 = vmatmul.mubr.bf16.gmra.mrb[0].mxu0 %v456
      %v821 = vpop.f32.mrb[0].mxu0
      %v822 = vadd.f32 %v725, %v821
      %v823 = vpop.f32.mrb[0].mxu0
      %v824 = vpop.f32.mrb[0].mxu0
      %v825 = vadd.f32 %v728, %v824
      %v826 = vpop.f32.mrb[0].mxu0
      %827 = vmatprep.mubr.bf16.mxu0 0
      %828 = vmatmul.mubr.bf16.gmra.mrb[0].mxu0 %v458
      %v829 = vpop.f32.mrb[0].mxu0
      %v830 = vadd.f32 %v733, %v829
      %v831 = vpop.f32.mrb[0].mxu0
      %v832 = vpop.f32.mrb[0].mxu0
      %v833 = vadd.f32 %v736, %v832
      %v834 = vpop.f32.mrb[0].mxu0
      %835 = vmatprep.mubr.bf16.mxu0 0
      %836 = vmatmul.mubr.bf16.gmra.mrb[0].mxu0 %v460
      %v837 = vpop.f32.mrb[0].mxu0
      %v838 = vadd.f32 %v741, %v837
      %v839 = vpop.f32.mrb[0].mxu0
      %v840 = vpop.f32.mrb[0].mxu0
      %v841 = vadd.f32 %v744, %v840
      %v842 = vpop.f32.mrb[0].mxu0
      %843 = vmatprep.mubr.bf16.mxu0 0
      %844 = vmatmul.mubr.bf16.gmra.mrb[0].mxu0 %v462
      %v845 = vpop.f32.mrb[0].mxu0
      %v846 = vadd.f32 %v749, %v845
      %v847 = vpop.f32.mrb[0].mxu0
      %v848 = vpop.f32.mrb[0].mxu0
      %v849 = vadd.f32 %v752, %v848
      %v850 = vpop.f32.mrb[0].mxu0
      %851 = vmatprep.mubr.bf16.mxu0 0
      %852 = vmatmul.mubr.bf16.gmra.mrb[0].mxu0 %v464
      %v853 = vpop.f32.mrb[0].mxu0
      %v854 = vadd.f32 %v757, %v853
      %v855 = vpop.f32.mrb[0].mxu0
      %v856 = vpop.f32.mrb[0].mxu0
      %v857 = vadd.f32 %v760, %v856
      %v858 = vpop.f32.mrb[0].mxu0
      %859 = vmatprep.mubr.bf16.mxu0 0
      %860 = vmatmul.mubr.bf16.gmra.mrb[0].mxu0 %v466
      %v861 = vpop.f32.mrb[0].mxu0
      %v862 = vadd.f32 %v765, %v861
      %v863 = vpop.f32.mrb[0].mxu0
      %v864 = vpop.f32.mrb[0].mxu0
      %v865 = vadd.f32 %v768, %v864
      %v866 = vpop.f32.mrb[0].mxu0
      %867 = vdwg.mxu0
      %v868 = vmax.f32 %v806, 0.0
      %v869 = vmax.f32 %v809, 0.0
      %v870 = vmax.f32 %v814, 0.0
      %v871 = vmax.f32 %v817, 0.0
      %v872 = vmax.f32 %v822, 0.0
      %v873 = vmax.f32 %v825, 0.0
      %v874 = vmax.f32 %v830, 0.0
      %v875 = vmax.f32 %v833, 0.0
      %v876 = vmax.f32 %v838, 0.0
      %v877 = vmax.f32 %v841, 0.0
      %v878 = vmax.f32 %v846, 0.0
      %v879 = vmax.f32 %v849, 0.0
      %v880 = vmax.f32 %v854, 0.0
      %v881 = vmax.f32 %v857, 0.0
      %v882 = vmax.f32 %v862, 0.0
      %v883 = vmax.f32 %v865, 0.0
      %884 = vst [vmem:[#allocation3] sm:$0x3] 0
      %v885 = vpack.c.bf16 %v869, %v868
      %v886 = vpack.c.bf16 %v871, %v870
      %v887 = vpack.c.bf16 %v873, %v872
      %v888 = vpack.c.bf16 %v875, %v874
      %v889 = vpack.c.bf16 %v877, %v876
      %v890 = vpack.c.bf16 %v879, %v878
      %v891 = vpack.c.bf16 %v881, %v880
      %v892 = vpack.c.bf16 %v883, %v882
      %v901 = vunpack.c.l.b16 %v885
      %v902 = vunpack.c.h.b16 %v885
      %v903 = vunpack.c.l.b16 %v886
      %v904 = vunpack.c.h.b16 %v886
      %v905 = vunpack.c.l.b16 %v887
      %v906 = vunpack.c.h.b16 %v887
      %v907 = vunpack.c.l.b16 %v888
      %v908 = vunpack.c.h.b16 %v888
      %v909 = vunpack.c.l.b16 %v889
      %v910 = vunpack.c.h.b16 %v889
      %v911 = vunpack.c.l.b16 %v890
      %v912 = vunpack.c.h.b16 %v890
      %v913 = vunpack.c.l.b16 %v891
      %v914 = vunpack.c.h.b16 %v891
      %v915 = vunpack.c.l.b16 %v892
      %v916 = vunpack.c.h.b16 %v892
      %v917 = vpack.c.b16 %v901, %v901
      %v918 = vpack.c.b16 %v902, %v902
      %v919 = vpack.c.b16 %v903, %v903
      %v920 = vpack.c.b16 %v904, %v904
      %v921 = vpack.c.b16 %v905, %v905
      %v922 = vpack.c.b16 %v906, %v906
      %v923 = vpack.c.b16 %v907, %v907
      %v924 = vpack.c.b16 %v908, %v908
      %v925 = vpack.c.b16 %v909, %v909
      %v926 = vpack.c.b16 %v910, %v910
      %v927 = vpack.c.b16 %v911, %v911
      %v928 = vpack.c.b16 %v912, %v912
      %v929 = vpack.c.b16 %v913, %v913
      %v930 = vpack.c.b16 %v914, %v914
      %v931 = vpack.c.b16 %v915, %v915
      %v932 = vpack.c.b16 %v916, %v916
      %v933 = vrot.slane %v917, 6
      %v934 = vrot.slane %v933, 4
      %v935 = vrot.slane %v918, 6
      %v936 = vsel %vm261, %v934, %v935
      %v937 = vrot.slane %v935, 4
      %v938 = vrot.slane %v919, 6
      %v939 = vsel %vm261, %v937, %v938
      %v940 = vrot.slane %v938, 4
      %v941 = vrot.slane %v920, 6
      %v942 = vsel %vm261, %v940, %v941
      %v943 = vrot.slane %v941, 4
      %v944 = vrot.slane %v921, 6
      %v945 = vsel %vm261, %v943, %v944
      %v946 = vrot.slane %v944, 4
      %v947 = vrot.slane %v922, 6
      %v948 = vsel %vm261, %v946, %v947
      %v949 = vrot.slane %v947, 4
      %v950 = vrot.slane %v923, 6
      %v951 = vsel %vm261, %v949, %v950
      %v952 = vrot.slane %v950, 4
      %v953 = vrot.slane %v924, 6
      %v954 = vsel %vm261, %v952, %v953
      %v955 = vrot.slane %v953, 4
      %v956 = vrot.slane %v925, 6
      %v957 = vsel %vm261, %v955, %v956
      %v958 = vrot.slane %v956, 4
      %v959 = vrot.slane %v926, 6
      %v960 = vsel %vm261, %v958, %v959
      %v961 = vrot.slane %v959, 4
      %v962 = vrot.slane %v927, 6
      %v963 = vsel %vm261, %v961, %v962
      %v964 = vrot.slane %v962, 4
      %v965 = vrot.slane %v928, 6
      %v966 = vsel %vm261, %v964, %v965
      %v967 = vrot.slane %v965, 4
      %v968 = vrot.slane %v929, 6
      %v969 = vsel %vm261, %v967, %v968
      %v970 = vrot.slane %v968, 4
      %v971 = vrot.slane %v930, 6
      %v972 = vsel %vm261, %v970, %v971
      %v973 = vrot.slane %v971, 4
      %v974 = vrot.slane %v931, 6
      %v975 = vsel %vm261, %v973, %v974
      %v976 = vrot.slane %v974, 4
      %v977 = vrot.slane %v932, 6
      %v978 = vsel %vm261, %v976, %v977
      %v979 = vrot.slane %v977, 4
      %997 = vst [vmem:[#allocation3] sm:$0xc] %v933
      %998 = vst [vmem:[#allocation3 + $0x4] sm:$0xf] %v936
      %999 = vst [vmem:[#allocation3 + $0x8] sm:$0xf] %v939
      %1000 = vst [vmem:[#allocation3 + $0xc] sm:$0xf] %v942
      %1001 = vst [vmem:[#allocation3 + $0x10] sm:$0xf] %v945
      %1002 = vst [vmem:[#allocation3 + $0x14] sm:$0xf] %v948
      %1003 = vst [vmem:[#allocation3 + $0x18] sm:$0xf] %v951
      %1004 = vst [vmem:[#allocation3 + $0x1c] sm:$0xf] %v954
      %1005 = vst [vmem:[#allocation3 + $0x20] sm:$0xf] %v957
      %1006 = vst [vmem:[#allocation3 + $0x24] sm:$0xf] %v960
      %1007 = vst [vmem:[#allocation3 + $0x28] sm:$0xf] %v963
      %1008 = vst [vmem:[#allocation3 + $0x2c] sm:$0xf] %v966
      %1009 = vst [vmem:[#allocation3 + $0x30] sm:$0xf] %v969
      %1010 = vst [vmem:[#allocation3 + $0x34] sm:$0xf] %v972
      %1011 = vst [vmem:[#allocation3 + $0x38] sm:$0xf] %v975
      %1012 = vst [vmem:[#allocation3 + $0x3c] sm:$0xf] %v978
      %1013 = vst [vmem:[#allocation3 + $0x40] sm:$0x3] %v979
      %v1014 = vld [vmem:[#allocation3] sm:$0xf]
      %v1015 = vld [vmem:[#allocation3 + $0x4] sm:$0xf]
      %v1016 = vld [vmem:[#allocation3 + $0x8] sm:$0xf]
      %v1017 = vld [vmem:[#allocation3 + $0xc] sm:$0xf]
      %v1018 = vld [vmem:[#allocation3 + $0x10] sm:$0xf]
      %v1019 = vld [vmem:[#allocation3 + $0x14] sm:$0xf]
      %v1020 = vld [vmem:[#allocation3 + $0x18] sm:$0xf]
      %v1021 = vld [vmem:[#allocation3 + $0x1c] sm:$0xf]
      %v1022 = vld [vmem:[#allocation3 + $0x20] sm:$0xf]
      %v1023 = vld [vmem:[#allocation3 + $0x24] sm:$0xf]
      %v1024 = vld [vmem:[#allocation3 + $0x28] sm:$0xf]
      %v1025 = vld [vmem:[#allocation3 + $0x2c] sm:$0xf]
      %v1026 = vld [vmem:[#allocation3 + $0x30] sm:$0xf]
      %v1027 = vld [vmem:[#allocation3 + $0x34] sm:$0xf]
      %v1028 = vld [vmem:[#allocation3 + $0x38] sm:$0xf]
      %v1029 = vld [vmem:[#allocation3 + $0x3c] sm:$0xf]
      %v1030 = vld [vmem:[#allocation3] sm:$0xe]
      %v1031 = vld [vmem:[#allocation3 + $0x40] sm:$0x1]
      %v1032 = vld [vmem:[#allocation3] sm:$0xc]
      %v1033 = vld [vmem:[#allocation3 + $0x40] sm:$0x3]
      %v1050 = vunpack.c.l.b16 %v1014
      %v1051 = vunpack.c.l.b16 %v1015
      %v1052 = vunpack.c.l.b16 %v1016
      %v1053 = vunpack.c.l.b16 %v1017
      %v1054 = vunpack.c.l.b16 %v1018
      %v1055 = vunpack.c.l.b16 %v1019
      %v1056 = vunpack.c.l.b16 %v1020
      %v1057 = vunpack.c.l.b16 %v1021
      %v1058 = vunpack.c.l.b16 %v1022
      %v1059 = vunpack.c.l.b16 %v1023
      %v1060 = vunpack.c.l.b16 %v1024
      %v1061 = vunpack.c.l.b16 %v1025
      %v1062 = vunpack.c.l.b16 %v1026
      %v1063 = vunpack.c.l.b16 %v1027
      %v1064 = vunpack.c.l.b16 %v1028
      %v1065 = vunpack.c.l.b16 %v1029
      %v1066 = vpack.c.b16 %v1051, %v1050
      %v1067 = vpack.c.b16 %v1053, %v1052
      %v1068 = vpack.c.b16 %v1055, %v1054
      %v1069 = vpack.c.b16 %v1057, %v1056
      %v1070 = vpack.c.b16 %v1059, %v1058
      %v1071 = vpack.c.b16 %v1061, %v1060
      %v1072 = vpack.c.b16 %v1063, %v1062
      %v1073 = vpack.c.b16 %v1065, %v1064
      %v1084 = vunpack.c.l.b16 %v1030
      %v1085 = vunpack.c.l.b16 %v1031
      %v1086 = vpack.c.b16 %v1051, %v1084
      %v1087 = vpack.c.b16 %v1085, %v1085
      %v1088 = vrot.slane %v1086, 1
      %v1089 = vrot.slane %v1067, 1
      %v1090 = vsel %vm417, %v1088, %v1089
      %v1091 = vrot.slane %v1068, 1
      %v1092 = vsel %vm417, %v1089, %v1091
      %v1093 = vrot.slane %v1069, 1
      %v1094 = vsel %vm417, %v1091, %v1093
      %v1095 = vrot.slane %v1070, 1
      %v1096 = vsel %vm417, %v1093, %v1095
      %v1097 = vrot.slane %v1071, 1
      %v1098 = vsel %vm417, %v1095, %v1097
      %v1099 = vrot.slane %v1072, 1
      %v1100 = vsel %vm417, %v1097, %v1099
      %v1101 = vrot.slane %v1073, 1
      %v1102 = vsel %vm417, %v1099, %v1101
      %v1103 = vrot.slane %v1087, 1
      %v1104 = vsel %vm417, %v1101, %v1103
      %v1115 = vunpack.c.l.b16 %v1032
      %v1116 = vunpack.c.l.b16 %v1033
      %v1117 = vpack.c.b16 %v1051, %v1115
      %v1118 = vpack.c.b16 %v1116, %v1116
      %v1119 = vrot.slane %v1117, 2
      %v1120 = vrot.slane %v1067, 2
      %v1121 = vsel %vm449, %v1119, %v1120
      %v1122 = vrot.slane %v1068, 2
      %v1123 = vsel %vm449, %v1120, %v1122
      %v1124 = vrot.slane %v1069, 2
      %v1125 = vsel %vm449, %v1122, %v1124
      %v1126 = vrot.slane %v1070, 2
      %v1127 = vsel %vm449, %v1124, %v1126
      %v1128 = vrot.slane %v1071, 2
      %v1129 = vsel %vm449, %v1126, %v1128
      %v1130 = vrot.slane %v1072, 2
      %v1131 = vsel %vm449, %v1128, %v1130
      %v1132 = vrot.slane %v1073, 2
      %v1133 = vsel %vm449, %v1130, %v1132
      %v1134 = vrot.slane %v1118, 2
      %v1135 = vsel %vm449, %v1132, %v1134
      %v1144 = vld [vmem:[%s3] sm:$0xf]
      %v1145 = vld [vmem:[%s3 + $0x4] sm:$0xf]
      %v1146 = vld [vmem:[%s3 + $0x8] sm:$0xf]
      %v1147 = vld [vmem:[%s3 + $0xc] sm:$0xf]
      %v1148 = vld [vmem:[%s3 + $0x10] sm:$0xf]
      %v1149 = vld [vmem:[%s3 + $0x14] sm:$0xf]
      %v1150 = vld [vmem:[%s3 + $0x18] sm:$0xf]
      %v1151 = vld [vmem:[%s3 + $0x1c] sm:$0xf]
      %v1152 = vld [vmem:[%s3 + $0x20] sm:$0xf]
      %v1153 = vld [vmem:[%s3 + $0x24] sm:$0xf]
      %v1154 = vld [vmem:[%s3 + $0x28] sm:$0xf]
      %v1155 = vld [vmem:[%s3 + $0x2c] sm:$0xf]
      %v1156 = vld [vmem:[%s3 + $0x30] sm:$0xf]
      %v1157 = vld [vmem:[%s3 + $0x34] sm:$0xf]
      %v1158 = vld [vmem:[%s3 + $0x38] sm:$0xf]
      %v1159 = vld [vmem:[%s3 + $0x3c] sm:$0xf]
      %v1160 = vld [vmem:[%s3 + $0x40] sm:$0xf]
      %v1161 = vld [vmem:[%s3 + $0x44] sm:$0xf]
      %v1162 = vld [vmem:[%s3 + $0x48] sm:$0xf]
      %v1163 = vld [vmem:[%s3 + $0x4c] sm:$0xf]
      %v1164 = vld [vmem:[%s3 + $0x50] sm:$0xf]
      %v1165 = vld [vmem:[%s3 + $0x54] sm:$0xf]
      %v1166 = vld [vmem:[%s3 + $0x58] sm:$0xf]
      %v1167 = vld [vmem:[%s3 + $0x5c] sm:$0xf]
      %v1168 = vld [vmem:[%s3 + $0x60] sm:$0xf]
      %v1169 = vld [vmem:[%s3 + $0x64] sm:$0xf]
      %v1170 = vld [vmem:[%s3 + $0x68] sm:$0xf]
      %v1171 = vld [vmem:[%s3 + $0x6c] sm:$0xf]
      %v1172 = vld [vmem:[%s3 + $0x70] sm:$0xf]
      %v1173 = vld [vmem:[%s3 + $0x74] sm:$0xf]
      %v1174 = vld [vmem:[%s3 + $0x78] sm:$0xf]
      %v1175 = vld [vmem:[%s3 + $0x7c] sm:$0xf]
      %v1176 = vld [vmem:[%s3 + $0x80] sm:$0xf]
      %v1177 = vld [vmem:[%s3 + $0x84] sm:$0xf]
      %v1178 = vld [vmem:[%s3 + $0x88] sm:$0xf]
      %v1179 = vld [vmem:[%s3 + $0x8c] sm:$0xf]
      %v1180 = vld [vmem:[%s3 + $0x90] sm:$0xf]
      %v1181 = vld [vmem:[%s3 + $0x94] sm:$0xf]
      %v1182 = vld [vmem:[%s3 + $0x98] sm:$0xf]
      %v1183 = vld [vmem:[%s3 + $0x9c] sm:$0xf]
      %v1184 = vld [vmem:[%s3 + $0xa0] sm:$0xf]
      %v1185 = vld [vmem:[%s3 + $0xa4] sm:$0xf]
      %v1186 = vld [vmem:[%s3 + $0xa8] sm:$0xf]
      %v1187 = vld [vmem:[%s3 + $0xac] sm:$0xf]
      %v1188 = vld [vmem:[%s3 + $0xb0] sm:$0xf]
      %v1189 = vld [vmem:[%s3 + $0xb4] sm:$0xf]
      %v1190 = vld [vmem:[%s3 + $0xb8] sm:$0xf]
      %v1191 = vld [vmem:[%s3 + $0xbc] sm:$0xf]
      %v1192 = vld [vmem:[%s4] sm:$0x1]
      %v1194 = vlaneseq
      %v1195 = vshrl.u32 %v1194, 7
      %v1196 = vsub.s32 0, %v1195
      %v1197 = vrot.slane %v1192, %v1196
      %v1247 = vunpack.c.l.b16 %v1144
      %v1248 = vunpack.c.l.b16 %v1145
      %v1249 = vunpack.c.l.b16 %v1146
      %v1250 = vunpack.c.l.b16 %v1147
      %v1251 = vunpack.c.l.b16 %v1148
      %v1252 = vunpack.c.l.b16 %v1149
      %v1253 = vunpack.c.l.b16 %v1150
      %v1254 = vunpack.c.l.b16 %v1151
      %v1255 = vunpack.c.l.b16 %v1152
      %v1256 = vunpack.c.l.b16 %v1153
      %v1257 = vunpack.c.l.b16 %v1154
      %v1258 = vunpack.c.l.b16 %v1155
      %v1259 = vunpack.c.l.b16 %v1156
      %v1260 = vunpack.c.l.b16 %v1157
      %v1261 = vunpack.c.l.b16 %v1158
      %v1262 = vunpack.c.l.b16 %v1159
      %v1263 = vunpack.c.l.b16 %v1160
      %v1264 = vunpack.c.l.b16 %v1161
      %v1265 = vunpack.c.l.b16 %v1162
      %v1266 = vunpack.c.l.b16 %v1163
      %v1267 = vunpack.c.l.b16 %v1164
      %v1268 = vunpack.c.l.b16 %v1165
      %v1269 = vunpack.c.l.b16 %v1166
      %v1270 = vunpack.c.l.b16 %v1167
      %v1271 = vunpack.c.l.b16 %v1168
      %v1272 = vunpack.c.l.b16 %v1169
      %v1273 = vunpack.c.l.b16 %v1170
      %v1274 = vunpack.c.l.b16 %v1171
      %v1275 = vunpack.c.l.b16 %v1172
      %v1276 = vunpack.c.l.b16 %v1173
      %v1277 = vunpack.c.l.b16 %v1174
      %v1278 = vunpack.c.l.b16 %v1175
      %v1279 = vunpack.c.l.b16 %v1176
      %v1280 = vunpack.c.l.b16 %v1177
      %v1281 = vunpack.c.l.b16 %v1178
      %v1282 = vunpack.c.l.b16 %v1179
      %v1283 = vunpack.c.l.b16 %v1180
      %v1284 = vunpack.c.l.b16 %v1181
      %v1285 = vunpack.c.l.b16 %v1182
      %v1286 = vunpack.c.l.b16 %v1183
      %v1287 = vunpack.c.l.b16 %v1184
      %v1288 = vunpack.c.l.b16 %v1185
      %v1289 = vunpack.c.l.b16 %v1186
      %v1290 = vunpack.c.l.b16 %v1187
      %v1291 = vunpack.c.l.b16 %v1188
      %v1292 = vunpack.c.l.b16 %v1189
      %v1293 = vunpack.c.l.b16 %v1190
      %v1294 = vunpack.c.l.b16 %v1191
      %v1295 = vpack.c.b16 %v1248, %v1247
      %v1296 = vpack.c.b16 %v1250, %v1249
      %v1297 = vpack.c.b16 %v1252, %v1251
      %v1298 = vpack.c.b16 %v1254, %v1253
      %v1299 = vpack.c.b16 %v1256, %v1255
      %v1300 = vpack.c.b16 %v1258, %v1257
      %v1301 = vpack.c.b16 %v1260, %v1259
      %v1302 = vpack.c.b16 %v1262, %v1261
      %v1303 = vpack.c.b16 %v1264, %v1263
      %v1304 = vpack.c.b16 %v1266, %v1265
      %v1305 = vpack.c.b16 %v1268, %v1267
      %v1306 = vpack.c.b16 %v1270, %v1269
      %v1307 = vpack.c.b16 %v1272, %v1271
      %v1308 = vpack.c.b16 %v1274, %v1273
      %v1309 = vpack.c.b16 %v1276, %v1275
      %v1310 = vpack.c.b16 %v1278, %v1277
      %v1311 = vpack.c.b16 %v1280, %v1279
      %v1312 = vpack.c.b16 %v1282, %v1281
      %v1313 = vpack.c.b16 %v1284, %v1283
      %v1314 = vpack.c.b16 %v1286, %v1285
      %v1315 = vpack.c.b16 %v1288, %v1287
      %v1316 = vpack.c.b16 %v1290, %v1289
      %v1317 = vpack.c.b16 %v1292, %v1291
      %v1318 = vpack.c.b16 %v1294, %v1293
      %1343 = vmatprep.subr.bf16.mxu0 0
      %1344 = vmatpush1.bf16.msra.mxu0 %v1295
      %1345 = vmatprep.subr.bf16.mxu0 0
      %1346 = vmatpush1.bf16.msra.mxu0 %v1296
      %1347 = vmatprep.subr.bf16.mxu0 0
      %1348 = vmatpush1.bf16.msra.mxu0 %v1297
      %1349 = vmatprep.subr.bf16.mxu0 0
      %1350 = vmatpush1.bf16.msra.mxu0 %v1298
      %1351 = vmatprep.subr.bf16.mxu0 0
      %1352 = vmatpush1.bf16.msra.mxu0 %v1299
      %1353 = vmatprep.subr.bf16.mxu0 0
      %1354 = vmatpush1.bf16.msra.mxu0 %v1300
      %1355 = vmatprep.subr.bf16.mxu0 0
      %1356 = vmatpush1.bf16.msra.mxu0 %v1301
      %1357 = vmatprep.subr.bf16.mxu0 0
      %1358 = vmatpush1.bf16.msra.mxu0 %v1302
      %1359 = vmatprep.subr.bf16.mxu0 0
      %1360 = vmatpush1.bf16.msra.mxu0 %v1303
      %1361 = vmatprep.subr.bf16.mxu0 0
      %1362 = vmatpush1.bf16.msra.mxu0 %v1304
      %1363 = vmatprep.subr.bf16.mxu0 0
      %1364 = vmatpush1.bf16.msra.mxu0 %v1305
      %1365 = vmatprep.subr.bf16.mxu0 0
      %1366 = vmatpush1.bf16.msra.mxu0 %v1306
      %1367 = vmatprep.subr.bf16.mxu0 0
      %1368 = vmatpush1.bf16.msra.mxu0 %v1307
      %1369 = vmatprep.subr.bf16.mxu0 0
      %1370 = vmatpush1.bf16.msra.mxu0 %v1308
      %1371 = vmatprep.subr.bf16.mxu0 0
      %1372 = vmatpush1.bf16.msra.mxu0 %v1309
      %1373 = vmatprep.subr.bf16.mxu0 0
      %1374 = vmatpush1.bf16.msra.mxu0 %v1310
      %1375 = vmatprep.mubr.bf16.mxu0 %v1090
      %1376 = vmatmul.mubr.bf16.gmra.mrb[0].mxu0 %v1066
      %v1377 = vpop.f32.mrb[0].mxu0
      %v1378 = vadd.f32 %v1197, %v1377
      %v1379 = vpop.f32.mrb[0].mxu0
      %v1380 = vpop.f32.mrb[0].mxu0
      %v1381 = vadd.f32 %v1197, %v1380
      %v1382 = vpop.f32.mrb[0].mxu0
      %1383 = vmatprep.mubr.bf16.mxu0 %v1092
      %1384 = vmatmul.mubr.bf16.gmra.mrb[0].mxu0 %v1067
      %v1385 = vpop.f32.mrb[0].mxu0
      %v1386 = vadd.f32 %v1197, %v1385
      %v1387 = vpop.f32.mrb[0].mxu0
      %v1388 = vpop.f32.mrb[0].mxu0
      %v1389 = vadd.f32 %v1197, %v1388
      %v1390 = vpop.f32.mrb[0].mxu0
      %1391 = vmatprep.mubr.bf16.mxu0 %v1094
      %1392 = vmatmul.mubr.bf16.gmra.mrb[0].mxu0 %v1068
      %v1393 = vpop.f32.mrb[0].mxu0
      %v1394 = vadd.f32 %v1197, %v1393
      %v1395 = vpop.f32.mrb[0].mxu0
      %v1396 = vpop.f32.mrb[0].mxu0
      %v1397 = vadd.f32 %v1197, %v1396
      %v1398 = vpop.f32.mrb[0].mxu0
      %1399 = vmatprep.mubr.bf16.mxu0 %v1096
      %1400 = vmatmul.mubr.bf16.gmra.mrb[0].mxu0 %v1069
      %v1401 = vpop.f32.mrb[0].mxu0
      %v1402 = vadd.f32 %v1197, %v1401
      %v1403 = vpop.f32.mrb[0].mxu0
      %v1404 = vpop.f32.mrb[0].mxu0
      %v1405 = vadd.f32 %v1197, %v1404
      %v1406 = vpop.f32.mrb[0].mxu0
      %1407 = vmatprep.mubr.bf16.mxu0 %v1098
      %1408 = vmatmul.mubr.bf16.gmra.mrb[0].mxu0 %v1070
      %v1409 = vpop.f32.mrb[0].mxu0
      %v1410 = vadd.f32 %v1197, %v1409
      %v1411 = vpop.f32.mrb[0].mxu0
      %v1412 = vpop.f32.mrb[0].mxu0
      %v1413 = vadd.f32 %v1197, %v1412
      %v1414 = vpop.f32.mrb[0].mxu0
      %1415 = vmatprep.mubr.bf16.mxu0 %v1100
      %1416 = vmatmul.mubr.bf16.gmra.mrb[0].mxu0 %v1071
      %v1417 = vpop.f32.mrb[0].mxu0
      %v1418 = vadd.f32 %v1197, %v1417
      %v1419 = vpop.f32.mrb[0].mxu0
      %v1420 = vpop.f32.mrb[0].mxu0
      %v1421 = vadd.f32 %v1197, %v1420
      %v1422 = vpop.f32.mrb[0].mxu0
      %1423 = vmatprep.mubr.bf16.mxu0 %v1102
      %1424 = vmatmul.mubr.bf16.gmra.mrb[0].mxu0 %v1072
      %v1425 = vpop.f32.mrb[0].mxu0
      %v1426 = vadd.f32 %v1197, %v1425
      %v1427 = vpop.f32.mrb[0].mxu0
      %v1428 = vpop.f32.mrb[0].mxu0
      %v1429 = vadd.f32 %v1197, %v1428
      %v1430 = vpop.f32.mrb[0].mxu0
      %1431 = vmatprep.mubr.bf16.mxu0 %v1104
      %1432 = vmatmul.mubr.bf16.gmra.mrb[0].mxu0 %v1073
      %v1433 = vpop.f32.mrb[0].mxu0
      %v1434 = vadd.f32 %v1197, %v1433
      %v1435 = vpop.f32.mrb[0].mxu0
      %v1436 = vpop.f32.mrb[0].mxu0
      %v1437 = vadd.f32 %v1197, %v1436
      %v1438 = vpop.f32.mrb[0].mxu0
      %1439 = vdwg.mxu0
      %1440 = vmatprep.subr.bf16.mxu0 0
      %1441 = vmatpush1.bf16.msra.mxu0 %v1311
      %1442 = vmatprep.subr.bf16.mxu0 0
      %1443 = vmatpush1.bf16.msra.mxu0 %v1312
      %1444 = vmatprep.subr.bf16.mxu0 0
      %1445 = vmatpush1.bf16.msra.mxu0 %v1313
      %1446 = vmatprep.subr.bf16.mxu0 0
      %1447 = vmatpush1.bf16.msra.mxu0 %v1314
      %1448 = vmatprep.subr.bf16.mxu0 0
      %1449 = vmatpush1.bf16.msra.mxu0 %v1315
      %1450 = vmatprep.subr.bf16.mxu0 0
      %1451 = vmatpush1.bf16.msra.mxu0 %v1316
      %1452 = vmatprep.subr.bf16.mxu0 0
      %1453 = vmatpush1.bf16.msra.mxu0 %v1317
      %1454 = vmatprep.subr.bf16.mxu0 0
      %1455 = vmatpush1.bf16.msra.mxu0 %v1318
      %1456 = vmatprep.subr.bf16.mxu0 0
      %1457 = vmatpush1.bf16.msra.mxu0 0
      %1458 = vmatprep.subr.bf16.mxu0 0
      %1459 = vmatpush1.bf16.msra.mxu0 0
      %1460 = vmatprep.subr.bf16.mxu0 0
      %1461 = vmatpush1.bf16.msra.mxu0 0
      %1462 = vmatprep.subr.bf16.mxu0 0
      %1463 = vmatpush1.bf16.msra.mxu0 0
      %1464 = vmatprep.subr.bf16.mxu0 0
      %1465 = vmatpush1.bf16.msra.mxu0 0
      %1466 = vmatprep.subr.bf16.mxu0 0
      %1467 = vmatpush1.bf16.msra.mxu0 0
      %1468 = vmatprep.subr.bf16.mxu0 0
      %1469 = vmatpush1.bf16.msra.mxu0 0
      %1470 = vmatprep.subr.bf16.mxu0 0
      %1471 = vmatpush1.bf16.msra.mxu0 0
      %1472 = vmatprep.mubr.bf16.mxu0 0
      %1473 = vmatmul.mubr.bf16.gmra.mrb[0].mxu0 %v1121
      %v1474 = vpop.f32.mrb[0].mxu0
      %v1475 = vadd.f32 %v1378, %v1474
      %v1476 = vpop.f32.mrb[0].mxu0
      %v1477 = vpop.f32.mrb[0].mxu0
      %v1478 = vadd.f32 %v1381, %v1477
      %v1479 = vpop.f32.mrb[0].mxu0
      %1480 = vmatprep.mubr.bf16.mxu0 0
      %1481 = vmatmul.mubr.bf16.gmra.mrb[0].mxu0 %v1123
      %v1482 = vpop.f32.mrb[0].mxu0
      %v1483 = vadd.f32 %v1386, %v1482
      %v1484 = vpop.f32.mrb[0].mxu0
      %v1485 = vpop.f32.mrb[0].mxu0
      %v1486 = vadd.f32 %v1389, %v1485
      %v1487 = vpop.f32.mrb[0].mxu0
      %1488 = vmatprep.mubr.bf16.mxu0 0
      %1489 = vmatmul.mubr.bf16.gmra.mrb[0].mxu0 %v1125
      %v1490 = vpop.f32.mrb[0].mxu0
      %v1491 = vadd.f32 %v1394, %v1490
      %v1492 = vpop.f32.mrb[0].mxu0
      %v1493 = vpop.f32.mrb[0].mxu0
      %v1494 = vadd.f32 %v1397, %v1493
      %v1495 = vpop.f32.mrb[0].mxu0
      %1496 = vmatprep.mubr.bf16.mxu0 0
      %1497 = vmatmul.mubr.bf16.gmra.mrb[0].mxu0 %v1127
      %v1498 = vpop.f32.mrb[0].mxu0
      %v1499 = vadd.f32 %v1402, %v1498
      %v1500 = vpop.f32.mrb[0].mxu0
      %v1501 = vpop.f32.mrb[0].mxu0
      %v1502 = vadd.f32 %v1405, %v1501
      %v1503 = vpop.f32.mrb[0].mxu0
      %1504 = vmatprep.mubr.bf16.mxu0 0
      %1505 = vmatmul.mubr.bf16.gmra.mrb[0].mxu0 %v1129
      %v1506 = vpop.f32.mrb[0].mxu0
      %v1507 = vadd.f32 %v1410, %v1506
      %v1508 = vpop.f32.mrb[0].mxu0
      %v1509 = vpop.f32.mrb[0].mxu0
      %v1510 = vadd.f32 %v1413, %v1509
      %v1511 = vpop.f32.mrb[0].mxu0
      %1512 = vmatprep.mubr.bf16.mxu0 0
      %1513 = vmatmul.mubr.bf16.gmra.mrb[0].mxu0 %v1131
      %v1514 = vpop.f32.mrb[0].mxu0
      %v1515 = vadd.f32 %v1418, %v1514
      %v1516 = vpop.f32.mrb[0].mxu0
      %v1517 = vpop.f32.mrb[0].mxu0
      %v1518 = vadd.f32 %v1421, %v1517
      %v1519 = vpop.f32.mrb[0].mxu0
      %1520 = vmatprep.mubr.bf16.mxu0 0
      %1521 = vmatmul.mubr.bf16.gmra.mrb[0].mxu0 %v1133
      %v1522 = vpop.f32.mrb[0].mxu0
      %v1523 = vadd.f32 %v1426, %v1522
      %v1524 = vpop.f32.mrb[0].mxu0
      %v1525 = vpop.f32.mrb[0].mxu0
      %v1526 = vadd.f32 %v1429, %v1525
      %v1527 = vpop.f32.mrb[0].mxu0
      %1528 = vmatprep.mubr.bf16.mxu0 0
      %1529 = vmatmul.mubr.bf16.gmra.mrb[0].mxu0 %v1135
      %v1530 = vpop.f32.mrb[0].mxu0
      %v1531 = vadd.f32 %v1434, %v1530
      %v1532 = vpop.f32.mrb[0].mxu0
      %v1533 = vpop.f32.mrb[0].mxu0
      %v1534 = vadd.f32 %v1437, %v1533
      %v1535 = vpop.f32.mrb[0].mxu0
      %1536 = vdwg.mxu0
      %v1537 = vmax.f32 %v1475, 0.0
      %v1538 = vmax.f32 %v1478, 0.0
      %v1539 = vmax.f32 %v1483, 0.0
      %v1540 = vmax.f32 %v1486, 0.0
      %v1541 = vmax.f32 %v1491, 0.0
      %v1542 = vmax.f32 %v1494, 0.0
      %v1543 = vmax.f32 %v1499, 0.0
      %v1544 = vmax.f32 %v1502, 0.0
      %v1545 = vmax.f32 %v1507, 0.0
      %v1546 = vmax.f32 %v1510, 0.0
      %v1547 = vmax.f32 %v1515, 0.0
      %v1548 = vmax.f32 %v1518, 0.0
      %v1549 = vmax.f32 %v1523, 0.0
      %v1550 = vmax.f32 %v1526, 0.0
      %v1551 = vmax.f32 %v1531, 0.0
      %v1552 = vmax.f32 %v1534, 0.0
      %v1553 = vld [vmem:[%s219] sm:$0xf]
      %v1554 = vld [vmem:[%s219 + $0x4] sm:$0xf]
      %v1555 = vld [vmem:[%s219 + $0x8] sm:$0xf]
      %v1556 = vld [vmem:[%s219 + $0xc] sm:$0xf]
      %v1557 = vld [vmem:[%s219 + $0x10] sm:$0xf]
      %v1558 = vld [vmem:[%s219 + $0x14] sm:$0xf]
      %v1559 = vld [vmem:[%s219 + $0x18] sm:$0xf]
      %v1560 = vld [vmem:[%s219 + $0x1c] sm:$0xf]
      %v1561 = vld [vmem:[%s219 + $0x20] sm:$0xf]
      %v1562 = vld [vmem:[%s219 + $0x24] sm:$0xf]
      %v1563 = vld [vmem:[%s219 + $0x28] sm:$0xf]
      %v1564 = vld [vmem:[%s219 + $0x2c] sm:$0xf]
      %v1565 = vld [vmem:[%s219 + $0x30] sm:$0xf]
      %v1566 = vld [vmem:[%s219 + $0x34] sm:$0xf]
      %v1567 = vld [vmem:[%s219 + $0x38] sm:$0xf]
      %v1568 = vld [vmem:[%s219 + $0x3c] sm:$0xf]
      %v1569 = vunpack.c.l.bf16 %v1553
      %v1570 = vunpack.c.l.bf16 %v1554
      %v1571 = vunpack.c.l.bf16 %v1555
      %v1572 = vunpack.c.l.bf16 %v1556
      %v1573 = vunpack.c.l.bf16 %v1557
      %v1574 = vunpack.c.l.bf16 %v1558
      %v1575 = vunpack.c.l.bf16 %v1559
      %v1576 = vunpack.c.l.bf16 %v1560
      %v1577 = vunpack.c.l.bf16 %v1561
      %v1578 = vunpack.c.l.bf16 %v1562
      %v1579 = vunpack.c.l.bf16 %v1563
      %v1580 = vunpack.c.l.bf16 %v1564
      %v1581 = vunpack.c.l.bf16 %v1565
      %v1582 = vunpack.c.l.bf16 %v1566
      %v1583 = vunpack.c.l.bf16 %v1567
      %v1584 = vunpack.c.l.bf16 %v1568
      %v1585 = vadd.f32 %v1537, %v1569
      %v1586 = vadd.f32 %v1538, %v1570
      %v1587 = vadd.f32 %v1539, %v1571
      %v1588 = vadd.f32 %v1540, %v1572
      %v1589 = vadd.f32 %v1541, %v1573
      %v1590 = vadd.f32 %v1542, %v1574
      %v1591 = vadd.f32 %v1543, %v1575
      %v1592 = vadd.f32 %v1544, %v1576
      %v1593 = vadd.f32 %v1545, %v1577
      %v1594 = vadd.f32 %v1546, %v1578
      %v1595 = vadd.f32 %v1547, %v1579
      %v1596 = vadd.f32 %v1548, %v1580
      %v1597 = vadd.f32 %v1549, %v1581
      %v1598 = vadd.f32 %v1550, %v1582
      %v1599 = vadd.f32 %v1551, %v1583
      %v1600 = vadd.f32 %v1552, %v1584
      %v1601 = vmax.f32 %v1585, 0.0
      %v1602 = vmax.f32 %v1586, 0.0
      %v1603 = vmax.f32 %v1587, 0.0
      %v1604 = vmax.f32 %v1588, 0.0
      %v1605 = vmax.f32 %v1589, 0.0
      %v1606 = vmax.f32 %v1590, 0.0
      %v1607 = vmax.f32 %v1591, 0.0
      %v1608 = vmax.f32 %v1592, 0.0
      %v1609 = vmax.f32 %v1593, 0.0
      %v1610 = vmax.f32 %v1594, 0.0
      %v1611 = vmax.f32 %v1595, 0.0
      %v1612 = vmax.f32 %v1596, 0.0
      %v1613 = vmax.f32 %v1597, 0.0
      %v1614 = vmax.f32 %v1598, 0.0
      %v1615 = vmax.f32 %v1599, 0.0
      %v1616 = vmax.f32 %v1600, 0.0
      %v1617 = vpack.c.bf16 %v1602, %v1601
      %v1618 = vpack.c.bf16 %v1604, %v1603
      %v1619 = vpack.c.bf16 %v1606, %v1605
      %v1620 = vpack.c.bf16 %v1608, %v1607
      %v1621 = vpack.c.bf16 %v1610, %v1609
      %v1622 = vpack.c.bf16 %v1612, %v1611
      %v1623 = vpack.c.bf16 %v1614, %v1613
      %v1624 = vpack.c.bf16 %v1616, %v1615
      %v1633 = vunpack.c.l.b16 %v1617
      %v1634 = vunpack.c.h.b16 %v1617
      %v1635 = vunpack.c.l.b16 %v1618
      %v1636 = vunpack.c.h.b16 %v1618
      %v1637 = vunpack.c.l.b16 %v1619
      %v1638 = vunpack.c.h.b16 %v1619
      %v1639 = vunpack.c.l.b16 %v1620
      %v1640 = vunpack.c.h.b16 %v1620
      %v1641 = vunpack.c.l.b16 %v1621
      %v1642 = vunpack.c.h.b16 %v1621
      %v1643 = vunpack.c.l.b16 %v1622
      %v1644 = vunpack.c.h.b16 %v1622
      %v1645 = vunpack.c.l.b16 %v1623
      %v1646 = vunpack.c.h.b16 %v1623
      %v1647 = vunpack.c.l.b16 %v1624
      %v1648 = vunpack.c.h.b16 %v1624
      %v1649 = vpack.c.b16 %v1633, %v1633
      %v1650 = vpack.c.b16 %v1634, %v1634
      %v1651 = vpack.c.b16 %v1635, %v1635
      %v1652 = vpack.c.b16 %v1636, %v1636
      %v1653 = vpack.c.b16 %v1637, %v1637
      %v1654 = vpack.c.b16 %v1638, %v1638
      %v1655 = vpack.c.b16 %v1639, %v1639
      %v1656 = vpack.c.b16 %v1640, %v1640
      %v1657 = vpack.c.b16 %v1641, %v1641
      %v1658 = vpack.c.b16 %v1642, %v1642
      %v1659 = vpack.c.b16 %v1643, %v1643
      %v1660 = vpack.c.b16 %v1644, %v1644
      %v1661 = vpack.c.b16 %v1645, %v1645
      %v1662 = vpack.c.b16 %v1646, %v1646
      %v1663 = vpack.c.b16 %v1647, %v1647
      %v1664 = vpack.c.b16 %v1648, %v1648
      %1681 = vst [vmem:[%s224] sm:$0xf] %v1649
      %1682 = vst [vmem:[%s224 + $0x4] sm:$0xf] %v1650
      %1683 = vst [vmem:[%s224 + $0x8] sm:$0xf] %v1651
      %1684 = vst [vmem:[%s224 + $0xc] sm:$0xf] %v1652
      %1685 = vst [vmem:[%s224 + $0x10] sm:$0xf] %v1653
      %1686 = vst [vmem:[%s224 + $0x14] sm:$0xf] %v1654
      %1687 = vst [vmem:[%s224 + $0x18] sm:$0xf] %v1655
      %1688 = vst [vmem:[%s224 + $0x1c] sm:$0xf] %v1656
      %1689 = vst [vmem:[%s224 + $0x20] sm:$0xf] %v1657
      %1690 = vst [vmem:[%s224 + $0x24] sm:$0xf] %v1658
      %1691 = vst [vmem:[%s224 + $0x28] sm:$0xf] %v1659
      %1692 = vst [vmem:[%s224 + $0x2c] sm:$0xf] %v1660
      %1693 = vst [vmem:[%s224 + $0x30] sm:$0xf] %v1661
      %1694 = vst [vmem:[%s224 + $0x34] sm:$0xf] %v1662
      %1695 = vst [vmem:[%s224 + $0x38] sm:$0xf] %v1663
      %1696 = vst [vmem:[%s224 + $0x3c] sm:$0xf] %v1664
      %p1697 = scmp.lt.s32.totalorder %s16, 1
      %s1698 = scalar_select %p1697, %s16, 1
      %s1699 = smul.addr %s1698, 16
      %s1700 = smul.addr %s1699, 4
      %s1701 = scalar_lea.vmem %s5, %s1700
      // Predicated region
      $region41: #{tcn_forward.4} parent=39 // pred_check
        %p1702 = pneg %p144
      $region42: #{tcn_forward.4} parent=39 // pred_check_branch
        %1704 = sbr.rel (%p1702) target = $region44
      $region43: #{tcn_forward.4} parent=39 // pred_region
        _
      $region44: #{tcn_forward.4} parent=39 // pred_fallthru
        _
    $region40: #{tcn_forward.4} parent=5 // pred_fallthru
      _
    %p1705 = scmp.le.s32.totalorder 2, %s11
    // Predicated region
    $region45: #{tcn_forward.4} parent=5 // pred_check
      %p1706 = pneg %p1705
    $region46: #{tcn_forward.4} parent=5 // pred_check_branch
      %1708 = sbr.rel (%p1706) target = $region48
    $region47: #{tcn_forward.4} parent=5 // pred_region
      %s1709 = ssub.s32 %s11, 2
      // Predicated region
      $region49: #{tcn_forward.4} parent=47 // pred_check
        %p1710 = pneg %p150
      $region50: #{tcn_forward.4} parent=47 // pred_check_branch
        %1712 = sbr.rel (%p1710) target = $region52
      $region51: #{tcn_forward.4} parent=47 // pred_region
        %p1713 = scmp.lt.s32.totalorder %s17, 1
        %s1714 = scalar_select %p1713, %s17, 1
        %s1715 = smul.addr %s1714, 16
        %s1716 = smul.addr %s1715, 4
        %s1717 = scalar_lea.vmem %s5, %s1716
      $region52: #{tcn_forward.4} parent=47 // pred_fallthru
        _
    $region48: #{tcn_forward.4} parent=5 // pred_fallthru
      _
  $region6: #{tcn_forward.4} parent=0 // loop_footer
    %s15 = sadd.s32 1, %s11
  $region7: #{tcn_forward.4} parent=0 // loop_footer_branch
    %10 = sbr.rel target = $region3
  $region8: #{tcn_forward.4} parent=0 // loop_exit
    _

// kernel: tcn_forward.5
$region0: #{tcn_forward.5}
  #allocation0 [shape = 'u32[]', space=smem, size = 0x4, offset = 0x4, fixed_abs, tag = 'smem constant byte address 0x4 - core index']
  #allocation1 [shape = 'u32[144,128]{1,0:T(1,128)}', space=vmem, size = 0x12000, scoped, tag = 'internal scratch']
  #allocation2 [shape = 'bf16[136,128]{1,0:T(8,128)(2,1)}', space=vmem, size = 0x8800, scoped, tag = 'scratch operand']
  #allocation3 [shape = 'bf16[136,128]{1,0:T(8,128)(2,1)}', space=vmem, size = 0x8800, scoped, tag = 'scratch operand']
  %s0 = inlined_call_operand.vmem [shape: bf16[2,128,128], index: 0, kind: input, shape index: {}]
  %s1 = inlined_call_operand.vmem [shape: bf16[384,128], index: 1, kind: input, shape index: {}]
  %s2 = inlined_call_operand.vmem [shape: f32[1,128], index: 2, kind: input, shape index: {}]
  %s3 = inlined_call_operand.vmem [shape: bf16[384,128], index: 3, kind: input, shape index: {}]
  %s4 = inlined_call_operand.vmem [shape: f32[1,128], index: 4, kind: input, shape index: {}]
  %s5 = inlined_call_operand.vmem [shape: bf16[2,128,128], index: 5, kind: output, shape index: {}]
  %s6 = sld [smem:[#allocation0]]
  $region53: #{tcn_forward.5} parent=0
    _
  %s8 = ssub.s32 1, %s6
  %s9 = scalar_select 0, %s8, %s6
  loop: start=0, step=1, limit=4
  $region2: #{tcn_forward.5} parent=0 // loop_pre_header
    _
  $region3: #{tcn_forward.5} parent=0 // loop_header
    %s11 = sphi 0, %s15
    %p12 = scmp.ge.s32.totalorder %s11, 4
    %s21 = sphi 0, %s23
    %s24 = sphi 0, %s21
    %s25 = sphi 0, %s24
    %s41 = sphi 0, %s25
    %s45 = sphi 0, %s45
    %s47 = sphi 0, %s45
    %s48 = sphi 0, %s47
    %s62 = sphi 0, %s48
    %s66 = sphi 0, %s66
    %s68 = sphi 0, %s66
    %s69 = sphi 0, %s68
    %s83 = sphi 0, %s69
    %s87 = sphi 0, %s87
    %s89 = sphi 0, %s87
    %s90 = sphi 0, %s89
    %s104 = sphi 0, %s90
    %s108 = sphi 0, %s108
    %s110 = sphi 0, %s108
    %s111 = sphi 0, %s110
    %s125 = sphi 0, %s111
    %s131 = sphi 0, %s133
    %s134 = sphi 0, %s131
    %s135 = sphi 0, %s134
    %s151 = sphi 0, %s135
  $region4: #{tcn_forward.5} parent=0 // loop_header_branch
    %14 = sbr.rel (%p12) target = $region8
  $region5: #{tcn_forward.5} parent=0 // loop_body
    %s16 = ssub.s32 %s11, 1
    %s17 = ssub.s32 %s11, 2
    %s18 = sadd.s32 %s11, 1
    %s19 = ssub.s32 %s11, %s18
    %p20 = scmp.eq.s32.totalorder %s19, 0
    %s22 = sadd.s32 %s21, 1
    %s23 = scalar_select %p20, %s21, %s22
    %p26 = pneg %p20
    %p27 = scmp.eq.s32.totalorder %s11, 1
    %p28 = por %p26, %p27
    %p29 = scmp.ne.s32.totalorder %s21, %s24
    %p30 = scmp.eq.s32.totalorder %s11, 0
    %p31 = por %p29, %p30
    %p32 = scmp.ne.s32.totalorder %s21, %s24
    %p33 = scmp.eq.s32.totalorder %s16, 1
    %p34 = por %p32, %p33
    %p35 = scmp.ne.s32.totalorder %s24, %s25
    %p36 = scmp.eq.s32.totalorder %s16, 0
    %p37 = por %p35, %p36
    %p38 = scmp.ne.s32.totalorder %s24, %s25
    %p39 = scmp.eq.s32.totalorder %s17, 1
    %p40 = por %p38, %p39
    %p42 = scmp.ne.s32.totalorder %s25, %s41
    %p43 = scmp.eq.s32.totalorder %s17, 0
    %p44 = por %p42, %p43
    %s46 = sadd.s32 %s45, 1
    %p49 = scmp.eq.s32.totalorder %s11, 1
    %p50 = scmp.ne.s32.totalorder %s45, %s47
    %p51 = scmp.eq.s32.totalorder %s11, 0
    %p52 = por %p50, %p51
    %p53 = scmp.ne.s32.totalorder %s45, %s47
    %p54 = scmp.eq.s32.totalorder %s16, 1
    %p55 = por %p53, %p54
    %p56 = scmp.ne.s32.totalorder %s47, %s48
    %p57 = scmp.eq.s32.totalorder %s16, 0
    %p58 = por %p56, %p57
    %p59 = scmp.ne.s32.totalorder %s47, %s48
    %p60 = scmp.eq.s32.totalorder %s17, 1
    %p61 = por %p59, %p60
    %p63 = scmp.ne.s32.totalorder %s48, %s62
    %p64 = scmp.eq.s32.totalorder %s17, 0
    %p65 = por %p63, %p64
    %s67 = sadd.s32 %s66, 1
    %p70 = scmp.eq.s32.totalorder %s11, 1
    %p71 = scmp.ne.s32.totalorder %s66, %s68
    %p72 = scmp.eq.s32.totalorder %s11, 0
    %p73 = por %p71, %p72
    %p74 = scmp.ne.s32.totalorder %s66, %s68
    %p75 = scmp.eq.s32.totalorder %s16, 1
    %p76 = por %p74, %p75
    %p77 = scmp.ne.s32.totalorder %s68, %s69
    %p78 = scmp.eq.s32.totalorder %s16, 0
    %p79 = por %p77, %p78
    %p80 = scmp.ne.s32.totalorder %s68, %s69
    %p81 = scmp.eq.s32.totalorder %s17, 1
    %p82 = por %p80, %p81
    %p84 = scmp.ne.s32.totalorder %s69, %s83
    %p85 = scmp.eq.s32.totalorder %s17, 0
    %p86 = por %p84, %p85
    %s88 = sadd.s32 %s87, 1
    %p91 = scmp.eq.s32.totalorder %s11, 1
    %p92 = scmp.ne.s32.totalorder %s87, %s89
    %p93 = scmp.eq.s32.totalorder %s11, 0
    %p94 = por %p92, %p93
    %p95 = scmp.ne.s32.totalorder %s87, %s89
    %p96 = scmp.eq.s32.totalorder %s16, 1
    %p97 = por %p95, %p96
    %p98 = scmp.ne.s32.totalorder %s89, %s90
    %p99 = scmp.eq.s32.totalorder %s16, 0
    %p100 = por %p98, %p99
    %p101 = scmp.ne.s32.totalorder %s89, %s90
    %p102 = scmp.eq.s32.totalorder %s17, 1
    %p103 = por %p101, %p102
    %p105 = scmp.ne.s32.totalorder %s90, %s104
    %p106 = scmp.eq.s32.totalorder %s17, 0
    %p107 = por %p105, %p106
    %s109 = sadd.s32 %s108, 1
    %p112 = scmp.eq.s32.totalorder %s11, 1
    %p113 = scmp.ne.s32.totalorder %s108, %s110
    %p114 = scmp.eq.s32.totalorder %s11, 0
    %p115 = por %p113, %p114
    %p116 = scmp.ne.s32.totalorder %s108, %s110
    %p117 = scmp.eq.s32.totalorder %s16, 1
    %p118 = por %p116, %p117
    %p119 = scmp.ne.s32.totalorder %s110, %s111
    %p120 = scmp.eq.s32.totalorder %s16, 0
    %p121 = por %p119, %p120
    %p122 = scmp.ne.s32.totalorder %s110, %s111
    %p123 = scmp.eq.s32.totalorder %s17, 1
    %p124 = por %p122, %p123
    %p126 = scmp.ne.s32.totalorder %s111, %s125
    %p127 = scmp.eq.s32.totalorder %s17, 0
    %p128 = por %p126, %p127
    %s129 = ssub.s32 %s11, %s18
    %p130 = scmp.eq.s32.totalorder %s129, 0
    %s132 = sadd.s32 %s131, 1
    %s133 = scalar_select %p130, %s131, %s132
    %p136 = pneg %p130
    %p137 = scmp.eq.s32.totalorder %s11, 1
    %p138 = por %p136, %p137
    %p139 = scmp.ne.s32.totalorder %s131, %s134
    %p140 = scmp.eq.s32.totalorder %s11, 0
    %p141 = por %p139, %p140
    %p142 = scmp.ne.s32.totalorder %s131, %s134
    %p143 = scmp.eq.s32.totalorder %s16, 1
    %p144 = por %p142, %p143
    %p145 = scmp.ne.s32.totalorder %s134, %s135
    %p146 = scmp.eq.s32.totalorder %s16, 0
    %p147 = por %p145, %p146
    %p148 = scmp.ne.s32.totalorder %s134, %s135
    %p149 = scmp.eq.s32.totalorder %s17, 1
    %p150 = por %p148, %p149
    %p152 = scmp.ne.s32.totalorder %s135, %s151
    %p153 = scmp.eq.s32.totalorder %s17, 0
    %p154 = por %p152, %p153
    %p155 = scmp.le.s32.totalorder 1, %s11
    %p156 = scmp.lt.s32.totalorder %s11, 3
    %p157 = pnand %p155, %p156
    %p158 = pneg %p157
    // Predicated region
    $region9: #{tcn_forward.5} parent=5 // pred_check
      _
    $region10: #{tcn_forward.5} parent=5 // pred_check_branch
      %160 = sbr.rel (%p157) target = $region12
    $region11: #{tcn_forward.5} parent=5 // pred_region
      %s161 = ssub.s32 %s11, 1
      // Predicated region
      $region13: #{tcn_forward.5} parent=11 // pred_check
        %p162 = pneg %p58
      $region14: #{tcn_forward.5} parent=11 // pred_check_branch
        %164 = sbr.rel (%p162) target = $region16
      $region15: #{tcn_forward.5} parent=11 // pred_region
        _
      $region16: #{tcn_forward.5} parent=11 // pred_fallthru
        _
      // Predicated region
      $region17: #{tcn_forward.5} parent=11 // pred_check
        %p165 = pneg %p79
      $region18: #{tcn_forward.5} parent=11 // pred_check_branch
        %167 = sbr.rel (%p165) target = $region20
      $region19: #{tcn_forward.5} parent=11 // pred_region
        _
      $region20: #{tcn_forward.5} parent=11 // pred_fallthru
        _
      // Predicated region
      $region21: #{tcn_forward.5} parent=11 // pred_check
        %p168 = pneg %p100
      $region22: #{tcn_forward.5} parent=11 // pred_check_branch
        %170 = sbr.rel (%p168) target = $region24
      $region23: #{tcn_forward.5} parent=11 // pred_region
        _
      $region24: #{tcn_forward.5} parent=11 // pred_fallthru
        _
      // Predicated region
      $region25: #{tcn_forward.5} parent=11 // pred_check
        %p171 = pneg %p121
      $region26: #{tcn_forward.5} parent=11 // pred_check_branch
        %173 = sbr.rel (%p171) target = $region28
      $region27: #{tcn_forward.5} parent=11 // pred_region
        _
      $region28: #{tcn_forward.5} parent=11 // pred_fallthru
        _
    $region12: #{tcn_forward.5} parent=5 // pred_fallthru
      _
    %p174 = scmp.lt.s32.totalorder %s11, 2
    // Predicated region
    $region29: #{tcn_forward.5} parent=5 // pred_check
      %p175 = pneg %p174
    $region30: #{tcn_forward.5} parent=5 // pred_check_branch
      %177 = sbr.rel (%p175) target = $region32
    $region31: #{tcn_forward.5} parent=5 // pred_region
      // Predicated region
      $region33: #{tcn_forward.5} parent=31 // pred_check
        %p178 = pneg %p31
      $region34: #{tcn_forward.5} parent=31 // pred_check_branch
        %180 = sbr.rel (%p178) target = $region36
      $region35: #{tcn_forward.5} parent=31 // pred_region
        %p181 = scmp.lt.s32.totalorder %s11, 1
        %s182 = scalar_select %p181, %s11, 1
        %s183 = smul.addr %s182, 16
        %s184 = smul.addr %s183, 4
        %s185 = scalar_lea.vmem %s0, %s184
      $region36: #{tcn_forward.5} parent=31 // pred_fallthru
        _
    $region32: #{tcn_forward.5} parent=5 // pred_fallthru
      _
    %p186 = scmp.le.s32.totalorder 1, %s11
    %p187 = scmp.lt.s32.totalorder %s11, 3
    %p188 = pnand %p186, %p187
    %p189 = pneg %p188
    // Predicated region
    $region37: #{tcn_forward.5} parent=5 // pred_check
      _
    $region38: #{tcn_forward.5} parent=5 // pred_check_branch
      %191 = sbr.rel (%p188) target = $region40
    $region39: #{tcn_forward.5} parent=5 // pred_region
      %s192 = ssub.s32 %s11, 1
      %p193 = scmp.lt.s32.totalorder %s16, 1
      %s194 = scalar_select %p193, %s16, 1
      %s195 = smul.addr %s194, 16
      %s196 = smul.addr %s195, 4
      %s197 = scalar_lea.vmem %s0, %s196
      %p198 = pneg %p37
      %p199 = pneg %p34
      %p200 = pneg %p58
      %p201 = pneg %p55
      %p202 = pneg %p79
      %p203 = pneg %p76
      %p204 = pneg %p100
      %p205 = pneg %p97
      %p206 = pneg %p121
      %p207 = pneg %p118
      %p208 = pneg %p147
      %p209 = pneg %p144
      %p210 = scmp.lt.s32.totalorder %s16, 1
      %s211 = scalar_select %p210, %s16, 1
      %s212 = smul.addr %s211, 16
      %s213 = smul.addr %s212, 4
      %s214 = scalar_lea.vmem %s5, %s213
      %p215 = scmp.lt.s32.totalorder %s16, 1
      %s216 = scalar_select %p215, %s16, 1
      %s217 = smul.addr %s216, 16
      %s218 = smul.addr %s217, 4
      %s219 = scalar_lea.vmem %s0, %s218
      %p220 = scmp.lt.s32.totalorder %s16, 1
      %s221 = scalar_select %p220, %s16, 1
      %s222 = smul.addr %s221, 16
      %s223 = smul.addr %s222, 4
      %s224 = scalar_lea.vmem %s5, %s223
      %226 = vst [vmem:[#allocation2] sm:$0xf] 0
      %v227 = vld [vmem:[%s219] sm:$0xf]
      %v228 = vld [vmem:[%s219 + $0x4] sm:$0xf]
      %v229 = vld [vmem:[%s219 + $0x8] sm:$0xf]
      %v230 = vld [vmem:[%s219 + $0xc] sm:$0xf]
      %v231 = vld [vmem:[%s219 + $0x10] sm:$0xf]
      %v232 = vld [vmem:[%s219 + $0x14] sm:$0xf]
      %v233 = vld [vmem:[%s219 + $0x18] sm:$0xf]
      %v234 = vld [vmem:[%s219 + $0x1c] sm:$0xf]
      %v235 = vld [vmem:[%s219 + $0x20] sm:$0xf]
      %v236 = vld [vmem:[%s219 + $0x24] sm:$0xf]
      %v237 = vld [vmem:[%s219 + $0x28] sm:$0xf]
      %v238 = vld [vmem:[%s219 + $0x2c] sm:$0xf]
      %v239 = vld [vmem:[%s219 + $0x30] sm:$0xf]
      %v240 = vld [vmem:[%s219 + $0x34] sm:$0xf]
      %v241 = vld [vmem:[%s219 + $0x38] sm:$0xf]
      %v242 = vld [vmem:[%s219 + $0x3c] sm:$0xf]
      %243 = vst [vmem:[#allocation2 + $0x4] sm:$0xf] %v227
      %244 = vst [vmem:[#allocation2 + $0x8] sm:$0xf] %v228
      %245 = vst [vmem:[#allocation2 + $0xc] sm:$0xf] %v229
      %246 = vst [vmem:[#allocation2 + $0x10] sm:$0xf] %v230
      %247 = vst [vmem:[#allocation2 + $0x14] sm:$0xf] %v231
      %248 = vst [vmem:[#allocation2 + $0x18] sm:$0xf] %v232
      %249 = vst [vmem:[#allocation2 + $0x1c] sm:$0xf] %v233
      %250 = vst [vmem:[#allocation2 + $0x20] sm:$0xf] %v234
      %251 = vst [vmem:[#allocation2 + $0x24] sm:$0xf] %v235
      %252 = vst [vmem:[#allocation2 + $0x28] sm:$0xf] %v236
      %253 = vst [vmem:[#allocation2 + $0x2c] sm:$0xf] %v237
      %254 = vst [vmem:[#allocation2 + $0x30] sm:$0xf] %v238
      %255 = vst [vmem:[#allocation2 + $0x34] sm:$0xf] %v239
      %256 = vst [vmem:[#allocation2 + $0x38] sm:$0xf] %v240
      %257 = vst [vmem:[#allocation2 + $0x3c] sm:$0xf] %v241
      %258 = vst [vmem:[#allocation2 + $0x40] sm:$0xf] %v242
      %v259 = vld [vmem:[#allocation2] sm:$0xf]
      %v260 = vld [vmem:[#allocation2 + $0x4] sm:$0xf]
      %v261 = vld [vmem:[#allocation2 + $0x8] sm:$0xf]
      %v262 = vld [vmem:[#allocation2 + $0xc] sm:$0xf]
      %v263 = vld [vmem:[#allocation2 + $0x10] sm:$0xf]
      %v264 = vld [vmem:[#allocation2 + $0x14] sm:$0xf]
      %v265 = vld [vmem:[#allocation2 + $0x18] sm:$0xf]
      %v266 = vld [vmem:[#allocation2 + $0x1c] sm:$0xf]
      %v267 = vld [vmem:[#allocation2 + $0x20] sm:$0xf]
      %v268 = vld [vmem:[#allocation2 + $0x24] sm:$0xf]
      %v269 = vld [vmem:[#allocation2 + $0x28] sm:$0xf]
      %v270 = vld [vmem:[#allocation2 + $0x2c] sm:$0xf]
      %v271 = vld [vmem:[#allocation2 + $0x30] sm:$0xf]
      %v272 = vld [vmem:[#allocation2 + $0x34] sm:$0xf]
      %v273 = vld [vmem:[#allocation2 + $0x38] sm:$0xf]
      %v274 = vld [vmem:[#allocation2 + $0x3c] sm:$0xf]
      %v275 = vld [vmem:[#allocation2] sm:$0xc]
      %v276 = vld [vmem:[#allocation2 + $0x4] sm:$0xf]
      %v277 = vld [vmem:[#allocation2 + $0x8] sm:$0xf]
      %v278 = vld [vmem:[#allocation2 + $0xc] sm:$0xf]
      %v279 = vld [vmem:[#allocation2 + $0x10] sm:$0xf]
      %v280 = vld [vmem:[#allocation2 + $0x14] sm:$0xf]
      %v281 = vld [vmem:[#allocation2 + $0x18] sm:$0xf]
      %v282 = vld [vmem:[#allocation2 + $0x1c] sm:$0xf]
      %v283 = vld [vmem:[#allocation2 + $0x20] sm:$0xf]
      %v284 = vld [vmem:[#allocation2 + $0x24] sm:$0xf]
      %v285 = vld [vmem:[#allocation2 + $0x28] sm:$0xf]
      %v286 = vld [vmem:[#allocation2 + $0x2c] sm:$0xf]
      %v287 = vld [vmem:[#allocation2 + $0x30] sm:$0xf]
      %v288 = vld [vmem:[#allocation2 + $0x34] sm:$0xf]
      %v289 = vld [vmem:[#allocation2 + $0x38] sm:$0xf]
      %v290 = vld [vmem:[#allocation2 + $0x3c] sm:$0xf]
      %v291 = vld [vmem:[#allocation2 + $0x40] sm:$0x3]
      %v292 = vld [vmem:[#allocation2 + $0x40] sm:$0xf]
      %v309 = vunpack.c.l.b16 %v259
      %v310 = vunpack.c.l.b16 %v260
      %v311 = vunpack.c.l.b16 %v261
      %v312 = vunpack.c.l.b16 %v262
      %v313 = vunpack.c.l.b16 %v263
      %v314 = vunpack.c.l.b16 %v264
      %v315 = vunpack.c.l.b16 %v265
      %v316 = vunpack.c.l.b16 %v266
      %v317 = vunpack.c.l.b16 %v267
      %v318 = vunpack.c.l.b16 %v268
      %v319 = vunpack.c.l.b16 %v269
      %v320 = vunpack.c.l.b16 %v270
      %v321 = vunpack.c.l.b16 %v271
      %v322 = vunpack.c.l.b16 %v272
      %v323 = vunpack.c.l.b16 %v273
      %v324 = vunpack.c.l.b16 %v274
      %v325 = vpack.c.b16 %v310, %v309
      %v326 = vpack.c.b16 %v312, %v311
      %v327 = vpack.c.b16 %v314, %v313
      %v328 = vpack.c.b16 %v316, %v315
      %v329 = vpack.c.b16 %v318, %v317
      %v330 = vpack.c.b16 %v320, %v319
      %v331 = vpack.c.b16 %v322, %v321
      %v332 = vpack.c.b16 %v324, %v323
      %v358 = vunpack.c.l.b16 %v275
      %v359 = vunpack.c.l.b16 %v276
      %v360 = vunpack.c.l.b16 %v277
      %v361 = vunpack.c.l.b16 %v278
      %v362 = vunpack.c.l.b16 %v279
      %v363 = vunpack.c.l.b16 %v280
      %v364 = vunpack.c.l.b16 %v281
      %v365 = vunpack.c.l.b16 %v282
      %v366 = vunpack.c.l.b16 %v283
      %v367 = vunpack.c.l.b16 %v284
      %v368 = vunpack.c.l.b16 %v285
      %v369 = vunpack.c.l.b16 %v286
      %v370 = vunpack.c.l.b16 %v287
      %v371 = vunpack.c.l.b16 %v288
      %v372 = vunpack.c.l.b16 %v289
      %v373 = vunpack.c.l.b16 %v290
      %v374 = vunpack.c.l.b16 %v291
      %v375 = vpack.c.b16 %v359, %v358
      %v376 = vpack.c.b16 %v361, %v360
      %v377 = vpack.c.b16 %v363, %v362
      %v378 = vpack.c.b16 %v365, %v364
      %v379 = vpack.c.b16 %v367, %v366
      %v380 = vpack.c.b16 %v369, %v368
      %v381 = vpack.c.b16 %v371, %v370
      %v382 = vpack.c.b16 %v373, %v372
      %v383 = vpack.c.b16 %v374, %v374
      %vm384 = vcmask 1045504
      %v385 = vrot.slane %v375, 2
      %v386 = vrot.slane %v376, 2
      %v387 = vsel %vm384, %v385, %v386
      %v388 = vrot.slane %v377, 2
      %v389 = vsel %vm384, %v386, %v388
      %v390 = vrot.slane %v378, 2
      %v391 = vsel %vm384, %v388, %v390
      %v392 = vrot.slane %v379, 2
      %v393 = vsel %vm384, %v390, %v392
      %v394 = vrot.slane %v380, 2
      %v395 = vsel %vm384, %v392, %v394
      %v396 = vrot.slane %v381, 2
      %v397 = vsel %vm384, %v394, %v396
      %v398 = vrot.slane %v382, 2
      %v399 = vsel %vm384, %v396, %v398
      %v400 = vrot.slane %v383, 2
      %v401 = vsel %vm384, %v398, %v400
      %v411 = vunpack.c.l.b16 %v292
      %v412 = vpack.c.b16 %v360, %v359
      %v413 = vpack.c.b16 %v362, %v361
      %v414 = vpack.c.b16 %v364, %v363
      %v415 = vpack.c.b16 %v366, %v365
      %v416 = vpack.c.b16 %v368, %v367
      %v417 = vpack.c.b16 %v370, %v369
      %v418 = vpack.c.b16 %v372, %v371
      %v419 = vpack.c.b16 %v411, %v373
      %v428 = vld [vmem:[%s1] sm:$0xf]
      %v429 = vld [vmem:[%s1 + $0x4] sm:$0xf]
      %v430 = vld [vmem:[%s1 + $0x8] sm:$0xf]
      %v431 = vld [vmem:[%s1 + $0xc] sm:$0xf]
      %v432 = vld [vmem:[%s1 + $0x10] sm:$0xf]
      %v433 = vld [vmem:[%s1 + $0x14] sm:$0xf]
      %v434 = vld [vmem:[%s1 + $0x18] sm:$0xf]
      %v435 = vld [vmem:[%s1 + $0x1c] sm:$0xf]
      %v436 = vld [vmem:[%s1 + $0x20] sm:$0xf]
      %v437 = vld [vmem:[%s1 + $0x24] sm:$0xf]
      %v438 = vld [vmem:[%s1 + $0x28] sm:$0xf]
      %v439 = vld [vmem:[%s1 + $0x2c] sm:$0xf]
      %v440 = vld [vmem:[%s1 + $0x30] sm:$0xf]
      %v441 = vld [vmem:[%s1 + $0x34] sm:$0xf]
      %v442 = vld [vmem:[%s1 + $0x38] sm:$0xf]
      %v443 = vld [vmem:[%s1 + $0x3c] sm:$0xf]
      %v444 = vld [vmem:[%s1 + $0x40] sm:$0xf]
      %v445 = vld [vmem:[%s1 + $0x44] sm:$0xf]
      %v446 = vld [vmem:[%s1 + $0x48] sm:$0xf]
      %v447 = vld [vmem:[%s1 + $0x4c] sm:$0xf]
      %v448 = vld [vmem:[%s1 + $0x50] sm:$0xf]
      %v449 = vld [vmem:[%s1 + $0x54] sm:$0xf]
      %v450 = vld [vmem:[%s1 + $0x58] sm:$0xf]
      %v451 = vld [vmem:[%s1 + $0x5c] sm:$0xf]
      %v452 = vld [vmem:[%s1 + $0x60] sm:$0xf]
      %v453 = vld [vmem:[%s1 + $0x64] sm:$0xf]
      %v454 = vld [vmem:[%s1 + $0x68] sm:$0xf]
      %v455 = vld [vmem:[%s1 + $0x6c] sm:$0xf]
      %v456 = vld [vmem:[%s1 + $0x70] sm:$0xf]
      %v457 = vld [vmem:[%s1 + $0x74] sm:$0xf]
      %v458 = vld [vmem:[%s1 + $0x78] sm:$0xf]
      %v459 = vld [vmem:[%s1 + $0x7c] sm:$0xf]
      %v460 = vld [vmem:[%s1 + $0x80] sm:$0xf]
      %v461 = vld [vmem:[%s1 + $0x84] sm:$0xf]
      %v462 = vld [vmem:[%s1 + $0x88] sm:$0xf]
      %v463 = vld [vmem:[%s1 + $0x8c] sm:$0xf]
      %v464 = vld [vmem:[%s1 + $0x90] sm:$0xf]
      %v465 = vld [vmem:[%s1 + $0x94] sm:$0xf]
      %v466 = vld [vmem:[%s1 + $0x98] sm:$0xf]
      %v467 = vld [vmem:[%s1 + $0x9c] sm:$0xf]
      %v468 = vld [vmem:[%s1 + $0xa0] sm:$0xf]
      %v469 = vld [vmem:[%s1 + $0xa4] sm:$0xf]
      %v470 = vld [vmem:[%s1 + $0xa8] sm:$0xf]
      %v471 = vld [vmem:[%s1 + $0xac] sm:$0xf]
      %v472 = vld [vmem:[%s1 + $0xb0] sm:$0xf]
      %v473 = vld [vmem:[%s1 + $0xb4] sm:$0xf]
      %v474 = vld [vmem:[%s1 + $0xb8] sm:$0xf]
      %v475 = vld [vmem:[%s1 + $0xbc] sm:$0xf]
      %v476 = vld [vmem:[%s2] sm:$0x1]
      %v478 = vlaneseq
      %v479 = vshrl.u32 %v478, 7
      %v480 = vsub.s32 0, %v479
      %v481 = vrot.slane %v476, %v480
      %v531 = vunpack.c.l.b16 %v428
      %v532 = vunpack.c.l.b16 %v429
      %v533 = vunpack.c.l.b16 %v430
      %v534 = vunpack.c.l.b16 %v431
      %v535 = vunpack.c.l.b16 %v432
      %v536 = vunpack.c.l.b16 %v433
      %v537 = vunpack.c.l.b16 %v434
      %v538 = vunpack.c.l.b16 %v435
      %v539 = vunpack.c.l.b16 %v436
      %v540 = vunpack.c.l.b16 %v437
      %v541 = vunpack.c.l.b16 %v438
      %v542 = vunpack.c.l.b16 %v439
      %v543 = vunpack.c.l.b16 %v440
      %v544 = vunpack.c.l.b16 %v441
      %v545 = vunpack.c.l.b16 %v442
      %v546 = vunpack.c.l.b16 %v443
      %v547 = vunpack.c.l.b16 %v444
      %v548 = vunpack.c.l.b16 %v445
      %v549 = vunpack.c.l.b16 %v446
      %v550 = vunpack.c.l.b16 %v447
      %v551 = vunpack.c.l.b16 %v448
      %v552 = vunpack.c.l.b16 %v449
      %v553 = vunpack.c.l.b16 %v450
      %v554 = vunpack.c.l.b16 %v451
      %v555 = vunpack.c.l.b16 %v452
      %v556 = vunpack.c.l.b16 %v453
      %v557 = vunpack.c.l.b16 %v454
      %v558 = vunpack.c.l.b16 %v455
      %v559 = vunpack.c.l.b16 %v456
      %v560 = vunpack.c.l.b16 %v457
      %v561 = vunpack.c.l.b16 %v458
      %v562 = vunpack.c.l.b16 %v459
      %v563 = vunpack.c.l.b16 %v460
      %v564 = vunpack.c.l.b16 %v461
      %v565 = vunpack.c.l.b16 %v462
      %v566 = vunpack.c.l.b16 %v463
      %v567 = vunpack.c.l.b16 %v464
      %v568 = vunpack.c.l.b16 %v465
      %v569 = vunpack.c.l.b16 %v466
      %v570 = vunpack.c.l.b16 %v467
      %v571 = vunpack.c.l.b16 %v468
      %v572 = vunpack.c.l.b16 %v469
      %v573 = vunpack.c.l.b16 %v470
      %v574 = vunpack.c.l.b16 %v471
      %v575 = vunpack.c.l.b16 %v472
      %v576 = vunpack.c.l.b16 %v473
      %v577 = vunpack.c.l.b16 %v474
      %v578 = vunpack.c.l.b16 %v475
      %v579 = vpack.c.b16 %v532, %v531
      %v580 = vpack.c.b16 %v534, %v533
      %v581 = vpack.c.b16 %v536, %v535
      %v582 = vpack.c.b16 %v538, %v537
      %v583 = vpack.c.b16 %v540, %v539
      %v584 = vpack.c.b16 %v542, %v541
      %v585 = vpack.c.b16 %v544, %v543
      %v586 = vpack.c.b16 %v546, %v545
      %v587 = vpack.c.b16 %v548, %v547
      %v588 = vpack.c.b16 %v550, %v549
      %v589 = vpack.c.b16 %v552, %v551
      %v590 = vpack.c.b16 %v554, %v553
      %v591 = vpack.c.b16 %v556, %v555
      %v592 = vpack.c.b16 %v558, %v557
      %v593 = vpack.c.b16 %v560, %v559
      %v594 = vpack.c.b16 %v562, %v561
      %v595 = vpack.c.b16 %v564, %v563
      %v596 = vpack.c.b16 %v566, %v565
      %v597 = vpack.c.b16 %v568, %v567
      %v598 = vpack.c.b16 %v570, %v569
      %v599 = vpack.c.b16 %v572, %v571
      %v600 = vpack.c.b16 %v574, %v573
      %v601 = vpack.c.b16 %v576, %v575
      %v602 = vpack.c.b16 %v578, %v577
      %627 = vmatprep.subr.bf16.mxu0 0
      %628 = vmatpush1.bf16.msra.mxu0 %v579
      %629 = vmatprep.subr.bf16.mxu0 0
      %630 = vmatpush1.bf16.msra.mxu0 %v580
      %631 = vmatprep.subr.bf16.mxu0 0
      %632 = vmatpush1.bf16.msra.mxu0 %v581
      %633 = vmatprep.subr.bf16.mxu0 0
      %634 = vmatpush1.bf16.msra.mxu0 %v582
      %635 = vmatprep.subr.bf16.mxu0 0
      %636 = vmatpush1.bf16.msra.mxu0 %v583
      %637 = vmatprep.subr.bf16.mxu0 0
      %638 = vmatpush1.bf16.msra.mxu0 %v584
      %639 = vmatprep.subr.bf16.mxu0 0
      %640 = vmatpush1.bf16.msra.mxu0 %v585
      %641 = vmatprep.subr.bf16.mxu0 0
      %642 = vmatpush1.bf16.msra.mxu0 %v586
      %643 = vmatprep.subr.bf16.mxu0 0
      %644 = vmatpush1.bf16.msra.mxu0 %v587
      %645 = vmatprep.subr.bf16.mxu0 0
      %646 = vmatpush1.bf16.msra.mxu0 %v588
      %647 = vmatprep.subr.bf16.mxu0 0
      %648 = vmatpush1.bf16.msra.mxu0 %v589
      %649 = vmatprep.subr.bf16.mxu0 0
      %650 = vmatpush1.bf16.msra.mxu0 %v590
      %651 = vmatprep.subr.bf16.mxu0 0
      %652 = vmatpush1.bf16.msra.mxu0 %v591
      %653 = vmatprep.subr.bf16.mxu0 0
      %654 = vmatpush1.bf16.msra.mxu0 %v592
      %655 = vmatprep.subr.bf16.mxu0 0
      %656 = vmatpush1.bf16.msra.mxu0 %v593
      %657 = vmatprep.subr.bf16.mxu0 0
      %658 = vmatpush1.bf16.msra.mxu0 %v594
      %659 = vmatprep.mubr.bf16.mxu0 %v387
      %660 = vmatmul.mubr.bf16.gmra.mrb[0].mxu0 %v325
      %v661 = vpop.f32.mrb[0].mxu0
      %v662 = vadd.f32 %v481, %v661
      %v663 = vpop.f32.mrb[0].mxu0
      %v664 = vpop.f32.mrb[0].mxu0
      %v665 = vadd.f32 %v481, %v664
      %v666 = vpop.f32.mrb[0].mxu0
      %667 = vmatprep.mubr.bf16.mxu0 %v389
      %668 = vmatmul.mubr.bf16.gmra.mrb[0].mxu0 %v326
      %v669 = vpop.f32.mrb[0].mxu0
      %v670 = vadd.f32 %v481, %v669
      %v671 = vpop.f32.mrb[0].mxu0
      %v672 = vpop.f32.mrb[0].mxu0
      %v673 = vadd.f32 %v481, %v672
      %v674 = vpop.f32.mrb[0].mxu0
      %675 = vmatprep.mubr.bf16.mxu0 %v391
      %676 = vmatmul.mubr.bf16.gmra.mrb[0].mxu0 %v327
      %v677 = vpop.f32.mrb[0].mxu0
      %v678 = vadd.f32 %v481, %v677
      %v679 = vpop.f32.mrb[0].mxu0
      %v680 = vpop.f32.mrb[0].mxu0
      %v681 = vadd.f32 %v481, %v680
      %v682 = vpop.f32.mrb[0].mxu0
      %683 = vmatprep.mubr.bf16.mxu0 %v393
      %684 = vmatmul.mubr.bf16.gmra.mrb[0].mxu0 %v328
      %v685 = vpop.f32.mrb[0].mxu0
      %v686 = vadd.f32 %v481, %v685
      %v687 = vpop.f32.mrb[0].mxu0
      %v688 = vpop.f32.mrb[0].mxu0
      %v689 = vadd.f32 %v481, %v688
      %v690 = vpop.f32.mrb[0].mxu0
      %691 = vmatprep.mubr.bf16.mxu0 %v395
      %692 = vmatmul.mubr.bf16.gmra.mrb[0].mxu0 %v329
      %v693 = vpop.f32.mrb[0].mxu0
      %v694 = vadd.f32 %v481, %v693
      %v695 = vpop.f32.mrb[0].mxu0
      %v696 = vpop.f32.mrb[0].mxu0
      %v697 = vadd.f32 %v481, %v696
      %v698 = vpop.f32.mrb[0].mxu0
      %699 = vmatprep.mubr.bf16.mxu0 %v397
      %700 = vmatmul.mubr.bf16.gmra.mrb[0].mxu0 %v330
      %v701 = vpop.f32.mrb[0].mxu0
      %v702 = vadd.f32 %v481, %v701
      %v703 = vpop.f32.mrb[0].mxu0
      %v704 = vpop.f32.mrb[0].mxu0
      %v705 = vadd.f32 %v481, %v704
      %v706 = vpop.f32.mrb[0].mxu0
      %707 = vmatprep.mubr.bf16.mxu0 %v399
      %708 = vmatmul.mubr.bf16.gmra.mrb[0].mxu0 %v331
      %v709 = vpop.f32.mrb[0].mxu0
      %v710 = vadd.f32 %v481, %v709
      %v711 = vpop.f32.mrb[0].mxu0
      %v712 = vpop.f32.mrb[0].mxu0
      %v713 = vadd.f32 %v481, %v712
      %v714 = vpop.f32.mrb[0].mxu0
      %715 = vmatprep.mubr.bf16.mxu0 %v401
      %716 = vmatmul.mubr.bf16.gmra.mrb[0].mxu0 %v332
      %v717 = vpop.f32.mrb[0].mxu0
      %v718 = vadd.f32 %v481, %v717
      %v719 = vpop.f32.mrb[0].mxu0
      %v720 = vpop.f32.mrb[0].mxu0
      %v721 = vadd.f32 %v481, %v720
      %v722 = vpop.f32.mrb[0].mxu0
      %723 = vdwg.mxu0
      %724 = vmatprep.subr.bf16.mxu0 0
      %725 = vmatpush1.bf16.msra.mxu0 %v595
      %726 = vmatprep.subr.bf16.mxu0 0
      %727 = vmatpush1.bf16.msra.mxu0 %v596
      %728 = vmatprep.subr.bf16.mxu0 0
      %729 = vmatpush1.bf16.msra.mxu0 %v597
      %730 = vmatprep.subr.bf16.mxu0 0
      %731 = vmatpush1.bf16.msra.mxu0 %v598
      %732 = vmatprep.subr.bf16.mxu0 0
      %733 = vmatpush1.bf16.msra.mxu0 %v599
      %734 = vmatprep.subr.bf16.mxu0 0
      %735 = vmatpush1.bf16.msra.mxu0 %v600
      %736 = vmatprep.subr.bf16.mxu0 0
      %737 = vmatpush1.bf16.msra.mxu0 %v601
      %738 = vmatprep.subr.bf16.mxu0 0
      %739 = vmatpush1.bf16.msra.mxu0 %v602
      %740 = vmatprep.subr.bf16.mxu0 0
      %741 = vmatpush1.bf16.msra.mxu0 0
      %742 = vmatprep.subr.bf16.mxu0 0
      %743 = vmatpush1.bf16.msra.mxu0 0
      %744 = vmatprep.subr.bf16.mxu0 0
      %745 = vmatpush1.bf16.msra.mxu0 0
      %746 = vmatprep.subr.bf16.mxu0 0
      %747 = vmatpush1.bf16.msra.mxu0 0
      %748 = vmatprep.subr.bf16.mxu0 0
      %749 = vmatpush1.bf16.msra.mxu0 0
      %750 = vmatprep.subr.bf16.mxu0 0
      %751 = vmatpush1.bf16.msra.mxu0 0
      %752 = vmatprep.subr.bf16.mxu0 0
      %753 = vmatpush1.bf16.msra.mxu0 0
      %754 = vmatprep.subr.bf16.mxu0 0
      %755 = vmatpush1.bf16.msra.mxu0 0
      %756 = vmatprep.mubr.bf16.mxu0 0
      %757 = vmatmul.mubr.bf16.gmra.mrb[0].mxu0 %v412
      %v758 = vpop.f32.mrb[0].mxu0
      %v759 = vadd.f32 %v662, %v758
      %v760 = vpop.f32.mrb[0].mxu0
      %v761 = vpop.f32.mrb[0].mxu0
      %v762 = vadd.f32 %v665, %v761
      %v763 = vpop.f32.mrb[0].mxu0
      %764 = vmatprep.mubr.bf16.mxu0 0
      %765 = vmatmul.mubr.bf16.gmra.mrb[0].mxu0 %v413
      %v766 = vpop.f32.mrb[0].mxu0
      %v767 = vadd.f32 %v670, %v766
      %v768 = vpop.f32.mrb[0].mxu0
      %v769 = vpop.f32.mrb[0].mxu0
      %v770 = vadd.f32 %v673, %v769
      %v771 = vpop.f32.mrb[0].mxu0
      %772 = vmatprep.mubr.bf16.mxu0 0
      %773 = vmatmul.mubr.bf16.gmra.mrb[0].mxu0 %v414
      %v774 = vpop.f32.mrb[0].mxu0
      %v775 = vadd.f32 %v678, %v774
      %v776 = vpop.f32.mrb[0].mxu0
      %v777 = vpop.f32.mrb[0].mxu0
      %v778 = vadd.f32 %v681, %v777
      %v779 = vpop.f32.mrb[0].mxu0
      %780 = vmatprep.mubr.bf16.mxu0 0
      %781 = vmatmul.mubr.bf16.gmra.mrb[0].mxu0 %v415
      %v782 = vpop.f32.mrb[0].mxu0
      %v783 = vadd.f32 %v686, %v782
      %v784 = vpop.f32.mrb[0].mxu0
      %v785 = vpop.f32.mrb[0].mxu0
      %v786 = vadd.f32 %v689, %v785
      %v787 = vpop.f32.mrb[0].mxu0
      %788 = vmatprep.mubr.bf16.mxu0 0
      %789 = vmatmul.mubr.bf16.gmra.mrb[0].mxu0 %v416
      %v790 = vpop.f32.mrb[0].mxu0
      %v791 = vadd.f32 %v694, %v790
      %v792 = vpop.f32.mrb[0].mxu0
      %v793 = vpop.f32.mrb[0].mxu0
      %v794 = vadd.f32 %v697, %v793
      %v795 = vpop.f32.mrb[0].mxu0
      %796 = vmatprep.mubr.bf16.mxu0 0
      %797 = vmatmul.mubr.bf16.gmra.mrb[0].mxu0 %v417
      %v798 = vpop.f32.mrb[0].mxu0
      %v799 = vadd.f32 %v702, %v798
      %v800 = vpop.f32.mrb[0].mxu0
      %v801 = vpop.f32.mrb[0].mxu0
      %v802 = vadd.f32 %v705, %v801
      %v803 = vpop.f32.mrb[0].mxu0
      %804 = vmatprep.mubr.bf16.mxu0 0
      %805 = vmatmul.mubr.bf16.gmra.mrb[0].mxu0 %v418
      %v806 = vpop.f32.mrb[0].mxu0
      %v807 = vadd.f32 %v710, %v806
      %v808 = vpop.f32.mrb[0].mxu0
      %v809 = vpop.f32.mrb[0].mxu0
      %v810 = vadd.f32 %v713, %v809
      %v811 = vpop.f32.mrb[0].mxu0
      %812 = vmatprep.mubr.bf16.mxu0 0
      %813 = vmatmul.mubr.bf16.gmra.mrb[0].mxu0 %v419
      %v814 = vpop.f32.mrb[0].mxu0
      %v815 = vadd.f32 %v718, %v814
      %v816 = vpop.f32.mrb[0].mxu0
      %v817 = vpop.f32.mrb[0].mxu0
      %v818 = vadd.f32 %v721, %v817
      %v819 = vpop.f32.mrb[0].mxu0
      %820 = vdwg.mxu0
      %v821 = vmax.f32 %v759, 0.0
      %v822 = vmax.f32 %v762, 0.0
      %v823 = vmax.f32 %v767, 0.0
      %v824 = vmax.f32 %v770, 0.0
      %v825 = vmax.f32 %v775, 0.0
      %v826 = vmax.f32 %v778, 0.0
      %v827 = vmax.f32 %v783, 0.0
      %v828 = vmax.f32 %v786, 0.0
      %v829 = vmax.f32 %v791, 0.0
      %v830 = vmax.f32 %v794, 0.0
      %v831 = vmax.f32 %v799, 0.0
      %v832 = vmax.f32 %v802, 0.0
      %v833 = vmax.f32 %v807, 0.0
      %v834 = vmax.f32 %v810, 0.0
      %v835 = vmax.f32 %v815, 0.0
      %v836 = vmax.f32 %v818, 0.0
      %837 = vst [vmem:[#allocation3] sm:$0xf] 0
      %v838 = vpack.c.bf16 %v822, %v821
      %v839 = vpack.c.bf16 %v824, %v823
      %v840 = vpack.c.bf16 %v826, %v825
      %v841 = vpack.c.bf16 %v828, %v827
      %v842 = vpack.c.bf16 %v830, %v829
      %v843 = vpack.c.bf16 %v832, %v831
      %v844 = vpack.c.bf16 %v834, %v833
      %v845 = vpack.c.bf16 %v836, %v835
      %v854 = vunpack.c.l.b16 %v838
      %v855 = vunpack.c.h.b16 %v838
      %v856 = vunpack.c.l.b16 %v839
      %v857 = vunpack.c.h.b16 %v839
      %v858 = vunpack.c.l.b16 %v840
      %v859 = vunpack.c.h.b16 %v840
      %v860 = vunpack.c.l.b16 %v841
      %v861 = vunpack.c.h.b16 %v841
      %v862 = vunpack.c.l.b16 %v842
      %v863 = vunpack.c.h.b16 %v842
      %v864 = vunpack.c.l.b16 %v843
      %v865 = vunpack.c.h.b16 %v843
      %v866 = vunpack.c.l.b16 %v844
      %v867 = vunpack.c.h.b16 %v844
      %v868 = vunpack.c.l.b16 %v845
      %v869 = vunpack.c.h.b16 %v845
      %v870 = vpack.c.b16 %v854, %v854
      %v871 = vpack.c.b16 %v855, %v855
      %v872 = vpack.c.b16 %v856, %v856
      %v873 = vpack.c.b16 %v857, %v857
      %v874 = vpack.c.b16 %v858, %v858
      %v875 = vpack.c.b16 %v859, %v859
      %v876 = vpack.c.b16 %v860, %v860
      %v877 = vpack.c.b16 %v861, %v861
      %v878 = vpack.c.b16 %v862, %v862
      %v879 = vpack.c.b16 %v863, %v863
      %v880 = vpack.c.b16 %v864, %v864
      %v881 = vpack.c.b16 %v865, %v865
      %v882 = vpack.c.b16 %v866, %v866
      %v883 = vpack.c.b16 %v867, %v867
      %v884 = vpack.c.b16 %v868, %v868
      %v885 = vpack.c.b16 %v869, %v869
      %902 = vst [vmem:[#allocation3 + $0x4] sm:$0xf] %v870
      %903 = vst [vmem:[#allocation3 + $0x8] sm:$0xf] %v871
      %904 = vst [vmem:[#allocation3 + $0xc] sm:$0xf] %v872
      %905 = vst [vmem:[#allocation3 + $0x10] sm:$0xf] %v873
      %906 = vst [vmem:[#allocation3 + $0x14] sm:$0xf] %v874
      %907 = vst [vmem:[#allocation3 + $0x18] sm:$0xf] %v875
      %908 = vst [vmem:[#allocation3 + $0x1c] sm:$0xf] %v876
      %909 = vst [vmem:[#allocation3 + $0x20] sm:$0xf] %v877
      %910 = vst [vmem:[#allocation3 + $0x24] sm:$0xf] %v878
      %911 = vst [vmem:[#allocation3 + $0x28] sm:$0xf] %v879
      %912 = vst [vmem:[#allocation3 + $0x2c] sm:$0xf] %v880
      %913 = vst [vmem:[#allocation3 + $0x30] sm:$0xf] %v881
      %914 = vst [vmem:[#allocation3 + $0x34] sm:$0xf] %v882
      %915 = vst [vmem:[#allocation3 + $0x38] sm:$0xf] %v883
      %916 = vst [vmem:[#allocation3 + $0x3c] sm:$0xf] %v884
      %917 = vst [vmem:[#allocation3 + $0x40] sm:$0xf] %v885
      %v918 = vld [vmem:[#allocation3] sm:$0xf]
      %v919 = vld [vmem:[#allocation3 + $0x4] sm:$0xf]
      %v920 = vld [vmem:[#allocation3 + $0x8] sm:$0xf]
      %v921 = vld [vmem:[#allocation3 + $0xc] sm:$0xf]
      %v922 = vld [vmem:[#allocation3 + $0x10] sm:$0xf]
      %v923 = vld [vmem:[#allocation3 + $0x14] sm:$0xf]
      %v924 = vld [vmem:[#allocation3 + $0x18] sm:$0xf]
      %v925 = vld [vmem:[#allocation3 + $0x1c] sm:$0xf]
      %v926 = vld [vmem:[#allocation3 + $0x20] sm:$0xf]
      %v927 = vld [vmem:[#allocation3 + $0x24] sm:$0xf]
      %v928 = vld [vmem:[#allocation3 + $0x28] sm:$0xf]
      %v929 = vld [vmem:[#allocation3 + $0x2c] sm:$0xf]
      %v930 = vld [vmem:[#allocation3 + $0x30] sm:$0xf]
      %v931 = vld [vmem:[#allocation3 + $0x34] sm:$0xf]
      %v932 = vld [vmem:[#allocation3 + $0x38] sm:$0xf]
      %v933 = vld [vmem:[#allocation3 + $0x3c] sm:$0xf]
      %v934 = vld [vmem:[#allocation3] sm:$0xc]
      %v935 = vld [vmem:[#allocation3 + $0x4] sm:$0xf]
      %v936 = vld [vmem:[#allocation3 + $0x8] sm:$0xf]
      %v937 = vld [vmem:[#allocation3 + $0xc] sm:$0xf]
      %v938 = vld [vmem:[#allocation3 + $0x10] sm:$0xf]
      %v939 = vld [vmem:[#allocation3 + $0x14] sm:$0xf]
      %v940 = vld [vmem:[#allocation3 + $0x18] sm:$0xf]
      %v941 = vld [vmem:[#allocation3 + $0x1c] sm:$0xf]
      %v942 = vld [vmem:[#allocation3 + $0x20] sm:$0xf]
      %v943 = vld [vmem:[#allocation3 + $0x24] sm:$0xf]
      %v944 = vld [vmem:[#allocation3 + $0x28] sm:$0xf]
      %v945 = vld [vmem:[#allocation3 + $0x2c] sm:$0xf]
      %v946 = vld [vmem:[#allocation3 + $0x30] sm:$0xf]
      %v947 = vld [vmem:[#allocation3 + $0x34] sm:$0xf]
      %v948 = vld [vmem:[#allocation3 + $0x38] sm:$0xf]
      %v949 = vld [vmem:[#allocation3 + $0x3c] sm:$0xf]
      %v950 = vld [vmem:[#allocation3 + $0x40] sm:$0x3]
      %v951 = vld [vmem:[#allocation3 + $0x40] sm:$0xf]
      %v968 = vunpack.c.l.b16 %v918
      %v969 = vunpack.c.l.b16 %v919
      %v970 = vunpack.c.l.b16 %v920
      %v971 = vunpack.c.l.b16 %v921
      %v972 = vunpack.c.l.b16 %v922
      %v973 = vunpack.c.l.b16 %v923
      %v974 = vunpack.c.l.b16 %v924
      %v975 = vunpack.c.l.b16 %v925
      %v976 = vunpack.c.l.b16 %v926
      %v977 = vunpack.c.l.b16 %v927
      %v978 = vunpack.c.l.b16 %v928
      %v979 = vunpack.c.l.b16 %v929
      %v980 = vunpack.c.l.b16 %v930
      %v981 = vunpack.c.l.b16 %v931
      %v982 = vunpack.c.l.b16 %v932
      %v983 = vunpack.c.l.b16 %v933
      %v984 = vpack.c.b16 %v969, %v968
      %v985 = vpack.c.b16 %v971, %v970
      %v986 = vpack.c.b16 %v973, %v972
      %v987 = vpack.c.b16 %v975, %v974
      %v988 = vpack.c.b16 %v977, %v976
      %v989 = vpack.c.b16 %v979, %v978
      %v990 = vpack.c.b16 %v981, %v980
      %v991 = vpack.c.b16 %v983, %v982
      %v1017 = vunpack.c.l.b16 %v934
      %v1018 = vunpack.c.l.b16 %v935
      %v1019 = vunpack.c.l.b16 %v936
      %v1020 = vunpack.c.l.b16 %v937
      %v1021 = vunpack.c.l.b16 %v938
      %v1022 = vunpack.c.l.b16 %v939
      %v1023 = vunpack.c.l.b16 %v940
      %v1024 = vunpack.c.l.b16 %v941
      %v1025 = vunpack.c.l.b16 %v942
      %v1026 = vunpack.c.l.b16 %v943
      %v1027 = vunpack.c.l.b16 %v944
      %v1028 = vunpack.c.l.b16 %v945
      %v1029 = vunpack.c.l.b16 %v946
      %v1030 = vunpack.c.l.b16 %v947
      %v1031 = vunpack.c.l.b16 %v948
      %v1032 = vunpack.c.l.b16 %v949
      %v1033 = vunpack.c.l.b16 %v950
      %v1034 = vpack.c.b16 %v1018, %v1017
      %v1035 = vpack.c.b16 %v1020, %v1019
      %v1036 = vpack.c.b16 %v1022, %v1021
      %v1037 = vpack.c.b16 %v1024, %v1023
      %v1038 = vpack.c.b16 %v1026, %v1025
      %v1039 = vpack.c.b16 %v1028, %v1027
      %v1040 = vpack.c.b16 %v1030, %v1029
      %v1041 = vpack.c.b16 %v1032, %v1031
      %v1042 = vpack.c.b16 %v1033, %v1033
      %v1043 = vrot.slane %v1034, 2
      %v1044 = vrot.slane %v1035, 2
      %v1045 = vsel %vm384, %v1043, %v1044
      %v1046 = vrot.slane %v1036, 2
      %v1047 = vsel %vm384, %v1044, %v1046
      %v1048 = vrot.slane %v1037, 2
      %v1049 = vsel %vm384, %v1046, %v1048
      %v1050 = vrot.slane %v1038, 2
      %v1051 = vsel %vm384, %v1048, %v1050
      %v1052 = vrot.slane %v1039, 2
      %v1053 = vsel %vm384, %v1050, %v1052
      %v1054 = vrot.slane %v1040, 2
      %v1055 = vsel %vm384, %v1052, %v1054
      %v1056 = vrot.slane %v1041, 2
      %v1057 = vsel %vm384, %v1054, %v1056
      %v1058 = vrot.slane %v1042, 2
      %v1059 = vsel %vm384, %v1056, %v1058
      %v1069 = vunpack.c.l.b16 %v951
      %v1070 = vpack.c.b16 %v1019, %v1018
      %v1071 = vpack.c.b16 %v1021, %v1020
      %v1072 = vpack.c.b16 %v1023, %v1022
      %v1073 = vpack.c.b16 %v1025, %v1024
      %v1074 = vpack.c.b16 %v1027, %v1026
      %v1075 = vpack.c.b16 %v1029, %v1028
      %v1076 = vpack.c.b16 %v1031, %v1030
      %v1077 = vpack.c.b16 %v1069, %v1032
      %v1086 = vld [vmem:[%s3] sm:$0xf]
      %v1087 = vld [vmem:[%s3 + $0x4] sm:$0xf]
      %v1088 = vld [vmem:[%s3 + $0x8] sm:$0xf]
      %v1089 = vld [vmem:[%s3 + $0xc] sm:$0xf]
      %v1090 = vld [vmem:[%s3 + $0x10] sm:$0xf]
      %v1091 = vld [vmem:[%s3 + $0x14] sm:$0xf]
      %v1092 = vld [vmem:[%s3 + $0x18] sm:$0xf]
      %v1093 = vld [vmem:[%s3 + $0x1c] sm:$0xf]
      %v1094 = vld [vmem:[%s3 + $0x20] sm:$0xf]
      %v1095 = vld [vmem:[%s3 + $0x24] sm:$0xf]
      %v1096 = vld [vmem:[%s3 + $0x28] sm:$0xf]
      %v1097 = vld [vmem:[%s3 + $0x2c] sm:$0xf]
      %v1098 = vld [vmem:[%s3 + $0x30] sm:$0xf]
      %v1099 = vld [vmem:[%s3 + $0x34] sm:$0xf]
      %v1100 = vld [vmem:[%s3 + $0x38] sm:$0xf]
      %v1101 = vld [vmem:[%s3 + $0x3c] sm:$0xf]
      %v1102 = vld [vmem:[%s3 + $0x40] sm:$0xf]
      %v1103 = vld [vmem:[%s3 + $0x44] sm:$0xf]
      %v1104 = vld [vmem:[%s3 + $0x48] sm:$0xf]
      %v1105 = vld [vmem:[%s3 + $0x4c] sm:$0xf]
      %v1106 = vld [vmem:[%s3 + $0x50] sm:$0xf]
      %v1107 = vld [vmem:[%s3 + $0x54] sm:$0xf]
      %v1108 = vld [vmem:[%s3 + $0x58] sm:$0xf]
      %v1109 = vld [vmem:[%s3 + $0x5c] sm:$0xf]
      %v1110 = vld [vmem:[%s3 + $0x60] sm:$0xf]
      %v1111 = vld [vmem:[%s3 + $0x64] sm:$0xf]
      %v1112 = vld [vmem:[%s3 + $0x68] sm:$0xf]
      %v1113 = vld [vmem:[%s3 + $0x6c] sm:$0xf]
      %v1114 = vld [vmem:[%s3 + $0x70] sm:$0xf]
      %v1115 = vld [vmem:[%s3 + $0x74] sm:$0xf]
      %v1116 = vld [vmem:[%s3 + $0x78] sm:$0xf]
      %v1117 = vld [vmem:[%s3 + $0x7c] sm:$0xf]
      %v1118 = vld [vmem:[%s3 + $0x80] sm:$0xf]
      %v1119 = vld [vmem:[%s3 + $0x84] sm:$0xf]
      %v1120 = vld [vmem:[%s3 + $0x88] sm:$0xf]
      %v1121 = vld [vmem:[%s3 + $0x8c] sm:$0xf]
      %v1122 = vld [vmem:[%s3 + $0x90] sm:$0xf]
      %v1123 = vld [vmem:[%s3 + $0x94] sm:$0xf]
      %v1124 = vld [vmem:[%s3 + $0x98] sm:$0xf]
      %v1125 = vld [vmem:[%s3 + $0x9c] sm:$0xf]
      %v1126 = vld [vmem:[%s3 + $0xa0] sm:$0xf]
      %v1127 = vld [vmem:[%s3 + $0xa4] sm:$0xf]
      %v1128 = vld [vmem:[%s3 + $0xa8] sm:$0xf]
      %v1129 = vld [vmem:[%s3 + $0xac] sm:$0xf]
      %v1130 = vld [vmem:[%s3 + $0xb0] sm:$0xf]
      %v1131 = vld [vmem:[%s3 + $0xb4] sm:$0xf]
      %v1132 = vld [vmem:[%s3 + $0xb8] sm:$0xf]
      %v1133 = vld [vmem:[%s3 + $0xbc] sm:$0xf]
      %v1134 = vld [vmem:[%s4] sm:$0x1]
      %v1136 = vlaneseq
      %v1137 = vshrl.u32 %v1136, 7
      %v1138 = vsub.s32 0, %v1137
      %v1139 = vrot.slane %v1134, %v1138
      %v1189 = vunpack.c.l.b16 %v1086
      %v1190 = vunpack.c.l.b16 %v1087
      %v1191 = vunpack.c.l.b16 %v1088
      %v1192 = vunpack.c.l.b16 %v1089
      %v1193 = vunpack.c.l.b16 %v1090
      %v1194 = vunpack.c.l.b16 %v1091
      %v1195 = vunpack.c.l.b16 %v1092
      %v1196 = vunpack.c.l.b16 %v1093
      %v1197 = vunpack.c.l.b16 %v1094
      %v1198 = vunpack.c.l.b16 %v1095
      %v1199 = vunpack.c.l.b16 %v1096
      %v1200 = vunpack.c.l.b16 %v1097
      %v1201 = vunpack.c.l.b16 %v1098
      %v1202 = vunpack.c.l.b16 %v1099
      %v1203 = vunpack.c.l.b16 %v1100
      %v1204 = vunpack.c.l.b16 %v1101
      %v1205 = vunpack.c.l.b16 %v1102
      %v1206 = vunpack.c.l.b16 %v1103
      %v1207 = vunpack.c.l.b16 %v1104
      %v1208 = vunpack.c.l.b16 %v1105
      %v1209 = vunpack.c.l.b16 %v1106
      %v1210 = vunpack.c.l.b16 %v1107
      %v1211 = vunpack.c.l.b16 %v1108
      %v1212 = vunpack.c.l.b16 %v1109
      %v1213 = vunpack.c.l.b16 %v1110
      %v1214 = vunpack.c.l.b16 %v1111
      %v1215 = vunpack.c.l.b16 %v1112
      %v1216 = vunpack.c.l.b16 %v1113
      %v1217 = vunpack.c.l.b16 %v1114
      %v1218 = vunpack.c.l.b16 %v1115
      %v1219 = vunpack.c.l.b16 %v1116
      %v1220 = vunpack.c.l.b16 %v1117
      %v1221 = vunpack.c.l.b16 %v1118
      %v1222 = vunpack.c.l.b16 %v1119
      %v1223 = vunpack.c.l.b16 %v1120
      %v1224 = vunpack.c.l.b16 %v1121
      %v1225 = vunpack.c.l.b16 %v1122
      %v1226 = vunpack.c.l.b16 %v1123
      %v1227 = vunpack.c.l.b16 %v1124
      %v1228 = vunpack.c.l.b16 %v1125
      %v1229 = vunpack.c.l.b16 %v1126
      %v1230 = vunpack.c.l.b16 %v1127
      %v1231 = vunpack.c.l.b16 %v1128
      %v1232 = vunpack.c.l.b16 %v1129
      %v1233 = vunpack.c.l.b16 %v1130
      %v1234 = vunpack.c.l.b16 %v1131
      %v1235 = vunpack.c.l.b16 %v1132
      %v1236 = vunpack.c.l.b16 %v1133
      %v1237 = vpack.c.b16 %v1190, %v1189
      %v1238 = vpack.c.b16 %v1192, %v1191
      %v1239 = vpack.c.b16 %v1194, %v1193
      %v1240 = vpack.c.b16 %v1196, %v1195
      %v1241 = vpack.c.b16 %v1198, %v1197
      %v1242 = vpack.c.b16 %v1200, %v1199
      %v1243 = vpack.c.b16 %v1202, %v1201
      %v1244 = vpack.c.b16 %v1204, %v1203
      %v1245 = vpack.c.b16 %v1206, %v1205
      %v1246 = vpack.c.b16 %v1208, %v1207
      %v1247 = vpack.c.b16 %v1210, %v1209
      %v1248 = vpack.c.b16 %v1212, %v1211
      %v1249 = vpack.c.b16 %v1214, %v1213
      %v1250 = vpack.c.b16 %v1216, %v1215
      %v1251 = vpack.c.b16 %v1218, %v1217
      %v1252 = vpack.c.b16 %v1220, %v1219
      %v1253 = vpack.c.b16 %v1222, %v1221
      %v1254 = vpack.c.b16 %v1224, %v1223
      %v1255 = vpack.c.b16 %v1226, %v1225
      %v1256 = vpack.c.b16 %v1228, %v1227
      %v1257 = vpack.c.b16 %v1230, %v1229
      %v1258 = vpack.c.b16 %v1232, %v1231
      %v1259 = vpack.c.b16 %v1234, %v1233
      %v1260 = vpack.c.b16 %v1236, %v1235
      %1285 = vmatprep.subr.bf16.mxu0 0
      %1286 = vmatpush1.bf16.msra.mxu0 %v1237
      %1287 = vmatprep.subr.bf16.mxu0 0
      %1288 = vmatpush1.bf16.msra.mxu0 %v1238
      %1289 = vmatprep.subr.bf16.mxu0 0
      %1290 = vmatpush1.bf16.msra.mxu0 %v1239
      %1291 = vmatprep.subr.bf16.mxu0 0
      %1292 = vmatpush1.bf16.msra.mxu0 %v1240
      %1293 = vmatprep.subr.bf16.mxu0 0
      %1294 = vmatpush1.bf16.msra.mxu0 %v1241
      %1295 = vmatprep.subr.bf16.mxu0 0
      %1296 = vmatpush1.bf16.msra.mxu0 %v1242
      %1297 = vmatprep.subr.bf16.mxu0 0
      %1298 = vmatpush1.bf16.msra.mxu0 %v1243
      %1299 = vmatprep.subr.bf16.mxu0 0
      %1300 = vmatpush1.bf16.msra.mxu0 %v1244
      %1301 = vmatprep.subr.bf16.mxu0 0
      %1302 = vmatpush1.bf16.msra.mxu0 %v1245
      %1303 = vmatprep.subr.bf16.mxu0 0
      %1304 = vmatpush1.bf16.msra.mxu0 %v1246
      %1305 = vmatprep.subr.bf16.mxu0 0
      %1306 = vmatpush1.bf16.msra.mxu0 %v1247
      %1307 = vmatprep.subr.bf16.mxu0 0
      %1308 = vmatpush1.bf16.msra.mxu0 %v1248
      %1309 = vmatprep.subr.bf16.mxu0 0
      %1310 = vmatpush1.bf16.msra.mxu0 %v1249
      %1311 = vmatprep.subr.bf16.mxu0 0
      %1312 = vmatpush1.bf16.msra.mxu0 %v1250
      %1313 = vmatprep.subr.bf16.mxu0 0
      %1314 = vmatpush1.bf16.msra.mxu0 %v1251
      %1315 = vmatprep.subr.bf16.mxu0 0
      %1316 = vmatpush1.bf16.msra.mxu0 %v1252
      %1317 = vmatprep.mubr.bf16.mxu0 %v1045
      %1318 = vmatmul.mubr.bf16.gmra.mrb[0].mxu0 %v984
      %v1319 = vpop.f32.mrb[0].mxu0
      %v1320 = vadd.f32 %v1139, %v1319
      %v1321 = vpop.f32.mrb[0].mxu0
      %v1322 = vpop.f32.mrb[0].mxu0
      %v1323 = vadd.f32 %v1139, %v1322
      %v1324 = vpop.f32.mrb[0].mxu0
      %1325 = vmatprep.mubr.bf16.mxu0 %v1047
      %1326 = vmatmul.mubr.bf16.gmra.mrb[0].mxu0 %v985
      %v1327 = vpop.f32.mrb[0].mxu0
      %v1328 = vadd.f32 %v1139, %v1327
      %v1329 = vpop.f32.mrb[0].mxu0
      %v1330 = vpop.f32.mrb[0].mxu0
      %v1331 = vadd.f32 %v1139, %v1330
      %v1332 = vpop.f32.mrb[0].mxu0
      %1333 = vmatprep.mubr.bf16.mxu0 %v1049
      %1334 = vmatmul.mubr.bf16.gmra.mrb[0].mxu0 %v986
      %v1335 = vpop.f32.mrb[0].mxu0
      %v1336 = vadd.f32 %v1139, %v1335
      %v1337 = vpop.f32.mrb[0].mxu0
      %v1338 = vpop.f32.mrb[0].mxu0
      %v1339 = vadd.f32 %v1139, %v1338
      %v1340 = vpop.f32.mrb[0].mxu0
      %1341 = vmatprep.mubr.bf16.mxu0 %v1051
      %1342 = vmatmul.mubr.bf16.gmra.mrb[0].mxu0 %v987
      %v1343 = vpop.f32.mrb[0].mxu0
      %v1344 = vadd.f32 %v1139, %v1343
      %v1345 = vpop.f32.mrb[0].mxu0
      %v1346 = vpop.f32.mrb[0].mxu0
      %v1347 = vadd.f32 %v1139, %v1346
      %v1348 = vpop.f32.mrb[0].mxu0
      %1349 = vmatprep.mubr.bf16.mxu0 %v1053
      %1350 = vmatmul.mubr.bf16.gmra.mrb[0].mxu0 %v988
      %v1351 = vpop.f32.mrb[0].mxu0
      %v1352 = vadd.f32 %v1139, %v1351
      %v1353 = vpop.f32.mrb[0].mxu0
      %v1354 = vpop.f32.mrb[0].mxu0
      %v1355 = vadd.f32 %v1139, %v1354
      %v1356 = vpop.f32.mrb[0].mxu0
      %1357 = vmatprep.mubr.bf16.mxu0 %v1055
      %1358 = vmatmul.mubr.bf16.gmra.mrb[0].mxu0 %v989
      %v1359 = vpop.f32.mrb[0].mxu0
      %v1360 = vadd.f32 %v1139, %v1359
      %v1361 = vpop.f32.mrb[0].mxu0
      %v1362 = vpop.f32.mrb[0].mxu0
      %v1363 = vadd.f32 %v1139, %v1362
      %v1364 = vpop.f32.mrb[0].mxu0
      %1365 = vmatprep.mubr.bf16.mxu0 %v1057
      %1366 = vmatmul.mubr.bf16.gmra.mrb[0].mxu0 %v990
      %v1367 = vpop.f32.mrb[0].mxu0
      %v1368 = vadd.f32 %v1139, %v1367
      %v1369 = vpop.f32.mrb[0].mxu0
      %v1370 = vpop.f32.mrb[0].mxu0
      %v1371 = vadd.f32 %v1139, %v1370
      %v1372 = vpop.f32.mrb[0].mxu0
      %1373 = vmatprep.mubr.bf16.mxu0 %v1059
      %1374 = vmatmul.mubr.bf16.gmra.mrb[0].mxu0 %v991
      %v1375 = vpop.f32.mrb[0].mxu0
      %v1376 = vadd.f32 %v1139, %v1375
      %v1377 = vpop.f32.mrb[0].mxu0
      %v1378 = vpop.f32.mrb[0].mxu0
      %v1379 = vadd.f32 %v1139, %v1378
      %v1380 = vpop.f32.mrb[0].mxu0
      %1381 = vdwg.mxu0
      %1382 = vmatprep.subr.bf16.mxu0 0
      %1383 = vmatpush1.bf16.msra.mxu0 %v1253
      %1384 = vmatprep.subr.bf16.mxu0 0
      %1385 = vmatpush1.bf16.msra.mxu0 %v1254
      %1386 = vmatprep.subr.bf16.mxu0 0
      %1387 = vmatpush1.bf16.msra.mxu0 %v1255
      %1388 = vmatprep.subr.bf16.mxu0 0
      %1389 = vmatpush1.bf16.msra.mxu0 %v1256
      %1390 = vmatprep.subr.bf16.mxu0 0
      %1391 = vmatpush1.bf16.msra.mxu0 %v1257
      %1392 = vmatprep.subr.bf16.mxu0 0
      %1393 = vmatpush1.bf16.msra.mxu0 %v1258
      %1394 = vmatprep.subr.bf16.mxu0 0
      %1395 = vmatpush1.bf16.msra.mxu0 %v1259
      %1396 = vmatprep.subr.bf16.mxu0 0
      %1397 = vmatpush1.bf16.msra.mxu0 %v1260
      %1398 = vmatprep.subr.bf16.mxu0 0
      %1399 = vmatpush1.bf16.msra.mxu0 0
      %1400 = vmatprep.subr.bf16.mxu0 0
      %1401 = vmatpush1.bf16.msra.mxu0 0
      %1402 = vmatprep.subr.bf16.mxu0 0
      %1403 = vmatpush1.bf16.msra.mxu0 0
      %1404 = vmatprep.subr.bf16.mxu0 0
      %1405 = vmatpush1.bf16.msra.mxu0 0
      %1406 = vmatprep.subr.bf16.mxu0 0
      %1407 = vmatpush1.bf16.msra.mxu0 0
      %1408 = vmatprep.subr.bf16.mxu0 0
      %1409 = vmatpush1.bf16.msra.mxu0 0
      %1410 = vmatprep.subr.bf16.mxu0 0
      %1411 = vmatpush1.bf16.msra.mxu0 0
      %1412 = vmatprep.subr.bf16.mxu0 0
      %1413 = vmatpush1.bf16.msra.mxu0 0
      %1414 = vmatprep.mubr.bf16.mxu0 0
      %1415 = vmatmul.mubr.bf16.gmra.mrb[0].mxu0 %v1070
      %v1416 = vpop.f32.mrb[0].mxu0
      %v1417 = vadd.f32 %v1320, %v1416
      %v1418 = vpop.f32.mrb[0].mxu0
      %v1419 = vpop.f32.mrb[0].mxu0
      %v1420 = vadd.f32 %v1323, %v1419
      %v1421 = vpop.f32.mrb[0].mxu0
      %1422 = vmatprep.mubr.bf16.mxu0 0
      %1423 = vmatmul.mubr.bf16.gmra.mrb[0].mxu0 %v1071
      %v1424 = vpop.f32.mrb[0].mxu0
      %v1425 = vadd.f32 %v1328, %v1424
      %v1426 = vpop.f32.mrb[0].mxu0
      %v1427 = vpop.f32.mrb[0].mxu0
      %v1428 = vadd.f32 %v1331, %v1427
      %v1429 = vpop.f32.mrb[0].mxu0
      %1430 = vmatprep.mubr.bf16.mxu0 0
      %1431 = vmatmul.mubr.bf16.gmra.mrb[0].mxu0 %v1072
      %v1432 = vpop.f32.mrb[0].mxu0
      %v1433 = vadd.f32 %v1336, %v1432
      %v1434 = vpop.f32.mrb[0].mxu0
      %v1435 = vpop.f32.mrb[0].mxu0
      %v1436 = vadd.f32 %v1339, %v1435
      %v1437 = vpop.f32.mrb[0].mxu0
      %1438 = vmatprep.mubr.bf16.mxu0 0
      %1439 = vmatmul.mubr.bf16.gmra.mrb[0].mxu0 %v1073
      %v1440 = vpop.f32.mrb[0].mxu0
      %v1441 = vadd.f32 %v1344, %v1440
      %v1442 = vpop.f32.mrb[0].mxu0
      %v1443 = vpop.f32.mrb[0].mxu0
      %v1444 = vadd.f32 %v1347, %v1443
      %v1445 = vpop.f32.mrb[0].mxu0
      %1446 = vmatprep.mubr.bf16.mxu0 0
      %1447 = vmatmul.mubr.bf16.gmra.mrb[0].mxu0 %v1074
      %v1448 = vpop.f32.mrb[0].mxu0
      %v1449 = vadd.f32 %v1352, %v1448
      %v1450 = vpop.f32.mrb[0].mxu0
      %v1451 = vpop.f32.mrb[0].mxu0
      %v1452 = vadd.f32 %v1355, %v1451
      %v1453 = vpop.f32.mrb[0].mxu0
      %1454 = vmatprep.mubr.bf16.mxu0 0
      %1455 = vmatmul.mubr.bf16.gmra.mrb[0].mxu0 %v1075
      %v1456 = vpop.f32.mrb[0].mxu0
      %v1457 = vadd.f32 %v1360, %v1456
      %v1458 = vpop.f32.mrb[0].mxu0
      %v1459 = vpop.f32.mrb[0].mxu0
      %v1460 = vadd.f32 %v1363, %v1459
      %v1461 = vpop.f32.mrb[0].mxu0
      %1462 = vmatprep.mubr.bf16.mxu0 0
      %1463 = vmatmul.mubr.bf16.gmra.mrb[0].mxu0 %v1076
      %v1464 = vpop.f32.mrb[0].mxu0
      %v1465 = vadd.f32 %v1368, %v1464
      %v1466 = vpop.f32.mrb[0].mxu0
      %v1467 = vpop.f32.mrb[0].mxu0
      %v1468 = vadd.f32 %v1371, %v1467
      %v1469 = vpop.f32.mrb[0].mxu0
      %1470 = vmatprep.mubr.bf16.mxu0 0
      %1471 = vmatmul.mubr.bf16.gmra.mrb[0].mxu0 %v1077
      %v1472 = vpop.f32.mrb[0].mxu0
      %v1473 = vadd.f32 %v1376, %v1472
      %v1474 = vpop.f32.mrb[0].mxu0
      %v1475 = vpop.f32.mrb[0].mxu0
      %v1476 = vadd.f32 %v1379, %v1475
      %v1477 = vpop.f32.mrb[0].mxu0
      %1478 = vdwg.mxu0
      %v1479 = vmax.f32 %v1417, 0.0
      %v1480 = vmax.f32 %v1420, 0.0
      %v1481 = vmax.f32 %v1425, 0.0
      %v1482 = vmax.f32 %v1428, 0.0
      %v1483 = vmax.f32 %v1433, 0.0
      %v1484 = vmax.f32 %v1436, 0.0
      %v1485 = vmax.f32 %v1441, 0.0
      %v1486 = vmax.f32 %v1444, 0.0
      %v1487 = vmax.f32 %v1449, 0.0
      %v1488 = vmax.f32 %v1452, 0.0
      %v1489 = vmax.f32 %v1457, 0.0
      %v1490 = vmax.f32 %v1460, 0.0
      %v1491 = vmax.f32 %v1465, 0.0
      %v1492 = vmax.f32 %v1468, 0.0
      %v1493 = vmax.f32 %v1473, 0.0
      %v1494 = vmax.f32 %v1476, 0.0
      %v1495 = vld [vmem:[%s219] sm:$0xf]
      %v1496 = vld [vmem:[%s219 + $0x4] sm:$0xf]
      %v1497 = vld [vmem:[%s219 + $0x8] sm:$0xf]
      %v1498 = vld [vmem:[%s219 + $0xc] sm:$0xf]
      %v1499 = vld [vmem:[%s219 + $0x10] sm:$0xf]
      %v1500 = vld [vmem:[%s219 + $0x14] sm:$0xf]
      %v1501 = vld [vmem:[%s219 + $0x18] sm:$0xf]
      %v1502 = vld [vmem:[%s219 + $0x1c] sm:$0xf]
      %v1503 = vld [vmem:[%s219 + $0x20] sm:$0xf]
      %v1504 = vld [vmem:[%s219 + $0x24] sm:$0xf]
      %v1505 = vld [vmem:[%s219 + $0x28] sm:$0xf]
      %v1506 = vld [vmem:[%s219 + $0x2c] sm:$0xf]
      %v1507 = vld [vmem:[%s219 + $0x30] sm:$0xf]
      %v1508 = vld [vmem:[%s219 + $0x34] sm:$0xf]
      %v1509 = vld [vmem:[%s219 + $0x38] sm:$0xf]
      %v1510 = vld [vmem:[%s219 + $0x3c] sm:$0xf]
      %v1511 = vunpack.c.l.bf16 %v1495
      %v1512 = vunpack.c.l.bf16 %v1496
      %v1513 = vunpack.c.l.bf16 %v1497
      %v1514 = vunpack.c.l.bf16 %v1498
      %v1515 = vunpack.c.l.bf16 %v1499
      %v1516 = vunpack.c.l.bf16 %v1500
      %v1517 = vunpack.c.l.bf16 %v1501
      %v1518 = vunpack.c.l.bf16 %v1502
      %v1519 = vunpack.c.l.bf16 %v1503
      %v1520 = vunpack.c.l.bf16 %v1504
      %v1521 = vunpack.c.l.bf16 %v1505
      %v1522 = vunpack.c.l.bf16 %v1506
      %v1523 = vunpack.c.l.bf16 %v1507
      %v1524 = vunpack.c.l.bf16 %v1508
      %v1525 = vunpack.c.l.bf16 %v1509
      %v1526 = vunpack.c.l.bf16 %v1510
      %v1527 = vadd.f32 %v1479, %v1511
      %v1528 = vadd.f32 %v1480, %v1512
      %v1529 = vadd.f32 %v1481, %v1513
      %v1530 = vadd.f32 %v1482, %v1514
      %v1531 = vadd.f32 %v1483, %v1515
      %v1532 = vadd.f32 %v1484, %v1516
      %v1533 = vadd.f32 %v1485, %v1517
      %v1534 = vadd.f32 %v1486, %v1518
      %v1535 = vadd.f32 %v1487, %v1519
      %v1536 = vadd.f32 %v1488, %v1520
      %v1537 = vadd.f32 %v1489, %v1521
      %v1538 = vadd.f32 %v1490, %v1522
      %v1539 = vadd.f32 %v1491, %v1523
      %v1540 = vadd.f32 %v1492, %v1524
      %v1541 = vadd.f32 %v1493, %v1525
      %v1542 = vadd.f32 %v1494, %v1526
      %v1543 = vmax.f32 %v1527, 0.0
      %v1544 = vmax.f32 %v1528, 0.0
      %v1545 = vmax.f32 %v1529, 0.0
      %v1546 = vmax.f32 %v1530, 0.0
      %v1547 = vmax.f32 %v1531, 0.0
      %v1548 = vmax.f32 %v1532, 0.0
      %v1549 = vmax.f32 %v1533, 0.0
      %v1550 = vmax.f32 %v1534, 0.0
      %v1551 = vmax.f32 %v1535, 0.0
      %v1552 = vmax.f32 %v1536, 0.0
      %v1553 = vmax.f32 %v1537, 0.0
      %v1554 = vmax.f32 %v1538, 0.0
      %v1555 = vmax.f32 %v1539, 0.0
      %v1556 = vmax.f32 %v1540, 0.0
      %v1557 = vmax.f32 %v1541, 0.0
      %v1558 = vmax.f32 %v1542, 0.0
      %v1559 = vpack.c.bf16 %v1544, %v1543
      %v1560 = vpack.c.bf16 %v1546, %v1545
      %v1561 = vpack.c.bf16 %v1548, %v1547
      %v1562 = vpack.c.bf16 %v1550, %v1549
      %v1563 = vpack.c.bf16 %v1552, %v1551
      %v1564 = vpack.c.bf16 %v1554, %v1553
      %v1565 = vpack.c.bf16 %v1556, %v1555
      %v1566 = vpack.c.bf16 %v1558, %v1557
      %v1575 = vunpack.c.l.b16 %v1559
      %v1576 = vunpack.c.h.b16 %v1559
      %v1577 = vunpack.c.l.b16 %v1560
      %v1578 = vunpack.c.h.b16 %v1560
      %v1579 = vunpack.c.l.b16 %v1561
      %v1580 = vunpack.c.h.b16 %v1561
      %v1581 = vunpack.c.l.b16 %v1562
      %v1582 = vunpack.c.h.b16 %v1562
      %v1583 = vunpack.c.l.b16 %v1563
      %v1584 = vunpack.c.h.b16 %v1563
      %v1585 = vunpack.c.l.b16 %v1564
      %v1586 = vunpack.c.h.b16 %v1564
      %v1587 = vunpack.c.l.b16 %v1565
      %v1588 = vunpack.c.h.b16 %v1565
      %v1589 = vunpack.c.l.b16 %v1566
      %v1590 = vunpack.c.h.b16 %v1566
      %v1591 = vpack.c.b16 %v1575, %v1575
      %v1592 = vpack.c.b16 %v1576, %v1576
      %v1593 = vpack.c.b16 %v1577, %v1577
      %v1594 = vpack.c.b16 %v1578, %v1578
      %v1595 = vpack.c.b16 %v1579, %v1579
      %v1596 = vpack.c.b16 %v1580, %v1580
      %v1597 = vpack.c.b16 %v1581, %v1581
      %v1598 = vpack.c.b16 %v1582, %v1582
      %v1599 = vpack.c.b16 %v1583, %v1583
      %v1600 = vpack.c.b16 %v1584, %v1584
      %v1601 = vpack.c.b16 %v1585, %v1585
      %v1602 = vpack.c.b16 %v1586, %v1586
      %v1603 = vpack.c.b16 %v1587, %v1587
      %v1604 = vpack.c.b16 %v1588, %v1588
      %v1605 = vpack.c.b16 %v1589, %v1589
      %v1606 = vpack.c.b16 %v1590, %v1590
      %1623 = vst [vmem:[%s224] sm:$0xf] %v1591
      %1624 = vst [vmem:[%s224 + $0x4] sm:$0xf] %v1592
      %1625 = vst [vmem:[%s224 + $0x8] sm:$0xf] %v1593
      %1626 = vst [vmem:[%s224 + $0xc] sm:$0xf] %v1594
      %1627 = vst [vmem:[%s224 + $0x10] sm:$0xf] %v1595
      %1628 = vst [vmem:[%s224 + $0x14] sm:$0xf] %v1596
      %1629 = vst [vmem:[%s224 + $0x18] sm:$0xf] %v1597
      %1630 = vst [vmem:[%s224 + $0x1c] sm:$0xf] %v1598
      %1631 = vst [vmem:[%s224 + $0x20] sm:$0xf] %v1599
      %1632 = vst [vmem:[%s224 + $0x24] sm:$0xf] %v1600
      %1633 = vst [vmem:[%s224 + $0x28] sm:$0xf] %v1601
      %1634 = vst [vmem:[%s224 + $0x2c] sm:$0xf] %v1602
      %1635 = vst [vmem:[%s224 + $0x30] sm:$0xf] %v1603
      %1636 = vst [vmem:[%s224 + $0x34] sm:$0xf] %v1604
      %1637 = vst [vmem:[%s224 + $0x38] sm:$0xf] %v1605
      %1638 = vst [vmem:[%s224 + $0x3c] sm:$0xf] %v1606
      %p1639 = scmp.lt.s32.totalorder %s16, 1
      %s1640 = scalar_select %p1639, %s16, 1
      %s1641 = smul.addr %s1640, 16
      %s1642 = smul.addr %s1641, 4
      %s1643 = scalar_lea.vmem %s5, %s1642
      // Predicated region
      $region41: #{tcn_forward.5} parent=39 // pred_check
        %p1644 = pneg %p144
      $region42: #{tcn_forward.5} parent=39 // pred_check_branch
        %1646 = sbr.rel (%p1644) target = $region44
      $region43: #{tcn_forward.5} parent=39 // pred_region
        _
      $region44: #{tcn_forward.5} parent=39 // pred_fallthru
        _
    $region40: #{tcn_forward.5} parent=5 // pred_fallthru
      _
    %p1647 = scmp.le.s32.totalorder 2, %s11
    // Predicated region
    $region45: #{tcn_forward.5} parent=5 // pred_check
      %p1648 = pneg %p1647
    $region46: #{tcn_forward.5} parent=5 // pred_check_branch
      %1650 = sbr.rel (%p1648) target = $region48
    $region47: #{tcn_forward.5} parent=5 // pred_region
      %s1651 = ssub.s32 %s11, 2
      // Predicated region
      $region49: #{tcn_forward.5} parent=47 // pred_check
        %p1652 = pneg %p150
      $region50: #{tcn_forward.5} parent=47 // pred_check_branch
        %1654 = sbr.rel (%p1652) target = $region52
      $region51: #{tcn_forward.5} parent=47 // pred_region
        %p1655 = scmp.lt.s32.totalorder %s17, 1
        %s1656 = scalar_select %p1655, %s17, 1
        %s1657 = smul.addr %s1656, 16
        %s1658 = smul.addr %s1657, 4
        %s1659 = scalar_lea.vmem %s5, %s1658
      $region52: #{tcn_forward.5} parent=47 // pred_fallthru
        _
    $region48: #{tcn_forward.5} parent=5 // pred_fallthru
      _
  $region6: #{tcn_forward.5} parent=0 // loop_footer
    %s15 = sadd.s32 1, %s11
  $region7: #{tcn_forward.5} parent=0 // loop_footer_branch
    %10 = sbr.rel target = $region3
  $region8: #{tcn_forward.5} parent=0 // loop_exit
    _

</llo_original>
